<compile_context>
chip_gen: v5e
topology: v5e:2x2
jax: 0.10.0
libtpu: 0.0.40
codegen_flags: <defaults>
</compile_context>

<pallas_src>
import math

import jax
import jax.numpy as jnp
from jax.experimental import pallas as pl
from jax.experimental.pallas import tpu as pltpu


def _pick_ts1(S0, S1, target_rows=256):
    """Pick how many S1 columns to batch per grid step."""
    ts1 = max(1, min(S1, target_rows // max(S0, 1)))
    if S1 >= 2:
        ts1 = min(ts1, max(1, S1 // 2))       # keep >=2 parallel steps (v7x 2 TCs)
    while S1 % ts1:
        ts1 -= 1
    if (ts1 * S0) % 8 != 0 and ts1 != S1:     # satisfy the (8,128) sublane rule
        ts1 = S1
    return ts1


def _make_kernel(TS1, S0, D, E, HID, n_heads, n_layers):
    hd = E // n_heads
    scale = 1.0 / math.sqrt(hd)
    M = TS1 * S0
    bf16, f32 = jnp.bfloat16, jnp.float32

    def mm(a_bf, w_bf):                       # bf16 MXU matmul, f32 accumulation
        return jnp.dot(a_bf, w_bf, preferred_element_type=f32)

    def layernorm(t, g, b, eps=1e-5):
        mu = jnp.mean(t, axis=-1, keepdims=True)
        var = jnp.mean((t - mu) ** 2, axis=-1, keepdims=True)
        return (t - mu) * jax.lax.rsqrt(var + eps) * g + b

    def kernel(x_ref, pos_ref, w0_ref, b0_ref,
               wqkv_ref, bqkv_ref, wo_ref, bo_ref, wr_ref, br_ref,
               lng_ref, lnb_ref,
               n1g_ref, n1b_ref, w1_ref, b1_ref, n2g_ref, n2b_ref,
               w2t_ref, b2_ref, o_ref):
        # ---- linear0 + positional encoding (P indexed by the S1 column) -------
        h = mm(x_ref[...].astype(bf16), w0_ref[...]) + b0_ref[...]   # (M, E) f32
        h = h + pos_ref[...]                                          # + P[column]

        # ---- n_layers SAB layers; weights resident, layer loop in-kernel ------
        def layer_body(l, h):
            y_bf = h.astype(bf16)                                     # cast once
            qkv = mm(y_bf, wqkv_ref[l]) + bqkv_ref[l]                 # (M, 3E) f32
            qkv_b = qkv.astype(bf16).reshape(TS1, S0, 3 * E)
            wo_l = wo_ref[l]                                          # (E, E) bf16

            # per-head scores / PV, batched over the TS1 columns; out-projection
            # folded in per head (no 8-way lane concat).
            attn = jnp.zeros((M, E), f32)
            for hh in range(n_heads):
                lo = hh * hd
                qh = qkv_b[:, :, lo:lo + hd]                          # (TS1,S0,hd)
                kh = qkv_b[:, :, E + lo:E + lo + hd]
                vh = qkv_b[:, :, 2 * E + lo:2 * E + lo + hd]
                s = jax.lax.dot_general(
                    qh, kh, (((2,), (2,)), ((0,), (0,))),
                    preferred_element_type=f32) * scale               # (TS1,S0,S0)
                s = s - jnp.max(s, axis=-1, keepdims=True)
                p = jnp.exp(s)
                p = p * pl.reciprocal(jnp.sum(p, axis=-1, keepdims=True),
                                      approx=True)
                oh = jax.lax.dot_general(
                    p.astype(bf16), vh, (((2,), (1,)), ((0,), (0,))),
                    preferred_element_type=f32)                       # (TS1,S0,hd)
                attn = attn + mm(oh.reshape(M, hd).astype(bf16),
                                 wo_l[lo:lo + hd, :])
            attn = attn + bo_ref[l]

            h_res = attn + h                                          # H = attn + Y
            rff = mm(h_res.astype(bf16), wr_ref[l]) + br_ref[l]       # rff(H)
            return layernorm(rff + h_res, lng_ref[l], lnb_ref[l])

        h = jax.lax.fori_loop(0, n_layers, layer_body, h)

        # ---- classifier head ---------------------------------------------------
        hc = layernorm(h, n1g_ref[...], n1b_ref[...])
        hc = mm(hc.astype(bf16), w1_ref[...]) + b1_ref[...]
        hc = jnp.maximum(hc, 0.0)
        hc = layernorm(hc, n2g_ref[...], n2b_ref[...])
        # lane-dense (1, M) logit row (w2 stored transposed as a (1, HID) row)
        logit = jax.lax.dot_general(
            w2t_ref[...], hc.astype(bf16), (((1,), (1,)), ((), ())),
            preferred_element_type=f32) + b2_ref[...]
        o_ref[...] = 1.0 / (1.0 + jnp.exp(-logit))                    # exact sigmoid

    return kernel


def init_params(key, d_model, n_layers, emb_dims, hid_dims, n_heads=8, max_len=1000):
    assert emb_dims % n_heads == 0
    E, HID = emb_dims, hid_dims
    kit = iter(jax.random.split(key, 24))

    def w(shape, scale=0.05):
        return scale * jax.random.normal(next(kit), shape, dtype=jnp.float32)

    # PositionalEncoding.P (precomputed buffer)
    pos_idx = jnp.arange(max_len, dtype=jnp.float32)[:, None]
    div = jnp.power(10000.0, jnp.arange(0, E, 2, dtype=jnp.float32) / E)
    ang = pos_idx / div
    P = jnp.zeros((max_len, E), jnp.float32)
    P = P.at[:, 0::2].set(jnp.sin(ang))
    P = P.at[:, 1::2].set(jnp.cos(ang))

    return dict(
        P=P,
        # linear0 (stored transposed: y = x @ W)
        w0=w((d_model, E)), b0=w((1, E), 0.01),
        # MultiheadAttention in_proj / out_proj (heads concatenated on E)
        wq=w((n_layers, E, E)), bq=w((n_layers, 1, E), 0.01),
        wk=w((n_layers, E, E)), bk=w((n_layers, 1, E), 0.01),
        wv=w((n_layers, E, E)), bv=w((n_layers, 1, E), 0.01),
        wo=w((n_layers, E, E)), bo=w((n_layers, 1, E), 0.01),
        # MAB rff + layernorm
        wr=w((n_layers, E, E)), br=w((n_layers, 1, E), 0.01),
        lng=jnp.ones((n_layers, 1, E), jnp.float32),
        lnb=jnp.zeros((n_layers, 1, E), jnp.float32),
        # classifier head (w2 stored transposed as a row: (1, HID))
        n1g=jnp.ones((1, E), jnp.float32), n1b=jnp.zeros((1, E), jnp.float32),
        w1=w((E, HID)), b1=w((1, HID), 0.01),
        n2g=jnp.ones((1, HID), jnp.float32), n2b=jnp.zeros((1, HID), jnp.float32),
        w2t=w((1, HID)), b2=w((1, 1), 0.01),
    )


def transformer_classifier_forward(x, params, n_layers, n_heads=8):
    S0, S1, D = x.shape
    E = params["w0"].shape[1]
    HID = params["w1"].shape[1]
    bf16 = jnp.bfloat16

    TS1 = _pick_ts1(S0, S1)
    NB = S1 // TS1
    M = TS1 * S0

    # --- wrapper-side layout plumbing (not compute) ---------------------------
    x_flat = jnp.transpose(x, (1, 0, 2)).reshape(S1 * S0, D)         # row = b*S0+s
    pos_flat = jnp.repeat(params["P"][:S1], S0, axis=0)              # (S1*S0, E)
    wqkv = jnp.concatenate([params["wq"], params["wk"], params["wv"]],
                           axis=-1).astype(bf16)                     # (L, E, 3E)
    bqkv = jnp.concatenate([params["bq"], params["bk"], params["bv"]], axis=-1)

    operands = [
        x_flat, pos_flat,
        params["w0"].astype(bf16), params["b0"],
        wqkv, bqkv,
        params["wo"].astype(bf16), params["bo"],
        params["wr"].astype(bf16), params["br"],
        params["lng"], params["lnb"],
        params["n1g"], params["n1b"],
        params["w1"].astype(bf16), params["b1"],
        params["n2g"], params["n2b"],
        params["w2t"].astype(bf16), params["b2"],
    ]

    def full(a):     # whole array resident in VMEM (constant block index)
        return pl.BlockSpec(a.shape, lambda i: (0,) * a.ndim)

    in_specs = ([pl.BlockSpec((M, D), lambda i: (i, 0)),             # x columns
                 pl.BlockSpec((M, E), lambda i: (i, 0))]             # P per column
                + [full(a) for a in operands[2:]])
    out_specs = pl.BlockSpec((None, 1, M), lambda i: (i, 0, 0))      # lane-dense row

    kernel = _make_kernel(TS1, S0, D, E, HID, n_heads, n_layers)

    # cost / VMEM sizing
    Mtot = S1 * S0
    flops = int(2 * Mtot * D * E
                + n_layers * (10 * Mtot * E * E + 4 * Mtot * S0 * E)
                + 2 * Mtot * E * HID + 2 * Mtot * HID)
    transcendentals = int(n_layers * S1 * n_heads * S0 * S0 + Mtot)
    weight_bytes = sum(int(a.size) * a.dtype.itemsize for a in operands[2:])
    bytes_accessed = int(x_flat.size * 4 + pos_flat.size * 4 + NB * M * 4
                         + weight_bytes)
    act_bytes = M * max(3 * E, HID, E, D) * 4
    vmem_est = 2 * (M * D * 4 + M * E * 4 + M * 4) + weight_bytes + 16 * act_bytes
    vmem_limit = int(min(64 * 1024 * 1024, max(8 * 1024 * 1024, 2 * vmem_est)))

    out = pl.pallas_call(
        kernel,
        grid=(NB,),
        in_specs=in_specs,
        out_specs=out_specs,
        out_shape=jax.ShapeDtypeStruct((NB, 1, M), jnp.float32),
        compiler_params=pltpu.CompilerParams(
            dimension_semantics=("parallel",),
            vmem_limit_bytes=vmem_limit),
        cost_estimate=pl.CostEstimate(flops=flops,
                                      transcendentals=transcendentals,
                                      bytes_accessed=bytes_accessed),
    )(*operands)

    return jnp.transpose(out.reshape(S1, S0), (1, 0))                # (S0, S1)


def reference_forward(x, params, n_layers, n_heads=8):
    """Pure-JAX f32 reference of the same forward pass (for verification)."""
    S0, S1, D = x.shape
    E = params["w0"].shape[1]
    hd = E // n_heads

    def ln(t, g, b, eps=1e-5):
        mu = jnp.mean(t, axis=-1, keepdims=True)
        var = jnp.mean((t - mu) ** 2, axis=-1, keepdims=True)
        return (t - mu) / jnp.sqrt(var + eps) * g + b

    h = jnp.einsum("sbd,de->sbe", x, params["w0"]) + params["b0"]
    h = h + params["P"][:S1][None, :, :]
    for l in range(n_layers):
        y = h
        q = jnp.einsum("sbe,ef->sbf", y, params["wq"][l]) + params["bq"][l]
        k = jnp.einsum("sbe,ef->sbf", y, params["wk"][l]) + params["bk"][l]
        v = jnp.einsum("sbe,ef->sbf", y, params["wv"][l]) + params["bv"][l]
        qh = q.reshape(S0, S1, n_heads, hd)
        kh = k.reshape(S0, S1, n_heads, hd)
        vh = v.reshape(S0, S1, n_heads, hd)
        s = jnp.einsum("sbhd,tbhd->bhst", qh, kh) / jnp.sqrt(hd)
        p = jax.nn.softmax(s, axis=-1)
        o = jnp.einsum("bhst,tbhd->sbhd", p, vh).reshape(S0, S1, E)
        attn = jnp.einsum("sbe,ef->sbf", o, params["wo"][l]) + params["bo"][l]
        hr = attn + y
        rff = jnp.einsum("sbe,ef->sbf", hr, params["wr"][l]) + params["br"][l]
        h = ln(rff + hr, params["lng"][l], params["lnb"][l])
    h = ln(h, params["n1g"], params["n1b"])
    h = jnp.maximum(jnp.einsum("sbe,eh->sbh", h, params["w1"]) + params["b1"], 0.0)
    h = ln(h, params["n2g"], params["n2b"])
    logit = jnp.einsum("sbh,oh->sbo", h, params["w2t"]) + params["b2"]
    return jax.nn.sigmoid(logit)[..., 0]


if __name__ == "__main__":
    # x: (dims[0], dims[1], d_model); emb_dims divisible by 8 heads.
    d_model, n_layers, emb_dims, hid_dims, n_heads = 16, 2, 32, 32, 8
    S0, S1 = 8, 4

    key = jax.random.PRNGKey(0)
    kx, kp = jax.random.split(key)
    x = jax.random.normal(kx, (S0, S1, d_model), dtype=jnp.float32)
    params = init_params(kp, d_model, n_layers, emb_dims, hid_dims, n_heads)

    y = transformer_classifier_forward(x, params, n_layers, n_heads)
    y = jax.block_until_ready(y)

    assert y.shape == (S0, S1), y.shape
    assert bool(jnp.all(jnp.isfinite(y)))
    assert bool(jnp.all((y > 0.0) & (y < 1.0)))       # sigmoid output range

    y_ref = reference_forward(x, params, n_layers, n_heads)
    max_err = float(jnp.max(jnp.abs(y - y_ref)))
    assert max_err < 5e-2, f"max |kernel - f32 reference| = {max_err}"
    print("KERNEL_OK")
</pallas_src>

<mosaic_0001>
module attributes {stable_mosaic.version = 11 : i64} {
  func.func @kernel(%arg0: i32, %arg1: memref<16x16xf32, #tpu.memory_space<vmem>>, %arg2: memref<16x32xf32, #tpu.memory_space<vmem>>, %arg3: memref<16x32xbf16, #tpu.memory_space<vmem>>, %arg4: memref<1x32xf32, #tpu.memory_space<vmem>>, %arg5: memref<2x32x96xbf16, #tpu.memory_space<vmem>>, %arg6: memref<2x1x96xf32, #tpu.memory_space<vmem>>, %arg7: memref<2x32x32xbf16, #tpu.memory_space<vmem>>, %arg8: memref<2x1x32xf32, #tpu.memory_space<vmem>>, %arg9: memref<2x32x32xbf16, #tpu.memory_space<vmem>>, %arg10: memref<2x1x32xf32, #tpu.memory_space<vmem>>, %arg11: memref<2x1x32xf32, #tpu.memory_space<vmem>>, %arg12: memref<2x1x32xf32, #tpu.memory_space<vmem>>, %arg13: memref<1x32xf32, #tpu.memory_space<vmem>>, %arg14: memref<1x32xf32, #tpu.memory_space<vmem>>, %arg15: memref<32x32xbf16, #tpu.memory_space<vmem>>, %arg16: memref<1x32xf32, #tpu.memory_space<vmem>>, %arg17: memref<1x32xf32, #tpu.memory_space<vmem>>, %arg18: memref<1x32xf32, #tpu.memory_space<vmem>>, %arg19: memref<1x32xbf16, #tpu.memory_space<vmem>>, %arg20: memref<1x1xf32, #tpu.memory_space<vmem>>, %arg21: memref<1x1x16xf32, #tpu.memory_space<vmem>>) attributes {dimension_semantics = [#tpu.dimension_semantics<parallel>], iteration_bounds = array<i64: 2>, scalar_prefetch = 0 : i64, scratch_operands = 0 : i64, tpu.core_type = #tpu.core_type<tc>, window_params = [{transform_indices = @transform_0, window_bounds = array<i64: 16, 16>}, {transform_indices = @transform_1, window_bounds = array<i64: 16, 32>}, {pipeline_mode = #tpu.pipeline_mode<synchronous>, transform_indices = @transform_2, window_bounds = array<i64: 16, 32>}, {pipeline_mode = #tpu.pipeline_mode<synchronous>, transform_indices = @transform_3, window_bounds = array<i64: 1, 32>}, {pipeline_mode = #tpu.pipeline_mode<synchronous>, transform_indices = @transform_4, window_bounds = array<i64: 2, 32, 96>}, {pipeline_mode = #tpu.pipeline_mode<synchronous>, transform_indices = @transform_5, window_bounds = array<i64: 2, 1, 96>}, {pipeline_mode = #tpu.pipeline_mode<synchronous>, transform_indices = @transform_6, window_bounds = array<i64: 2, 32, 32>}, {pipeline_mode = #tpu.pipeline_mode<synchronous>, transform_indices = @transform_7, window_bounds = array<i64: 2, 1, 32>}, {pipeline_mode = #tpu.pipeline_mode<synchronous>, transform_indices = @transform_8, window_bounds = array<i64: 2, 32, 32>}, {pipeline_mode = #tpu.pipeline_mode<synchronous>, transform_indices = @transform_9, window_bounds = array<i64: 2, 1, 32>}, {pipeline_mode = #tpu.pipeline_mode<synchronous>, transform_indices = @transform_10, window_bounds = array<i64: 2, 1, 32>}, {pipeline_mode = #tpu.pipeline_mode<synchronous>, transform_indices = @transform_11, window_bounds = array<i64: 2, 1, 32>}, {pipeline_mode = #tpu.pipeline_mode<synchronous>, transform_indices = @transform_12, window_bounds = array<i64: 1, 32>}, {pipeline_mode = #tpu.pipeline_mode<synchronous>, transform_indices = @transform_13, window_bounds = array<i64: 1, 32>}, {pipeline_mode = #tpu.pipeline_mode<synchronous>, transform_indices = @transform_14, window_bounds = array<i64: 32, 32>}, {pipeline_mode = #tpu.pipeline_mode<synchronous>, transform_indices = @transform_15, window_bounds = array<i64: 1, 32>}, {pipeline_mode = #tpu.pipeline_mode<synchronous>, transform_indices = @transform_16, window_bounds = array<i64: 1, 32>}, {pipeline_mode = #tpu.pipeline_mode<synchronous>, transform_indices = @transform_17, window_bounds = array<i64: 1, 32>}, {pipeline_mode = #tpu.pipeline_mode<synchronous>, transform_indices = @transform_18, window_bounds = array<i64: 1, 32>}, {pipeline_mode = #tpu.pipeline_mode<synchronous>, transform_indices = @transform_19, window_bounds = array<i64: 1, 1>}, {transform_indices = @transform_20, window_bounds = array<i64: 1, 1, 16>}]} {
    %c0 = arith.constant 0 : index
    %c0_0 = arith.constant 0 : index
    %0 = vector.load %arg1[%c0, %c0_0] : memref<16x16xf32, #tpu.memory_space<vmem>>, vector<16x16xf32>
    %1 = arith.truncf %0 : vector<16x16xf32> to vector<16x16xbf16>
    %c0_1 = arith.constant 0 : index
    %c0_2 = arith.constant 0 : index
    %2 = vector.load %arg3[%c0_1, %c0_2] : memref<16x32xbf16, #tpu.memory_space<vmem>>, vector<16x32xbf16>
    %cst = arith.constant dense<0.000000e+00> : vector<16x32xf32>
    %3 = tpu.matmul %1, %2, %cst {dimension_numbers = #tpu.dot_dimension_numbers<[1], [0], [0], [1], [0, 0, 1, 1], [], []>} : vector<16x16xbf16>, vector<16x32xbf16>, vector<16x32xf32> -> vector<16x32xf32>
    %c0_3 = arith.constant 0 : index
    %c0_4 = arith.constant 0 : index
    %4 = vector.load %arg4[%c0_3, %c0_4] : memref<1x32xf32, #tpu.memory_space<vmem>>, vector<1x32xf32>
    %5 = vector.broadcast %4 : vector<1x32xf32> to vector<16x32xf32>
    %6 = arith.addf %3, %5 : vector<16x32xf32>
    %c0_5 = arith.constant 0 : index
    %c0_6 = arith.constant 0 : index
    %7 = vector.load %arg2[%c0_5, %c0_6] : memref<16x32xf32, #tpu.memory_space<vmem>>, vector<16x32xf32>
    %8 = arith.addf %6, %7 : vector<16x32xf32>
    %c0_i32 = arith.constant 0 : i32
    %c2_i32 = arith.constant 2 : i32
    %9 = arith.addi %c0_i32, %c2_i32 : i32
    %c1_i32 = arith.constant 1 : i32
    %10 = scf.for %arg22 = %c0_i32 to %9 step %c1_i32 iter_args(%arg23 = %8) -> (vector<16x32xf32>)  : i32 {
      %83 = arith.truncf %arg23 : vector<16x32xf32> to vector<16x32xbf16>
      %84 = arith.index_cast %arg22 : i32 to index
      %c0_43 = arith.constant 0 : index
      %c0_44 = arith.constant 0 : index
      %85 = vector.load %arg5[%84, %c0_43, %c0_44] : memref<2x32x96xbf16, #tpu.memory_space<vmem>>, vector<1x32x96xbf16>
      %86 = vector.shape_cast %85 : vector<1x32x96xbf16> to vector<32x96xbf16>
      %cst_45 = arith.constant dense<0.000000e+00> : vector<16x96xf32>
      %87 = tpu.matmul %83, %86, %cst_45 {dimension_numbers = #tpu.dot_dimension_numbers<[1], [0], [0], [1], [0, 0, 1, 1], [], []>} : vector<16x32xbf16>, vector<32x96xbf16>, vector<16x96xf32> -> vector<16x96xf32>
      %88 = arith.index_cast %arg22 : i32 to index
      %c0_46 = arith.constant 0 : index
      %c0_47 = arith.constant 0 : index
      %89 = vector.load %arg6[%88, %c0_46, %c0_47] : memref<2x1x96xf32, #tpu.memory_space<vmem>>, vector<1x1x96xf32>
      %90 = vector.shape_cast %89 : vector<1x1x96xf32> to vector<1x96xf32>
      %91 = vector.broadcast %90 : vector<1x96xf32> to vector<16x96xf32>
      %92 = arith.addf %87, %91 : vector<16x96xf32>
      %93 = arith.truncf %92 : vector<16x96xf32> to vector<16x96xbf16>
      %94 = vector.shape_cast %93 : vector<16x96xbf16> to vector<2x8x96xbf16>
      %95 = arith.index_cast %arg22 : i32 to index
      %c0_48 = arith.constant 0 : index
      %c0_49 = arith.constant 0 : index
      %96 = vector.load %arg7[%95, %c0_48, %c0_49] : memref<2x32x32xbf16, #tpu.memory_space<vmem>>, vector<1x32x32xbf16>
      %97 = vector.shape_cast %96 : vector<1x32x32xbf16> to vector<32x32xbf16>
      %cst_50 = arith.constant 0.000000e+00 : f32
      %98 = vector.broadcast %cst_50 : f32 to vector<16x32xf32>
      %99 = vector.extract_strided_slice %94 {offsets = [0, 0, 0], sizes = [2, 8, 4], strides = [1, 1, 1]} : vector<2x8x96xbf16> to vector<2x8x4xbf16>
      %100 = vector.extract_strided_slice %94 {offsets = [0, 0, 32], sizes = [2, 8, 4], strides = [1, 1, 1]} : vector<2x8x96xbf16> to vector<2x8x4xbf16>
      %101 = vector.extract_strided_slice %94 {offsets = [0, 0, 64], sizes = [2, 8, 4], strides = [1, 1, 1]} : vector<2x8x96xbf16> to vector<2x8x4xbf16>
      %cst_51 = arith.constant dense<0.000000e+00> : vector<2x8x8xf32>
      %102 = tpu.matmul %99, %100, %cst_51 {dimension_numbers = #tpu.dot_dimension_numbers<[2], [2], [1], [1], [0, 0, 0, 1, 1, 1], [0], [0]>} : vector<2x8x4xbf16>, vector<2x8x4xbf16>, vector<2x8x8xf32> -> vector<2x8x8xf32>
      %cst_52 = arith.constant 5.000000e-01 : f32
      %103 = vector.broadcast %cst_52 : f32 to vector<2x8x8xf32>
      %104 = arith.mulf %102, %103 : vector<2x8x8xf32>
      %cst_53 = arith.constant dense<0xFF800000> : vector<2x8xf32>
      %105 = vector.multi_reduction <maximumf>, %104, %cst_53 [2] : vector<2x8x8xf32> to vector<2x8xf32>
      %106 = vector.shape_cast %105 : vector<2x8xf32> to vector<2x8x1xf32>
      %107 = vector.broadcast %106 : vector<2x8x1xf32> to vector<2x8x8xf32>
      %108 = arith.subf %104, %107 : vector<2x8x8xf32>
      %109 = math.exp %108 : vector<2x8x8xf32>
      %cst_54 = arith.constant dense<0.000000e+00> : vector<2x8xf32>
      %110 = vector.multi_reduction <add>, %109, %cst_54 [2] : vector<2x8x8xf32> to vector<2x8xf32>
      %111 = vector.shape_cast %110 : vector<2x8xf32> to vector<2x8x1xf32>
      %112 = tpu.reciprocal %111 {approx = true} : vector<2x8x1xf32> -> vector<2x8x1xf32>
      %113 = vector.broadcast %112 : vector<2x8x1xf32> to vector<2x8x8xf32>
      %114 = arith.mulf %109, %113 : vector<2x8x8xf32>
      %115 = arith.truncf %114 : vector<2x8x8xf32> to vector<2x8x8xbf16>
      %cst_55 = arith.constant dense<0.000000e+00> : vector<2x8x4xf32>
      %116 = tpu.matmul %115, %101, %cst_55 {dimension_numbers = #tpu.dot_dimension_numbers<[2], [1], [1], [2], [0, 0, 0, 1, 1, 2], [0], [0]>} : vector<2x8x8xbf16>, vector<2x8x4xbf16>, vector<2x8x4xf32> -> vector<2x8x4xf32>
      %117 = vector.shape_cast %116 : vector<2x8x4xf32> to vector<16x4xf32>
      %118 = arith.truncf %117 : vector<16x4xf32> to vector<16x4xbf16>
      %119 = vector.extract_strided_slice %97 {offsets = [0, 0], sizes = [4, 32], strides = [1, 1]} : vector<32x32xbf16> to vector<4x32xbf16>
      %cst_56 = arith.constant dense<0.000000e+00> : vector<16x32xf32>
      %120 = tpu.matmul %118, %119, %cst_56 {dimension_numbers = #tpu.dot_dimension_numbers<[1], [0], [0], [1], [0, 0, 1, 1], [], []>} : vector<16x4xbf16>, vector<4x32xbf16>, vector<16x32xf32> -> vector<16x32xf32>
      %121 = arith.addf %98, %120 : vector<16x32xf32>
      %122 = vector.extract_strided_slice %94 {offsets = [0, 0, 4], sizes = [2, 8, 4], strides = [1, 1, 1]} : vector<2x8x96xbf16> to vector<2x8x4xbf16>
      %123 = vector.extract_strided_slice %94 {offsets = [0, 0, 36], sizes = [2, 8, 4], strides = [1, 1, 1]} : vector<2x8x96xbf16> to vector<2x8x4xbf16>
      %124 = vector.extract_strided_slice %94 {offsets = [0, 0, 68], sizes = [2, 8, 4], strides = [1, 1, 1]} : vector<2x8x96xbf16> to vector<2x8x4xbf16>
      %cst_57 = arith.constant dense<0.000000e+00> : vector<2x8x8xf32>
      %125 = tpu.matmul %122, %123, %cst_57 {dimension_numbers = #tpu.dot_dimension_numbers<[2], [2], [1], [1], [0, 0, 0, 1, 1, 1], [0], [0]>} : vector<2x8x4xbf16>, vector<2x8x4xbf16>, vector<2x8x8xf32> -> vector<2x8x8xf32>
      %cst_58 = arith.constant 5.000000e-01 : f32
      %126 = vector.broadcast %cst_58 : f32 to vector<2x8x8xf32>
      %127 = arith.mulf %125, %126 : vector<2x8x8xf32>
      %cst_59 = arith.constant dense<0xFF800000> : vector<2x8xf32>
      %128 = vector.multi_reduction <maximumf>, %127, %cst_59 [2] : vector<2x8x8xf32> to vector<2x8xf32>
      %129 = vector.shape_cast %128 : vector<2x8xf32> to vector<2x8x1xf32>
      %130 = vector.broadcast %129 : vector<2x8x1xf32> to vector<2x8x8xf32>
      %131 = arith.subf %127, %130 : vector<2x8x8xf32>
      %132 = math.exp %131 : vector<2x8x8xf32>
      %cst_60 = arith.constant dense<0.000000e+00> : vector<2x8xf32>
      %133 = vector.multi_reduction <add>, %132, %cst_60 [2] : vector<2x8x8xf32> to vector<2x8xf32>
      %134 = vector.shape_cast %133 : vector<2x8xf32> to vector<2x8x1xf32>
      %135 = tpu.reciprocal %134 {approx = true} : vector<2x8x1xf32> -> vector<2x8x1xf32>
      %136 = vector.broadcast %135 : vector<2x8x1xf32> to vector<2x8x8xf32>
      %137 = arith.mulf %132, %136 : vector<2x8x8xf32>
      %138 = arith.truncf %137 : vector<2x8x8xf32> to vector<2x8x8xbf16>
      %cst_61 = arith.constant dense<0.000000e+00> : vector<2x8x4xf32>
      %139 = tpu.matmul %138, %124, %cst_61 {dimension_numbers = #tpu.dot_dimension_numbers<[2], [1], [1], [2], [0, 0, 0, 1, 1, 2], [0], [0]>} : vector<2x8x8xbf16>, vector<2x8x4xbf16>, vector<2x8x4xf32> -> vector<2x8x4xf32>
      %140 = vector.shape_cast %139 : vector<2x8x4xf32> to vector<16x4xf32>
      %141 = arith.truncf %140 : vector<16x4xf32> to vector<16x4xbf16>
      %142 = vector.extract_strided_slice %97 {offsets = [4, 0], sizes = [4, 32], strides = [1, 1]} : vector<32x32xbf16> to vector<4x32xbf16>
      %cst_62 = arith.constant dense<0.000000e+00> : vector<16x32xf32>
      %143 = tpu.matmul %141, %142, %cst_62 {dimension_numbers = #tpu.dot_dimension_numbers<[1], [0], [0], [1], [0, 0, 1, 1], [], []>} : vector<16x4xbf16>, vector<4x32xbf16>, vector<16x32xf32> -> vector<16x32xf32>
      %144 = arith.addf %121, %143 : vector<16x32xf32>
      %145 = vector.extract_strided_slice %94 {offsets = [0, 0, 8], sizes = [2, 8, 4], strides = [1, 1, 1]} : vector<2x8x96xbf16> to vector<2x8x4xbf16>
      %146 = vector.extract_strided_slice %94 {offsets = [0, 0, 40], sizes = [2, 8, 4], strides = [1, 1, 1]} : vector<2x8x96xbf16> to vector<2x8x4xbf16>
      %147 = vector.extract_strided_slice %94 {offsets = [0, 0, 72], sizes = [2, 8, 4], strides = [1, 1, 1]} : vector<2x8x96xbf16> to vector<2x8x4xbf16>
      %cst_63 = arith.constant dense<0.000000e+00> : vector<2x8x8xf32>
      %148 = tpu.matmul %145, %146, %cst_63 {dimension_numbers = #tpu.dot_dimension_numbers<[2], [2], [1], [1], [0, 0, 0, 1, 1, 1], [0], [0]>} : vector<2x8x4xbf16>, vector<2x8x4xbf16>, vector<2x8x8xf32> -> vector<2x8x8xf32>
      %cst_64 = arith.constant 5.000000e-01 : f32
      %149 = vector.broadcast %cst_64 : f32 to vector<2x8x8xf32>
      %150 = arith.mulf %148, %149 : vector<2x8x8xf32>
      %cst_65 = arith.constant dense<0xFF800000> : vector<2x8xf32>
      %151 = vector.multi_reduction <maximumf>, %150, %cst_65 [2] : vector<2x8x8xf32> to vector<2x8xf32>
      %152 = vector.shape_cast %151 : vector<2x8xf32> to vector<2x8x1xf32>
      %153 = vector.broadcast %152 : vector<2x8x1xf32> to vector<2x8x8xf32>
      %154 = arith.subf %150, %153 : vector<2x8x8xf32>
      %155 = math.exp %154 : vector<2x8x8xf32>
      %cst_66 = arith.constant dense<0.000000e+00> : vector<2x8xf32>
      %156 = vector.multi_reduction <add>, %155, %cst_66 [2] : vector<2x8x8xf32> to vector<2x8xf32>
      %157 = vector.shape_cast %156 : vector<2x8xf32> to vector<2x8x1xf32>
      %158 = tpu.reciprocal %157 {approx = true} : vector<2x8x1xf32> -> vector<2x8x1xf32>
      %159 = vector.broadcast %158 : vector<2x8x1xf32> to vector<2x8x8xf32>
      %160 = arith.mulf %155, %159 : vector<2x8x8xf32>
      %161 = arith.truncf %160 : vector<2x8x8xf32> to vector<2x8x8xbf16>
      %cst_67 = arith.constant dense<0.000000e+00> : vector<2x8x4xf32>
      %162 = tpu.matmul %161, %147, %cst_67 {dimension_numbers = #tpu.dot_dimension_numbers<[2], [1], [1], [2], [0, 0, 0, 1, 1, 2], [0], [0]>} : vector<2x8x8xbf16>, vector<2x8x4xbf16>, vector<2x8x4xf32> -> vector<2x8x4xf32>
      %163 = vector.shape_cast %162 : vector<2x8x4xf32> to vector<16x4xf32>
      %164 = arith.truncf %163 : vector<16x4xf32> to vector<16x4xbf16>
      %165 = vector.extract_strided_slice %97 {offsets = [8, 0], sizes = [4, 32], strides = [1, 1]} : vector<32x32xbf16> to vector<4x32xbf16>
      %cst_68 = arith.constant dense<0.000000e+00> : vector<16x32xf32>
      %166 = tpu.matmul %164, %165, %cst_68 {dimension_numbers = #tpu.dot_dimension_numbers<[1], [0], [0], [1], [0, 0, 1, 1], [], []>} : vector<16x4xbf16>, vector<4x32xbf16>, vector<16x32xf32> -> vector<16x32xf32>
      %167 = arith.addf %144, %166 : vector<16x32xf32>
      %168 = vector.extract_strided_slice %94 {offsets = [0, 0, 12], sizes = [2, 8, 4], strides = [1, 1, 1]} : vector<2x8x96xbf16> to vector<2x8x4xbf16>
      %169 = vector.extract_strided_slice %94 {offsets = [0, 0, 44], sizes = [2, 8, 4], strides = [1, 1, 1]} : vector<2x8x96xbf16> to vector<2x8x4xbf16>
      %170 = vector.extract_strided_slice %94 {offsets = [0, 0, 76], sizes = [2, 8, 4], strides = [1, 1, 1]} : vector<2x8x96xbf16> to vector<2x8x4xbf16>
      %cst_69 = arith.constant dense<0.000000e+00> : vector<2x8x8xf32>
      %171 = tpu.matmul %168, %169, %cst_69 {dimension_numbers = #tpu.dot_dimension_numbers<[2], [2], [1], [1], [0, 0, 0, 1, 1, 1], [0], [0]>} : vector<2x8x4xbf16>, vector<2x8x4xbf16>, vector<2x8x8xf32> -> vector<2x8x8xf32>
      %cst_70 = arith.constant 5.000000e-01 : f32
      %172 = vector.broadcast %cst_70 : f32 to vector<2x8x8xf32>
      %173 = arith.mulf %171, %172 : vector<2x8x8xf32>
      %cst_71 = arith.constant dense<0xFF800000> : vector<2x8xf32>
      %174 = vector.multi_reduction <maximumf>, %173, %cst_71 [2] : vector<2x8x8xf32> to vector<2x8xf32>
      %175 = vector.shape_cast %174 : vector<2x8xf32> to vector<2x8x1xf32>
      %176 = vector.broadcast %175 : vector<2x8x1xf32> to vector<2x8x8xf32>
      %177 = arith.subf %173, %176 : vector<2x8x8xf32>
      %178 = math.exp %177 : vector<2x8x8xf32>
      %cst_72 = arith.constant dense<0.000000e+00> : vector<2x8xf32>
      %179 = vector.multi_reduction <add>, %178, %cst_72 [2] : vector<2x8x8xf32> to vector<2x8xf32>
      %180 = vector.shape_cast %179 : vector<2x8xf32> to vector<2x8x1xf32>
      %181 = tpu.reciprocal %180 {approx = true} : vector<2x8x1xf32> -> vector<2x8x1xf32>
      %182 = vector.broadcast %181 : vector<2x8x1xf32> to vector<2x8x8xf32>
      %183 = arith.mulf %178, %182 : vector<2x8x8xf32>
      %184 = arith.truncf %183 : vector<2x8x8xf32> to vector<2x8x8xbf16>
      %cst_73 = arith.constant dense<0.000000e+00> : vector<2x8x4xf32>
      %185 = tpu.matmul %184, %170, %cst_73 {dimension_numbers = #tpu.dot_dimension_numbers<[2], [1], [1], [2], [0, 0, 0, 1, 1, 2], [0], [0]>} : vector<2x8x8xbf16>, vector<2x8x4xbf16>, vector<2x8x4xf32> -> vector<2x8x4xf32>
      %186 = vector.shape_cast %185 : vector<2x8x4xf32> to vector<16x4xf32>
      %187 = arith.truncf %186 : vector<16x4xf32> to vector<16x4xbf16>
      %188 = vector.extract_strided_slice %97 {offsets = [12, 0], sizes = [4, 32], strides = [1, 1]} : vector<32x32xbf16> to vector<4x32xbf16>
      %cst_74 = arith.constant dense<0.000000e+00> : vector<16x32xf32>
      %189 = tpu.matmul %187, %188, %cst_74 {dimension_numbers = #tpu.dot_dimension_numbers<[1], [0], [0], [1], [0, 0, 1, 1], [], []>} : vector<16x4xbf16>, vector<4x32xbf16>, vector<16x32xf32> -> vector<16x32xf32>
      %190 = arith.addf %167, %189 : vector<16x32xf32>
      %191 = vector.extract_strided_slice %94 {offsets = [0, 0, 16], sizes = [2, 8, 4], strides = [1, 1, 1]} : vector<2x8x96xbf16> to vector<2x8x4xbf16>
      %192 = vector.extract_strided_slice %94 {offsets = [0, 0, 48], sizes = [2, 8, 4], strides = [1, 1, 1]} : vector<2x8x96xbf16> to vector<2x8x4xbf16>
      %193 = vector.extract_strided_slice %94 {offsets = [0, 0, 80], sizes = [2, 8, 4], strides = [1, 1, 1]} : vector<2x8x96xbf16> to vector<2x8x4xbf16>
      %cst_75 = arith.constant dense<0.000000e+00> : vector<2x8x8xf32>
      %194 = tpu.matmul %191, %192, %cst_75 {dimension_numbers = #tpu.dot_dimension_numbers<[2], [2], [1], [1], [0, 0, 0, 1, 1, 1], [0], [0]>} : vector<2x8x4xbf16>, vector<2x8x4xbf16>, vector<2x8x8xf32> -> vector<2x8x8xf32>
      %cst_76 = arith.constant 5.000000e-01 : f32
      %195 = vector.broadcast %cst_76 : f32 to vector<2x8x8xf32>
      %196 = arith.mulf %194, %195 : vector<2x8x8xf32>
      %cst_77 = arith.constant dense<0xFF800000> : vector<2x8xf32>
      %197 = vector.multi_reduction <maximumf>, %196, %cst_77 [2] : vector<2x8x8xf32> to vector<2x8xf32>
      %198 = vector.shape_cast %197 : vector<2x8xf32> to vector<2x8x1xf32>
      %199 = vector.broadcast %198 : vector<2x8x1xf32> to vector<2x8x8xf32>
      %200 = arith.subf %196, %199 : vector<2x8x8xf32>
      %201 = math.exp %200 : vector<2x8x8xf32>
      %cst_78 = arith.constant dense<0.000000e+00> : vector<2x8xf32>
      %202 = vector.multi_reduction <add>, %201, %cst_78 [2] : vector<2x8x8xf32> to vector<2x8xf32>
      %203 = vector.shape_cast %202 : vector<2x8xf32> to vector<2x8x1xf32>
      %204 = tpu.reciprocal %203 {approx = true} : vector<2x8x1xf32> -> vector<2x8x1xf32>
      %205 = vector.broadcast %204 : vector<2x8x1xf32> to vector<2x8x8xf32>
      %206 = arith.mulf %201, %205 : vector<2x8x8xf32>
      %207 = arith.truncf %206 : vector<2x8x8xf32> to vector<2x8x8xbf16>
      %cst_79 = arith.constant dense<0.000000e+00> : vector<2x8x4xf32>
      %208 = tpu.matmul %207, %193, %cst_79 {dimension_numbers = #tpu.dot_dimension_numbers<[2], [1], [1], [2], [0, 0, 0, 1, 1, 2], [0], [0]>} : vector<2x8x8xbf16>, vector<2x8x4xbf16>, vector<2x8x4xf32> -> vector<2x8x4xf32>
      %209 = vector.shape_cast %208 : vector<2x8x4xf32> to vector<16x4xf32>
      %210 = arith.truncf %209 : vector<16x4xf32> to vector<16x4xbf16>
      %211 = vector.extract_strided_slice %97 {offsets = [16, 0], sizes = [4, 32], strides = [1, 1]} : vector<32x32xbf16> to vector<4x32xbf16>
      %cst_80 = arith.constant dense<0.000000e+00> : vector<16x32xf32>
      %212 = tpu.matmul %210, %211, %cst_80 {dimension_numbers = #tpu.dot_dimension_numbers<[1], [0], [0], [1], [0, 0, 1, 1], [], []>} : vector<16x4xbf16>, vector<4x32xbf16>, vector<16x32xf32> -> vector<16x32xf32>
      %213 = arith.addf %190, %212 : vector<16x32xf32>
      %214 = vector.extract_strided_slice %94 {offsets = [0, 0, 20], sizes = [2, 8, 4], strides = [1, 1, 1]} : vector<2x8x96xbf16> to vector<2x8x4xbf16>
      %215 = vector.extract_strided_slice %94 {offsets = [0, 0, 52], sizes = [2, 8, 4], strides = [1, 1, 1]} : vector<2x8x96xbf16> to vector<2x8x4xbf16>
      %216 = vector.extract_strided_slice %94 {offsets = [0, 0, 84], sizes = [2, 8, 4], strides = [1, 1, 1]} : vector<2x8x96xbf16> to vector<2x8x4xbf16>
      %cst_81 = arith.constant dense<0.000000e+00> : vector<2x8x8xf32>
      %217 = tpu.matmul %214, %215, %cst_81 {dimension_numbers = #tpu.dot_dimension_numbers<[2], [2], [1], [1], [0, 0, 0, 1, 1, 1], [0], [0]>} : vector<2x8x4xbf16>, vector<2x8x4xbf16>, vector<2x8x8xf32> -> vector<2x8x8xf32>
      %cst_82 = arith.constant 5.000000e-01 : f32
      %218 = vector.broadcast %cst_82 : f32 to vector<2x8x8xf32>
      %219 = arith.mulf %217, %218 : vector<2x8x8xf32>
      %cst_83 = arith.constant dense<0xFF800000> : vector<2x8xf32>
      %220 = vector.multi_reduction <maximumf>, %219, %cst_83 [2] : vector<2x8x8xf32> to vector<2x8xf32>
      %221 = vector.shape_cast %220 : vector<2x8xf32> to vector<2x8x1xf32>
      %222 = vector.broadcast %221 : vector<2x8x1xf32> to vector<2x8x8xf32>
      %223 = arith.subf %219, %222 : vector<2x8x8xf32>
      %224 = math.exp %223 : vector<2x8x8xf32>
      %cst_84 = arith.constant dense<0.000000e+00> : vector<2x8xf32>
      %225 = vector.multi_reduction <add>, %224, %cst_84 [2] : vector<2x8x8xf32> to vector<2x8xf32>
      %226 = vector.shape_cast %225 : vector<2x8xf32> to vector<2x8x1xf32>
      %227 = tpu.reciprocal %226 {approx = true} : vector<2x8x1xf32> -> vector<2x8x1xf32>
      %228 = vector.broadcast %227 : vector<2x8x1xf32> to vector<2x8x8xf32>
      %229 = arith.mulf %224, %228 : vector<2x8x8xf32>
      %230 = arith.truncf %229 : vector<2x8x8xf32> to vector<2x8x8xbf16>
      %cst_85 = arith.constant dense<0.000000e+00> : vector<2x8x4xf32>
      %231 = tpu.matmul %230, %216, %cst_85 {dimension_numbers = #tpu.dot_dimension_numbers<[2], [1], [1], [2], [0, 0, 0, 1, 1, 2], [0], [0]>} : vector<2x8x8xbf16>, vector<2x8x4xbf16>, vector<2x8x4xf32> -> vector<2x8x4xf32>
      %232 = vector.shape_cast %231 : vector<2x8x4xf32> to vector<16x4xf32>
      %233 = arith.truncf %232 : vector<16x4xf32> to vector<16x4xbf16>
      %234 = vector.extract_strided_slice %97 {offsets = [20, 0], sizes = [4, 32], strides = [1, 1]} : vector<32x32xbf16> to vector<4x32xbf16>
      %cst_86 = arith.constant dense<0.000000e+00> : vector<16x32xf32>
      %235 = tpu.matmul %233, %234, %cst_86 {dimension_numbers = #tpu.dot_dimension_numbers<[1], [0], [0], [1], [0, 0, 1, 1], [], []>} : vector<16x4xbf16>, vector<4x32xbf16>, vector<16x32xf32> -> vector<16x32xf32>
      %236 = arith.addf %213, %235 : vector<16x32xf32>
      %237 = vector.extract_strided_slice %94 {offsets = [0, 0, 24], sizes = [2, 8, 4], strides = [1, 1, 1]} : vector<2x8x96xbf16> to vector<2x8x4xbf16>
      %238 = vector.extract_strided_slice %94 {offsets = [0, 0, 56], sizes = [2, 8, 4], strides = [1, 1, 1]} : vector<2x8x96xbf16> to vector<2x8x4xbf16>
      %239 = vector.extract_strided_slice %94 {offsets = [0, 0, 88], sizes = [2, 8, 4], strides = [1, 1, 1]} : vector<2x8x96xbf16> to vector<2x8x4xbf16>
      %cst_87 = arith.constant dense<0.000000e+00> : vector<2x8x8xf32>
      %240 = tpu.matmul %237, %238, %cst_87 {dimension_numbers = #tpu.dot_dimension_numbers<[2], [2], [1], [1], [0, 0, 0, 1, 1, 1], [0], [0]>} : vector<2x8x4xbf16>, vector<2x8x4xbf16>, vector<2x8x8xf32> -> vector<2x8x8xf32>
      %cst_88 = arith.constant 5.000000e-01 : f32
      %241 = vector.broadcast %cst_88 : f32 to vector<2x8x8xf32>
      %242 = arith.mulf %240, %241 : vector<2x8x8xf32>
      %cst_89 = arith.constant dense<0xFF800000> : vector<2x8xf32>
      %243 = vector.multi_reduction <maximumf>, %242, %cst_89 [2] : vector<2x8x8xf32> to vector<2x8xf32>
      %244 = vector.shape_cast %243 : vector<2x8xf32> to vector<2x8x1xf32>
      %245 = vector.broadcast %244 : vector<2x8x1xf32> to vector<2x8x8xf32>
      %246 = arith.subf %242, %245 : vector<2x8x8xf32>
      %247 = math.exp %246 : vector<2x8x8xf32>
      %cst_90 = arith.constant dense<0.000000e+00> : vector<2x8xf32>
      %248 = vector.multi_reduction <add>, %247, %cst_90 [2] : vector<2x8x8xf32> to vector<2x8xf32>
      %249 = vector.shape_cast %248 : vector<2x8xf32> to vector<2x8x1xf32>
      %250 = tpu.reciprocal %249 {approx = true} : vector<2x8x1xf32> -> vector<2x8x1xf32>
      %251 = vector.broadcast %250 : vector<2x8x1xf32> to vector<2x8x8xf32>
      %252 = arith.mulf %247, %251 : vector<2x8x8xf32>
      %253 = arith.truncf %252 : vector<2x8x8xf32> to vector<2x8x8xbf16>
      %cst_91 = arith.constant dense<0.000000e+00> : vector<2x8x4xf32>
      %254 = tpu.matmul %253, %239, %cst_91 {dimension_numbers = #tpu.dot_dimension_numbers<[2], [1], [1], [2], [0, 0, 0, 1, 1, 2], [0], [0]>} : vector<2x8x8xbf16>, vector<2x8x4xbf16>, vector<2x8x4xf32> -> vector<2x8x4xf32>
      %255 = vector.shape_cast %254 : vector<2x8x4xf32> to vector<16x4xf32>
      %256 = arith.truncf %255 : vector<16x4xf32> to vector<16x4xbf16>
      %257 = vector.extract_strided_slice %97 {offsets = [24, 0], sizes = [4, 32], strides = [1, 1]} : vector<32x32xbf16> to vector<4x32xbf16>
      %cst_92 = arith.constant dense<0.000000e+00> : vector<16x32xf32>
      %258 = tpu.matmul %256, %257, %cst_92 {dimension_numbers = #tpu.dot_dimension_numbers<[1], [0], [0], [1], [0, 0, 1, 1], [], []>} : vector<16x4xbf16>, vector<4x32xbf16>, vector<16x32xf32> -> vector<16x32xf32>
      %259 = arith.addf %236, %258 : vector<16x32xf32>
      %260 = vector.extract_strided_slice %94 {offsets = [0, 0, 28], sizes = [2, 8, 4], strides = [1, 1, 1]} : vector<2x8x96xbf16> to vector<2x8x4xbf16>
      %261 = vector.extract_strided_slice %94 {offsets = [0, 0, 60], sizes = [2, 8, 4], strides = [1, 1, 1]} : vector<2x8x96xbf16> to vector<2x8x4xbf16>
      %262 = vector.extract_strided_slice %94 {offsets = [0, 0, 92], sizes = [2, 8, 4], strides = [1, 1, 1]} : vector<2x8x96xbf16> to vector<2x8x4xbf16>
      %cst_93 = arith.constant dense<0.000000e+00> : vector<2x8x8xf32>
      %263 = tpu.matmul %260, %261, %cst_93 {dimension_numbers = #tpu.dot_dimension_numbers<[2], [2], [1], [1], [0, 0, 0, 1, 1, 1], [0], [0]>} : vector<2x8x4xbf16>, vector<2x8x4xbf16>, vector<2x8x8xf32> -> vector<2x8x8xf32>
      %cst_94 = arith.constant 5.000000e-01 : f32
      %264 = vector.broadcast %cst_94 : f32 to vector<2x8x8xf32>
      %265 = arith.mulf %263, %264 : vector<2x8x8xf32>
      %cst_95 = arith.constant dense<0xFF800000> : vector<2x8xf32>
      %266 = vector.multi_reduction <maximumf>, %265, %cst_95 [2] : vector<2x8x8xf32> to vector<2x8xf32>
      %267 = vector.shape_cast %266 : vector<2x8xf32> to vector<2x8x1xf32>
      %268 = vector.broadcast %267 : vector<2x8x1xf32> to vector<2x8x8xf32>
      %269 = arith.subf %265, %268 : vector<2x8x8xf32>
      %270 = math.exp %269 : vector<2x8x8xf32>
      %cst_96 = arith.constant dense<0.000000e+00> : vector<2x8xf32>
      %271 = vector.multi_reduction <add>, %270, %cst_96 [2] : vector<2x8x8xf32> to vector<2x8xf32>
      %272 = vector.shape_cast %271 : vector<2x8xf32> to vector<2x8x1xf32>
      %273 = tpu.reciprocal %272 {approx = true} : vector<2x8x1xf32> -> vector<2x8x1xf32>
      %274 = vector.broadcast %273 : vector<2x8x1xf32> to vector<2x8x8xf32>
      %275 = arith.mulf %270, %274 : vector<2x8x8xf32>
      %276 = arith.truncf %275 : vector<2x8x8xf32> to vector<2x8x8xbf16>
      %cst_97 = arith.constant dense<0.000000e+00> : vector<2x8x4xf32>
      %277 = tpu.matmul %276, %262, %cst_97 {dimension_numbers = #tpu.dot_dimension_numbers<[2], [1], [1], [2], [0, 0, 0, 1, 1, 2], [0], [0]>} : vector<2x8x8xbf16>, vector<2x8x4xbf16>, vector<2x8x4xf32> -> vector<2x8x4xf32>
      %278 = vector.shape_cast %277 : vector<2x8x4xf32> to vector<16x4xf32>
      %279 = arith.truncf %278 : vector<16x4xf32> to vector<16x4xbf16>
      %280 = vector.extract_strided_slice %97 {offsets = [28, 0], sizes = [4, 32], strides = [1, 1]} : vector<32x32xbf16> to vector<4x32xbf16>
      %cst_98 = arith.constant dense<0.000000e+00> : vector<16x32xf32>
      %281 = tpu.matmul %279, %280, %cst_98 {dimension_numbers = #tpu.dot_dimension_numbers<[1], [0], [0], [1], [0, 0, 1, 1], [], []>} : vector<16x4xbf16>, vector<4x32xbf16>, vector<16x32xf32> -> vector<16x32xf32>
      %282 = arith.addf %259, %281 : vector<16x32xf32>
      %283 = arith.index_cast %arg22 : i32 to index
      %c0_99 = arith.constant 0 : index
      %c0_100 = arith.constant 0 : index
      %284 = vector.load %arg8[%283, %c0_99, %c0_100] : memref<2x1x32xf32, #tpu.memory_space<vmem>>, vector<1x1x32xf32>
      %285 = vector.shape_cast %284 : vector<1x1x32xf32> to vector<1x32xf32>
      %286 = vector.broadcast %285 : vector<1x32xf32> to vector<16x32xf32>
      %287 = arith.addf %282, %286 : vector<16x32xf32>
      %288 = arith.addf %287, %arg23 : vector<16x32xf32>
      %289 = arith.truncf %288 : vector<16x32xf32> to vector<16x32xbf16>
      %290 = arith.index_cast %arg22 : i32 to index
      %c0_101 = arith.constant 0 : index
      %c0_102 = arith.constant 0 : index
      %291 = vector.load %arg9[%290, %c0_101, %c0_102] : memref<2x32x32xbf16, #tpu.memory_space<vmem>>, vector<1x32x32xbf16>
      %292 = vector.shape_cast %291 : vector<1x32x32xbf16> to vector<32x32xbf16>
      %cst_103 = arith.constant dense<0.000000e+00> : vector<16x32xf32>
      %293 = tpu.matmul %289, %292, %cst_103 {dimension_numbers = #tpu.dot_dimension_numbers<[1], [0], [0], [1], [0, 0, 1, 1], [], []>} : vector<16x32xbf16>, vector<32x32xbf16>, vector<16x32xf32> -> vector<16x32xf32>
      %294 = arith.index_cast %arg22 : i32 to index
      %c0_104 = arith.constant 0 : index
      %c0_105 = arith.constant 0 : index
      %295 = vector.load %arg10[%294, %c0_104, %c0_105] : memref<2x1x32xf32, #tpu.memory_space<vmem>>, vector<1x1x32xf32>
      %296 = vector.shape_cast %295 : vector<1x1x32xf32> to vector<1x32xf32>
      %297 = vector.broadcast %296 : vector<1x32xf32> to vector<16x32xf32>
      %298 = arith.addf %293, %297 : vector<16x32xf32>
      %299 = arith.addf %298, %288 : vector<16x32xf32>
      %300 = arith.index_cast %arg22 : i32 to index
      %c0_106 = arith.constant 0 : index
      %c0_107 = arith.constant 0 : index
      %301 = vector.load %arg11[%300, %c0_106, %c0_107] : memref<2x1x32xf32, #tpu.memory_space<vmem>>, vector<1x1x32xf32>
      %302 = vector.shape_cast %301 : vector<1x1x32xf32> to vector<1x32xf32>
      %303 = arith.index_cast %arg22 : i32 to index
      %c0_108 = arith.constant 0 : index
      %c0_109 = arith.constant 0 : index
      %304 = vector.load %arg12[%303, %c0_108, %c0_109] : memref<2x1x32xf32, #tpu.memory_space<vmem>>, vector<1x1x32xf32>
      %305 = vector.shape_cast %304 : vector<1x1x32xf32> to vector<1x32xf32>
      %cst_110 = arith.constant dense<0.000000e+00> : vector<16xf32>
      %306 = vector.multi_reduction <add>, %299, %cst_110 [1] : vector<16x32xf32> to vector<16xf32>
      %307 = vector.shape_cast %306 : vector<16xf32> to vector<16x1xf32>
      %cst_111 = arith.constant 3.200000e+01 : f32
      %308 = vector.broadcast %cst_111 : f32 to vector<16x1xf32>
      %309 = arith.divf %307, %308 : vector<16x1xf32>
      %310 = vector.broadcast %309 : vector<16x1xf32> to vector<16x32xf32>
      %311 = arith.subf %299, %310 : vector<16x32xf32>
      %312 = arith.mulf %311, %311 : vector<16x32xf32>
      %cst_112 = arith.constant dense<0.000000e+00> : vector<16xf32>
      %313 = vector.multi_reduction <add>, %312, %cst_112 [1] : vector<16x32xf32> to vector<16xf32>
      %314 = vector.shape_cast %313 : vector<16xf32> to vector<16x1xf32>
      %cst_113 = arith.constant 3.200000e+01 : f32
      %315 = vector.broadcast %cst_113 : f32 to vector<16x1xf32>
      %316 = arith.divf %314, %315 : vector<16x1xf32>
      %317 = vector.broadcast %309 : vector<16x1xf32> to vector<16x32xf32>
      %318 = arith.subf %299, %317 : vector<16x32xf32>
      %cst_114 = arith.constant 9.99999974E-6 : f32
      %319 = vector.broadcast %cst_114 : f32 to vector<16x1xf32>
      %320 = arith.addf %316, %319 : vector<16x1xf32>
      %321 = math.rsqrt %320 : vector<16x1xf32>
      %322 = vector.broadcast %321 : vector<16x1xf32> to vector<16x32xf32>
      %323 = arith.mulf %318, %322 : vector<16x32xf32>
      %324 = vector.broadcast %302 : vector<1x32xf32> to vector<16x32xf32>
      %325 = arith.mulf %323, %324 : vector<16x32xf32>
      %326 = vector.broadcast %305 : vector<1x32xf32> to vector<16x32xf32>
      %327 = arith.addf %325, %326 : vector<16x32xf32>
      scf.yield %327 : vector<16x32xf32>
    }
    %c2_i32_7 = arith.constant 2 : i32
    %c0_8 = arith.constant 0 : index
    %c0_9 = arith.constant 0 : index
    %11 = vector.load %arg13[%c0_8, %c0_9] : memref<1x32xf32, #tpu.memory_space<vmem>>, vector<1x32xf32>
    %c0_10 = arith.constant 0 : index
    %c0_11 = arith.constant 0 : index
    %12 = vector.load %arg14[%c0_10, %c0_11] : memref<1x32xf32, #tpu.memory_space<vmem>>, vector<1x32xf32>
    %cst_12 = arith.constant dense<0.000000e+00> : vector<16xf32>
    %13 = vector.multi_reduction <add>, %10, %cst_12 [1] : vector<16x32xf32> to vector<16xf32>
    %14 = vector.shape_cast %13 : vector<16xf32> to vector<16x1xf32>
    %cst_13 = arith.constant 3.200000e+01 : f32
    %15 = vector.broadcast %cst_13 : f32 to vector<16x1xf32>
    %16 = arith.divf %14, %15 : vector<16x1xf32>
    %17 = vector.broadcast %16 : vector<16x1xf32> to vector<16x32xf32>
    %18 = arith.subf %10, %17 : vector<16x32xf32>
    %19 = arith.mulf %18, %18 : vector<16x32xf32>
    %cst_14 = arith.constant dense<0.000000e+00> : vector<16xf32>
    %20 = vector.multi_reduction <add>, %19, %cst_14 [1] : vector<16x32xf32> to vector<16xf32>
    %21 = vector.shape_cast %20 : vector<16xf32> to vector<16x1xf32>
    %cst_15 = arith.constant 3.200000e+01 : f32
    %22 = vector.broadcast %cst_15 : f32 to vector<16x1xf32>
    %23 = arith.divf %21, %22 : vector<16x1xf32>
    %24 = vector.broadcast %16 : vector<16x1xf32> to vector<16x32xf32>
    %25 = arith.subf %10, %24 : vector<16x32xf32>
    %cst_16 = arith.constant 9.99999974E-6 : f32
    %26 = vector.broadcast %cst_16 : f32 to vector<16x1xf32>
    %27 = arith.addf %23, %26 : vector<16x1xf32>
    %28 = math.rsqrt %27 : vector<16x1xf32>
    %29 = vector.broadcast %28 : vector<16x1xf32> to vector<16x32xf32>
    %30 = arith.mulf %25, %29 : vector<16x32xf32>
    %31 = vector.broadcast %11 : vector<1x32xf32> to vector<16x32xf32>
    %32 = arith.mulf %30, %31 : vector<16x32xf32>
    %33 = vector.broadcast %12 : vector<1x32xf32> to vector<16x32xf32>
    %34 = arith.addf %32, %33 : vector<16x32xf32>
    %35 = arith.truncf %34 : vector<16x32xf32> to vector<16x32xbf16>
    %c0_17 = arith.constant 0 : index
    %c0_18 = arith.constant 0 : index
    %36 = vector.load %arg15[%c0_17, %c0_18] : memref<32x32xbf16, #tpu.memory_space<vmem>>, vector<32x32xbf16>
    %cst_19 = arith.constant dense<0.000000e+00> : vector<16x32xf32>
    %37 = tpu.matmul %35, %36, %cst_19 {dimension_numbers = #tpu.dot_dimension_numbers<[1], [0], [0], [1], [0, 0, 1, 1], [], []>} : vector<16x32xbf16>, vector<32x32xbf16>, vector<16x32xf32> -> vector<16x32xf32>
    %c0_20 = arith.constant 0 : index
    %c0_21 = arith.constant 0 : index
    %38 = vector.load %arg16[%c0_20, %c0_21] : memref<1x32xf32, #tpu.memory_space<vmem>>, vector<1x32xf32>
    %39 = vector.broadcast %38 : vector<1x32xf32> to vector<16x32xf32>
    %40 = arith.addf %37, %39 : vector<16x32xf32>
    %cst_22 = arith.constant 0.000000e+00 : f32
    %41 = vector.broadcast %cst_22 : f32 to vector<16x32xf32>
    %42 = arith.maximumf %40, %41 : vector<16x32xf32>
    %c0_23 = arith.constant 0 : index
    %c0_24 = arith.constant 0 : index
    %43 = vector.load %arg17[%c0_23, %c0_24] : memref<1x32xf32, #tpu.memory_space<vmem>>, vector<1x32xf32>
    %c0_25 = arith.constant 0 : index
    %c0_26 = arith.constant 0 : index
    %44 = vector.load %arg18[%c0_25, %c0_26] : memref<1x32xf32, #tpu.memory_space<vmem>>, vector<1x32xf32>
    %cst_27 = arith.constant dense<0.000000e+00> : vector<16xf32>
    %45 = vector.multi_reduction <add>, %42, %cst_27 [1] : vector<16x32xf32> to vector<16xf32>
    %46 = vector.shape_cast %45 : vector<16xf32> to vector<16x1xf32>
    %cst_28 = arith.constant 3.200000e+01 : f32
    %47 = vector.broadcast %cst_28 : f32 to vector<16x1xf32>
    %48 = arith.divf %46, %47 : vector<16x1xf32>
    %49 = vector.broadcast %48 : vector<16x1xf32> to vector<16x32xf32>
    %50 = arith.subf %42, %49 : vector<16x32xf32>
    %51 = arith.mulf %50, %50 : vector<16x32xf32>
    %cst_29 = arith.constant dense<0.000000e+00> : vector<16xf32>
    %52 = vector.multi_reduction <add>, %51, %cst_29 [1] : vector<16x32xf32> to vector<16xf32>
    %53 = vector.shape_cast %52 : vector<16xf32> to vector<16x1xf32>
    %cst_30 = arith.constant 3.200000e+01 : f32
    %54 = vector.broadcast %cst_30 : f32 to vector<16x1xf32>
    %55 = arith.divf %53, %54 : vector<16x1xf32>
    %56 = vector.broadcast %48 : vector<16x1xf32> to vector<16x32xf32>
    %57 = arith.subf %42, %56 : vector<16x32xf32>
    %cst_31 = arith.constant 9.99999974E-6 : f32
    %58 = vector.broadcast %cst_31 : f32 to vector<16x1xf32>
    %59 = arith.addf %55, %58 : vector<16x1xf32>
    %60 = math.rsqrt %59 : vector<16x1xf32>
    %61 = vector.broadcast %60 : vector<16x1xf32> to vector<16x32xf32>
    %62 = arith.mulf %57, %61 : vector<16x32xf32>
    %63 = vector.broadcast %43 : vector<1x32xf32> to vector<16x32xf32>
    %64 = arith.mulf %62, %63 : vector<16x32xf32>
    %65 = vector.broadcast %44 : vector<1x32xf32> to vector<16x32xf32>
    %66 = arith.addf %64, %65 : vector<16x32xf32>
    %c0_32 = arith.constant 0 : index
    %c0_33 = arith.constant 0 : index
    %67 = vector.load %arg19[%c0_32, %c0_33] : memref<1x32xbf16, #tpu.memory_space<vmem>>, vector<1x32xbf16>
    %68 = arith.truncf %66 : vector<16x32xf32> to vector<16x32xbf16>
    %cst_34 = arith.constant dense<0.000000e+00> : vector<1x16xf32>
    %69 = tpu.matmul %67, %68, %cst_34 {dimension_numbers = #tpu.dot_dimension_numbers<[1], [1], [0], [0], [0, 0, 1, 0], [], []>} : vector<1x32xbf16>, vector<16x32xbf16>, vector<1x16xf32> -> vector<1x16xf32>
    %c0_35 = arith.constant 0 : index
    %c0_36 = arith.constant 0 : index
    %70 = vector.load %arg20[%c0_35, %c0_36] : memref<1x1xf32, #tpu.memory_space<vmem>>, vector<1x1xf32>
    %71 = vector.broadcast %70 : vector<1x1xf32> to vector<1x16xf32>
    %72 = arith.addf %69, %71 : vector<1x16xf32>
    %cst_37 = arith.constant 0.000000e+00 : f32
    %73 = vector.broadcast %cst_37 : f32 to vector<1x16xf32>
    %74 = arith.subf %73, %72 : vector<1x16xf32>
    %75 = math.exp %74 : vector<1x16xf32>
    %cst_38 = arith.constant 1.000000e+00 : f32
    %76 = vector.broadcast %cst_38 : f32 to vector<1x16xf32>
    %77 = arith.addf %76, %75 : vector<1x16xf32>
    %cst_39 = arith.constant 1.000000e+00 : f32
    %78 = vector.broadcast %cst_39 : f32 to vector<1x16xf32>
    %79 = arith.divf %78, %77 : vector<1x16xf32>
    %c0_40 = arith.constant 0 : index
    %c0_41 = arith.constant 0 : index
    %c0_42 = arith.constant 0 : index
    %80 = vector.load %arg21[%c0_40, %c0_41, %c0_42] : memref<1x1x16xf32, #tpu.memory_space<vmem>>, vector<1x1x16xf32>
    %81 = vector.shape_cast %80 : vector<1x1x16xf32> to vector<1x16xf32>
    %82 = vector.shape_cast %79 : vector<1x16xf32> to vector<1x1x16xf32>
    tpu.vector_store %arg21[%c0_40, %c0_41, %c0_42], %82 {strides = array<i32>} : memref<1x1x16xf32, #tpu.memory_space<vmem>>, vector<1x1x16xf32>,
    return
  }
  func.func @transform_0(%arg0: i32) -> (i32, i32) {
    %c0_i32 = arith.constant 0 : i32
    %c0_i32_0 = arith.constant 0 : i32
    return %arg0, %c0_i32 : i32, i32
  }
  func.func @transform_1(%arg0: i32) -> (i32, i32) {
    %c0_i32 = arith.constant 0 : i32
    %c0_i32_0 = arith.constant 0 : i32
    return %arg0, %c0_i32 : i32, i32
  }
  func.func @transform_2(%arg0: i32) -> (i32, i32) {
    %c0_i32 = arith.constant 0 : i32
    %c0_i32_0 = arith.constant 0 : i32
    %c0_i32_1 = arith.constant 0 : i32
    return %c0_i32, %c0_i32_0 : i32, i32
  }
  func.func @transform_3(%arg0: i32) -> (i32, i32) {
    %c0_i32 = arith.constant 0 : i32
    %c0_i32_0 = arith.constant 0 : i32
    %c0_i32_1 = arith.constant 0 : i32
    return %c0_i32, %c0_i32_0 : i32, i32
  }
  func.func @transform_4(%arg0: i32) -> (i32, i32, i32) {
    %c0_i32 = arith.constant 0 : i32
    %c0_i32_0 = arith.constant 0 : i32
    %c0_i32_1 = arith.constant 0 : i32
    %c0_i32_2 = arith.constant 0 : i32
    return %c0_i32, %c0_i32_0, %c0_i32_1 : i32, i32, i32
  }
  func.func @transform_5(%arg0: i32) -> (i32, i32, i32) {
    %c0_i32 = arith.constant 0 : i32
    %c0_i32_0 = arith.constant 0 : i32
    %c0_i32_1 = arith.constant 0 : i32
    %c0_i32_2 = arith.constant 0 : i32
    return %c0_i32, %c0_i32_0, %c0_i32_1 : i32, i32, i32
  }
  func.func @transform_6(%arg0: i32) -> (i32, i32, i32) {
    %c0_i32 = arith.constant 0 : i32
    %c0_i32_0 = arith.constant 0 : i32
    %c0_i32_1 = arith.constant 0 : i32
    %c0_i32_2 = arith.constant 0 : i32
    return %c0_i32, %c0_i32_0, %c0_i32_1 : i32, i32, i32
  }
  func.func @transform_7(%arg0: i32) -> (i32, i32, i32) {
    %c0_i32 = arith.constant 0 : i32
    %c0_i32_0 = arith.constant 0 : i32
    %c0_i32_1 = arith.constant 0 : i32
    %c0_i32_2 = arith.constant 0 : i32
    return %c0_i32, %c0_i32_0, %c0_i32_1 : i32, i32, i32
  }
  func.func @transform_8(%arg0: i32) -> (i32, i32, i32) {
    %c0_i32 = arith.constant 0 : i32
    %c0_i32_0 = arith.constant 0 : i32
    %c0_i32_1 = arith.constant 0 : i32
    %c0_i32_2 = arith.constant 0 : i32
    return %c0_i32, %c0_i32_0, %c0_i32_1 : i32, i32, i32
  }
  func.func @transform_9(%arg0: i32) -> (i32, i32, i32) {
    %c0_i32 = arith.constant 0 : i32
    %c0_i32_0 = arith.constant 0 : i32
    %c0_i32_1 = arith.constant 0 : i32
    %c0_i32_2 = arith.constant 0 : i32
    return %c0_i32, %c0_i32_0, %c0_i32_1 : i32, i32, i32
  }
  func.func @transform_10(%arg0: i32) -> (i32, i32, i32) {
    %c0_i32 = arith.constant 0 : i32
    %c0_i32_0 = arith.constant 0 : i32
    %c0_i32_1 = arith.constant 0 : i32
    %c0_i32_2 = arith.constant 0 : i32
    return %c0_i32, %c0_i32_0, %c0_i32_1 : i32, i32, i32
  }
  func.func @transform_11(%arg0: i32) -> (i32, i32, i32) {
    %c0_i32 = arith.constant 0 : i32
    %c0_i32_0 = arith.constant 0 : i32
    %c0_i32_1 = arith.constant 0 : i32
    %c0_i32_2 = arith.constant 0 : i32
    return %c0_i32, %c0_i32_0, %c0_i32_1 : i32, i32, i32
  }
  func.func @transform_12(%arg0: i32) -> (i32, i32) {
    %c0_i32 = arith.constant 0 : i32
    %c0_i32_0 = arith.constant 0 : i32
    %c0_i32_1 = arith.constant 0 : i32
    return %c0_i32, %c0_i32_0 : i32, i32
  }
  func.func @transform_13(%arg0: i32) -> (i32, i32) {
    %c0_i32 = arith.constant 0 : i32
    %c0_i32_0 = arith.constant 0 : i32
    %c0_i32_1 = arith.constant 0 : i32
    return %c0_i32, %c0_i32_0 : i32, i32
  }
  func.func @transform_14(%arg0: i32) -> (i32, i32) {
    %c0_i32 = arith.constant 0 : i32
    %c0_i32_0 = arith.constant 0 : i32
    %c0_i32_1 = arith.constant 0 : i32
    return %c0_i32, %c0_i32_0 : i32, i32
  }
  func.func @transform_15(%arg0: i32) -> (i32, i32) {
    %c0_i32 = arith.constant 0 : i32
    %c0_i32_0 = arith.constant 0 : i32
    %c0_i32_1 = arith.constant 0 : i32
    return %c0_i32, %c0_i32_0 : i32, i32
  }
  func.func @transform_16(%arg0: i32) -> (i32, i32) {
    %c0_i32 = arith.constant 0 : i32
    %c0_i32_0 = arith.constant 0 : i32
    %c0_i32_1 = arith.constant 0 : i32
    return %c0_i32, %c0_i32_0 : i32, i32
  }
  func.func @transform_17(%arg0: i32) -> (i32, i32) {
    %c0_i32 = arith.constant 0 : i32
    %c0_i32_0 = arith.constant 0 : i32
    %c0_i32_1 = arith.constant 0 : i32
    return %c0_i32, %c0_i32_0 : i32, i32
  }
  func.func @transform_18(%arg0: i32) -> (i32, i32) {
    %c0_i32 = arith.constant 0 : i32
    %c0_i32_0 = arith.constant 0 : i32
    %c0_i32_1 = arith.constant 0 : i32
    return %c0_i32, %c0_i32_0 : i32, i32
  }
  func.func @transform_19(%arg0: i32) -> (i32, i32) {
    %c0_i32 = arith.constant 0 : i32
    %c0_i32_0 = arith.constant 0 : i32
    %c0_i32_1 = arith.constant 0 : i32
    return %c0_i32, %c0_i32_0 : i32, i32
  }
  func.func @transform_20(%arg0: i32) -> (i32, i32, i32) {
    %c0_i32 = arith.constant 0 : i32
    %c0_i32_0 = arith.constant 0 : i32
    %c0_i32_1 = arith.constant 0 : i32
    return %arg0, %c0_i32, %c0_i32_0 : i32, i32, i32
  }
}

</mosaic_0001>

<llo_original>
// kernel: tpu_custom_call.1
$region0: #{tpu_custom_call.1}
  #allocation0 [shape = 'u32[]', space=smem, size = 0x4, offset = 0x4, fixed_abs, tag = 'smem constant byte address 0x4 - core index']
  #allocation1 [shape = 'u32[72,128]{1,0:T(1,128)}', space=vmem, size = 0x9000, scoped, tag = 'internal scratch']
  #allocation2 [shape = 'f32[1,1]{1,0:T(1,128)S(1)}', space=vmem, size = 0x200, scoped, tag = 'scoped memory for tpu_custom_call.1']
  %s0 = inlined_call_operand.vmem [shape: f32[32,16], index: 0, kind: input, shape index: {}]
  %s1 = inlined_call_operand.vmem [shape: f32[32,32], index: 1, kind: input, shape index: {}]
  %s2 = inlined_call_operand.hbm [shape: bf16[16,32], index: 2, kind: input, shape index: {}]
  %s3 = inlined_call_operand.hbm [shape: f32[1,32], index: 3, kind: input, shape index: {}]
  %s4 = inlined_call_operand.hbm [shape: bf16[2,32,96], index: 4, kind: input, shape index: {}]
  %s5 = inlined_call_operand.vmem [shape: f32[2,1,96], index: 5, kind: input, shape index: {}]
  %s6 = inlined_call_operand.hbm [shape: bf16[2,32,32], index: 6, kind: input, shape index: {}]
  %s7 = inlined_call_operand.vmem [shape: f32[2,1,32], index: 7, kind: input, shape index: {}]
  %s8 = inlined_call_operand.hbm [shape: bf16[2,32,32], index: 8, kind: input, shape index: {}]
  %s9 = inlined_call_operand.vmem [shape: f32[2,1,32], index: 9, kind: input, shape index: {}]
  %s10 = inlined_call_operand.vmem [shape: f32[2,1,32], index: 10, kind: input, shape index: {}]
  %s11 = inlined_call_operand.vmem [shape: f32[2,1,32], index: 11, kind: input, shape index: {}]
  %s12 = inlined_call_operand.vmem [shape: f32[1,32], index: 12, kind: input, shape index: {}]
  %s13 = inlined_call_operand.vmem [shape: f32[1,32], index: 13, kind: input, shape index: {}]
  %s14 = inlined_call_operand.vmem [shape: bf16[32,32], index: 14, kind: input, shape index: {}]
  %s15 = inlined_call_operand.vmem [shape: f32[1,32], index: 15, kind: input, shape index: {}]
  %s16 = inlined_call_operand.vmem [shape: f32[1,32], index: 16, kind: input, shape index: {}]
  %s17 = inlined_call_operand.vmem [shape: f32[1,32], index: 17, kind: input, shape index: {}]
  %s18 = inlined_call_operand.vmem [shape: bf16[1,32], index: 18, kind: input, shape index: {}]
  %s19 = inlined_call_operand.<no memory space> [shape: f32[1,1], index: 19, kind: input, shape index: {}]
  %s20 = inlined_call_operand.hbm [shape: f32[2,1,16], index: 20, kind: output, shape index: {}]
  %s21 = sld [smem:[#allocation0]]
  $region140: #{tpu_custom_call.1} parent=0
    _
  %s23 = ssub.s32 1, %s21
  %s24 = scalar_select 0, %s23, %s21
  %v25 = vstv %s19
  %26 = vst [vmem:[#allocation2] sm:$0x1] %v25
  $region1: #{tpu_custom_call.1} parent=0
    #allocation3 [shape = 'u8[4096]{0}', space=vmem, size = 0x1000, scoped, tag = 'input window, operand 2, single buffered']
    #allocation4 [shape = 's32[2]{0}', space=sflag, size = 0x8, scoped, tag = 'scoped memory for tpu_custom_call.1']
    #allocation5 [shape = 's32[2]{0}', space=sflag, size = 0x8, scoped, tag = 'scoped memory for tpu_custom_call.1']
    #allocation6 [shape = 'u8[512]{0}', space=vmem, size = 0x400, scoped, tag = 'input window, operand 3, single buffered']
    #allocation7 [shape = 's32[1]{0}', space=sflag, size = 0x4, scoped, tag = 'scoped memory for tpu_custom_call.1']
    #allocation8 [shape = 'u8[16384]{0}', space=vmem, size = 0x4000, scoped, tag = 'input window, operand 4, single buffered']
    #allocation9 [shape = 'u8[16384]{0}', space=vmem, size = 0x4000, scoped, tag = 'input window, operand 6, single buffered']
    #allocation10 [shape = 's32[1]{0}', space=sflag, size = 0x4, scoped, tag = 'scoped memory for tpu_custom_call.1']
    #allocation11 [shape = 'u8[16384]{0}', space=vmem, size = 0x4000, scoped, tag = 'input window, operand 8, single buffered']
    #allocation12 [shape = 'u8[1024]{0}', space=vmem, size = 0x400, scoped, tag = 'output window, operand 0']
    %27 = vsyncpa [#allocation4], 0
    %28 = vsyncpa [#allocation7], 0
    %29 = vsyncpa [#allocation10], 0
    %30 = vsyncpa [#allocation5], 0
    %s31 = scalar_lea.sflag [#allocation5], 1
    %32 = vsyncpa %s31, 0
    loop: start=0, step=1, limit=4
    $region2: #{tpu_custom_call.1} parent=1 // loop_pre_header
      _
    $region3: #{tpu_custom_call.1} parent=1 // loop_header
      %s34 = sphi 0, %s38
      %p35 = scmp.ge.s32.totalorder %s34, 4
      %s44 = sphi 0, %s46
      %s47 = sphi 0, %s44
      %s48 = sphi 0, %s47
      %s64 = sphi 0, %s48
      %s70 = sphi 0, %s72
      %s73 = sphi 0, %s70
      %s74 = sphi 0, %s73
      %s90 = sphi 0, %s74
      %s94 = sphi 0, %s94
      %s96 = sphi 0, %s94
      %s97 = sphi 0, %s96
      %s111 = sphi 0, %s97
      %s115 = sphi 0, %s115
      %s117 = sphi 0, %s115
      %s118 = sphi 0, %s117
      %s132 = sphi 0, %s118
      %s136 = sphi 0, %s136
      %s138 = sphi 0, %s136
      %s139 = sphi 0, %s138
      %s153 = sphi 0, %s139
      %s157 = sphi 0, %s157
      %s159 = sphi 0, %s157
      %s160 = sphi 0, %s159
      %s174 = sphi 0, %s160
      %s178 = sphi 0, %s178
      %s180 = sphi 0, %s178
      %s181 = sphi 0, %s180
      %s195 = sphi 0, %s181
      %s199 = sphi 0, %s199
      %s201 = sphi 0, %s199
      %s202 = sphi 0, %s201
      %s216 = sphi 0, %s202
      %s220 = sphi 0, %s220
      %s222 = sphi 0, %s220
      %s223 = sphi 0, %s222
      %s237 = sphi 0, %s223
      %s241 = sphi 0, %s241
      %s243 = sphi 0, %s241
      %s244 = sphi 0, %s243
      %s258 = sphi 0, %s244
      %s262 = sphi 0, %s262
      %s264 = sphi 0, %s262
      %s265 = sphi 0, %s264
      %s279 = sphi 0, %s265
      %s283 = sphi 0, %s283
      %s285 = sphi 0, %s283
      %s286 = sphi 0, %s285
      %s300 = sphi 0, %s286
      %s304 = sphi 0, %s304
      %s306 = sphi 0, %s304
      %s307 = sphi 0, %s306
      %s321 = sphi 0, %s307
      %s325 = sphi 0, %s325
      %s327 = sphi 0, %s325
      %s328 = sphi 0, %s327
      %s342 = sphi 0, %s328
      %s346 = sphi 0, %s346
      %s348 = sphi 0, %s346
      %s349 = sphi 0, %s348
      %s363 = sphi 0, %s349
      %s367 = sphi 0, %s367
      %s369 = sphi 0, %s367
      %s370 = sphi 0, %s369
      %s384 = sphi 0, %s370
      %s388 = sphi 0, %s388
      %s390 = sphi 0, %s388
      %s391 = sphi 0, %s390
      %s405 = sphi 0, %s391
      %s409 = sphi 0, %s409
      %s411 = sphi 0, %s409
      %s412 = sphi 0, %s411
      %s426 = sphi 0, %s412
      %s430 = sphi 0, %s430
      %s432 = sphi 0, %s430
      %s433 = sphi 0, %s432
      %s447 = sphi 0, %s433
      %s451 = sphi 0, %s451
      %s453 = sphi 0, %s451
      %s454 = sphi 0, %s453
      %s468 = sphi 0, %s454
      %s474 = sphi 0, %s476
      %s477 = sphi 0, %s474
      %s478 = sphi 0, %s477
      %s494 = sphi 0, %s478
    $region4: #{tpu_custom_call.1} parent=1 // loop_header_branch
      %37 = sbr.rel (%p35) target = $region8
    $region5: #{tpu_custom_call.1} parent=1 // loop_body
      %s39 = ssub.s32 %s34, 1
      %s40 = ssub.s32 %s34, 2
      %s41 = sadd.s32 %s34, 1
      %s42 = ssub.s32 %s34, %s41
      %p43 = scmp.eq.s32.totalorder %s42, 0
      %s45 = sadd.s32 %s44, 1
      %s46 = scalar_select %p43, %s44, %s45
      %p49 = pneg %p43
      %p50 = scmp.eq.s32.totalorder %s34, 1
      %p51 = por %p49, %p50
      %p52 = scmp.ne.s32.totalorder %s44, %s47
      %p53 = scmp.eq.s32.totalorder %s34, 0
      %p54 = por %p52, %p53
      %p55 = scmp.ne.s32.totalorder %s44, %s47
      %p56 = scmp.eq.s32.totalorder %s39, 1
      %p57 = por %p55, %p56
      %p58 = scmp.ne.s32.totalorder %s47, %s48
      %p59 = scmp.eq.s32.totalorder %s39, 0
      %p60 = por %p58, %p59
      %p61 = scmp.ne.s32.totalorder %s47, %s48
      %p62 = scmp.eq.s32.totalorder %s40, 1
      %p63 = por %p61, %p62
      %p65 = scmp.ne.s32.totalorder %s48, %s64
      %p66 = scmp.eq.s32.totalorder %s40, 0
      %p67 = por %p65, %p66
      %s68 = ssub.s32 %s34, %s41
      %p69 = scmp.eq.s32.totalorder %s68, 0
      %s71 = sadd.s32 %s70, 1
      %s72 = scalar_select %p69, %s70, %s71
      %p75 = pneg %p69
      %p76 = scmp.eq.s32.totalorder %s34, 1
      %p77 = por %p75, %p76
      %p78 = scmp.ne.s32.totalorder %s70, %s73
      %p79 = scmp.eq.s32.totalorder %s34, 0
      %p80 = por %p78, %p79
      %p81 = scmp.ne.s32.totalorder %s70, %s73
      %p82 = scmp.eq.s32.totalorder %s39, 1
      %p83 = por %p81, %p82
      %p84 = scmp.ne.s32.totalorder %s73, %s74
      %p85 = scmp.eq.s32.totalorder %s39, 0
      %p86 = por %p84, %p85
      %p87 = scmp.ne.s32.totalorder %s73, %s74
      %p88 = scmp.eq.s32.totalorder %s40, 1
      %p89 = por %p87, %p88
      %p91 = scmp.ne.s32.totalorder %s74, %s90
      %p92 = scmp.eq.s32.totalorder %s40, 0
      %p93 = por %p91, %p92
      %s95 = sadd.s32 %s94, 1
      %p98 = scmp.eq.s32.totalorder %s34, 1
      %p99 = scmp.ne.s32.totalorder %s94, %s96
      %p100 = scmp.eq.s32.totalorder %s34, 0
      %p101 = por %p99, %p100
      %p102 = scmp.ne.s32.totalorder %s94, %s96
      %p103 = scmp.eq.s32.totalorder %s39, 1
      %p104 = por %p102, %p103
      %p105 = scmp.ne.s32.totalorder %s96, %s97
      %p106 = scmp.eq.s32.totalorder %s39, 0
      %p107 = por %p105, %p106
      %p108 = scmp.ne.s32.totalorder %s96, %s97
      %p109 = scmp.eq.s32.totalorder %s40, 1
      %p110 = por %p108, %p109
      %p112 = scmp.ne.s32.totalorder %s97, %s111
      %p113 = scmp.eq.s32.totalorder %s40, 0
      %p114 = por %p112, %p113
      %s116 = sadd.s32 %s115, 1
      %p119 = scmp.eq.s32.totalorder %s34, 1
      %p120 = scmp.ne.s32.totalorder %s115, %s117
      %p121 = scmp.eq.s32.totalorder %s34, 0
      %p122 = por %p120, %p121
      %p123 = scmp.ne.s32.totalorder %s115, %s117
      %p124 = scmp.eq.s32.totalorder %s39, 1
      %p125 = por %p123, %p124
      %p126 = scmp.ne.s32.totalorder %s117, %s118
      %p127 = scmp.eq.s32.totalorder %s39, 0
      %p128 = por %p126, %p127
      %p129 = scmp.ne.s32.totalorder %s117, %s118
      %p130 = scmp.eq.s32.totalorder %s40, 1
      %p131 = por %p129, %p130
      %p133 = scmp.ne.s32.totalorder %s118, %s132
      %p134 = scmp.eq.s32.totalorder %s40, 0
      %p135 = por %p133, %p134
      %s137 = sadd.s32 %s136, 1
      %p140 = scmp.eq.s32.totalorder %s34, 1
      %p141 = scmp.ne.s32.totalorder %s136, %s138
      %p142 = scmp.eq.s32.totalorder %s34, 0
      %p143 = por %p141, %p142
      %p144 = scmp.ne.s32.totalorder %s136, %s138
      %p145 = scmp.eq.s32.totalorder %s39, 1
      %p146 = por %p144, %p145
      %p147 = scmp.ne.s32.totalorder %s138, %s139
      %p148 = scmp.eq.s32.totalorder %s39, 0
      %p149 = por %p147, %p148
      %p150 = scmp.ne.s32.totalorder %s138, %s139
      %p151 = scmp.eq.s32.totalorder %s40, 1
      %p152 = por %p150, %p151
      %p154 = scmp.ne.s32.totalorder %s139, %s153
      %p155 = scmp.eq.s32.totalorder %s40, 0
      %p156 = por %p154, %p155
      %s158 = sadd.s32 %s157, 1
      %p161 = scmp.eq.s32.totalorder %s34, 1
      %p162 = scmp.ne.s32.totalorder %s157, %s159
      %p163 = scmp.eq.s32.totalorder %s34, 0
      %p164 = por %p162, %p163
      %p165 = scmp.ne.s32.totalorder %s157, %s159
      %p166 = scmp.eq.s32.totalorder %s39, 1
      %p167 = por %p165, %p166
      %p168 = scmp.ne.s32.totalorder %s159, %s160
      %p169 = scmp.eq.s32.totalorder %s39, 0
      %p170 = por %p168, %p169
      %p171 = scmp.ne.s32.totalorder %s159, %s160
      %p172 = scmp.eq.s32.totalorder %s40, 1
      %p173 = por %p171, %p172
      %p175 = scmp.ne.s32.totalorder %s160, %s174
      %p176 = scmp.eq.s32.totalorder %s40, 0
      %p177 = por %p175, %p176
      %s179 = sadd.s32 %s178, 1
      %p182 = scmp.eq.s32.totalorder %s34, 1
      %p183 = scmp.ne.s32.totalorder %s178, %s180
      %p184 = scmp.eq.s32.totalorder %s34, 0
      %p185 = por %p183, %p184
      %p186 = scmp.ne.s32.totalorder %s178, %s180
      %p187 = scmp.eq.s32.totalorder %s39, 1
      %p188 = por %p186, %p187
      %p189 = scmp.ne.s32.totalorder %s180, %s181
      %p190 = scmp.eq.s32.totalorder %s39, 0
      %p191 = por %p189, %p190
      %p192 = scmp.ne.s32.totalorder %s180, %s181
      %p193 = scmp.eq.s32.totalorder %s40, 1
      %p194 = por %p192, %p193
      %p196 = scmp.ne.s32.totalorder %s181, %s195
      %p197 = scmp.eq.s32.totalorder %s40, 0
      %p198 = por %p196, %p197
      %s200 = sadd.s32 %s199, 1
      %p203 = scmp.eq.s32.totalorder %s34, 1
      %p204 = scmp.ne.s32.totalorder %s199, %s201
      %p205 = scmp.eq.s32.totalorder %s34, 0
      %p206 = por %p204, %p205
      %p207 = scmp.ne.s32.totalorder %s199, %s201
      %p208 = scmp.eq.s32.totalorder %s39, 1
      %p209 = por %p207, %p208
      %p210 = scmp.ne.s32.totalorder %s201, %s202
      %p211 = scmp.eq.s32.totalorder %s39, 0
      %p212 = por %p210, %p211
      %p213 = scmp.ne.s32.totalorder %s201, %s202
      %p214 = scmp.eq.s32.totalorder %s40, 1
      %p215 = por %p213, %p214
      %p217 = scmp.ne.s32.totalorder %s202, %s216
      %p218 = scmp.eq.s32.totalorder %s40, 0
      %p219 = por %p217, %p218
      %s221 = sadd.s32 %s220, 1
      %p224 = scmp.eq.s32.totalorder %s34, 1
      %p225 = scmp.ne.s32.totalorder %s220, %s222
      %p226 = scmp.eq.s32.totalorder %s34, 0
      %p227 = por %p225, %p226
      %p228 = scmp.ne.s32.totalorder %s220, %s222
      %p229 = scmp.eq.s32.totalorder %s39, 1
      %p230 = por %p228, %p229
      %p231 = scmp.ne.s32.totalorder %s222, %s223
      %p232 = scmp.eq.s32.totalorder %s39, 0
      %p233 = por %p231, %p232
      %p234 = scmp.ne.s32.totalorder %s222, %s223
      %p235 = scmp.eq.s32.totalorder %s40, 1
      %p236 = por %p234, %p235
      %p238 = scmp.ne.s32.totalorder %s223, %s237
      %p239 = scmp.eq.s32.totalorder %s40, 0
      %p240 = por %p238, %p239
      %s242 = sadd.s32 %s241, 1
      %p245 = scmp.eq.s32.totalorder %s34, 1
      %p246 = scmp.ne.s32.totalorder %s241, %s243
      %p247 = scmp.eq.s32.totalorder %s34, 0
      %p248 = por %p246, %p247
      %p249 = scmp.ne.s32.totalorder %s241, %s243
      %p250 = scmp.eq.s32.totalorder %s39, 1
      %p251 = por %p249, %p250
      %p252 = scmp.ne.s32.totalorder %s243, %s244
      %p253 = scmp.eq.s32.totalorder %s39, 0
      %p254 = por %p252, %p253
      %p255 = scmp.ne.s32.totalorder %s243, %s244
      %p256 = scmp.eq.s32.totalorder %s40, 1
      %p257 = por %p255, %p256
      %p259 = scmp.ne.s32.totalorder %s244, %s258
      %p260 = scmp.eq.s32.totalorder %s40, 0
      %p261 = por %p259, %p260
      %s263 = sadd.s32 %s262, 1
      %p266 = scmp.eq.s32.totalorder %s34, 1
      %p267 = scmp.ne.s32.totalorder %s262, %s264
      %p268 = scmp.eq.s32.totalorder %s34, 0
      %p269 = por %p267, %p268
      %p270 = scmp.ne.s32.totalorder %s262, %s264
      %p271 = scmp.eq.s32.totalorder %s39, 1
      %p272 = por %p270, %p271
      %p273 = scmp.ne.s32.totalorder %s264, %s265
      %p274 = scmp.eq.s32.totalorder %s39, 0
      %p275 = por %p273, %p274
      %p276 = scmp.ne.s32.totalorder %s264, %s265
      %p277 = scmp.eq.s32.totalorder %s40, 1
      %p278 = por %p276, %p277
      %p280 = scmp.ne.s32.totalorder %s265, %s279
      %p281 = scmp.eq.s32.totalorder %s40, 0
      %p282 = por %p280, %p281
      %s284 = sadd.s32 %s283, 1
      %p287 = scmp.eq.s32.totalorder %s34, 1
      %p288 = scmp.ne.s32.totalorder %s283, %s285
      %p289 = scmp.eq.s32.totalorder %s34, 0
      %p290 = por %p288, %p289
      %p291 = scmp.ne.s32.totalorder %s283, %s285
      %p292 = scmp.eq.s32.totalorder %s39, 1
      %p293 = por %p291, %p292
      %p294 = scmp.ne.s32.totalorder %s285, %s286
      %p295 = scmp.eq.s32.totalorder %s39, 0
      %p296 = por %p294, %p295
      %p297 = scmp.ne.s32.totalorder %s285, %s286
      %p298 = scmp.eq.s32.totalorder %s40, 1
      %p299 = por %p297, %p298
      %p301 = scmp.ne.s32.totalorder %s286, %s300
      %p302 = scmp.eq.s32.totalorder %s40, 0
      %p303 = por %p301, %p302
      %s305 = sadd.s32 %s304, 1
      %p308 = scmp.eq.s32.totalorder %s34, 1
      %p309 = scmp.ne.s32.totalorder %s304, %s306
      %p310 = scmp.eq.s32.totalorder %s34, 0
      %p311 = por %p309, %p310
      %p312 = scmp.ne.s32.totalorder %s304, %s306
      %p313 = scmp.eq.s32.totalorder %s39, 1
      %p314 = por %p312, %p313
      %p315 = scmp.ne.s32.totalorder %s306, %s307
      %p316 = scmp.eq.s32.totalorder %s39, 0
      %p317 = por %p315, %p316
      %p318 = scmp.ne.s32.totalorder %s306, %s307
      %p319 = scmp.eq.s32.totalorder %s40, 1
      %p320 = por %p318, %p319
      %p322 = scmp.ne.s32.totalorder %s307, %s321
      %p323 = scmp.eq.s32.totalorder %s40, 0
      %p324 = por %p322, %p323
      %s326 = sadd.s32 %s325, 1
      %p329 = scmp.eq.s32.totalorder %s34, 1
      %p330 = scmp.ne.s32.totalorder %s325, %s327
      %p331 = scmp.eq.s32.totalorder %s34, 0
      %p332 = por %p330, %p331
      %p333 = scmp.ne.s32.totalorder %s325, %s327
      %p334 = scmp.eq.s32.totalorder %s39, 1
      %p335 = por %p333, %p334
      %p336 = scmp.ne.s32.totalorder %s327, %s328
      %p337 = scmp.eq.s32.totalorder %s39, 0
      %p338 = por %p336, %p337
      %p339 = scmp.ne.s32.totalorder %s327, %s328
      %p340 = scmp.eq.s32.totalorder %s40, 1
      %p341 = por %p339, %p340
      %p343 = scmp.ne.s32.totalorder %s328, %s342
      %p344 = scmp.eq.s32.totalorder %s40, 0
      %p345 = por %p343, %p344
      %s347 = sadd.s32 %s346, 1
      %p350 = scmp.eq.s32.totalorder %s34, 1
      %p351 = scmp.ne.s32.totalorder %s346, %s348
      %p352 = scmp.eq.s32.totalorder %s34, 0
      %p353 = por %p351, %p352
      %p354 = scmp.ne.s32.totalorder %s346, %s348
      %p355 = scmp.eq.s32.totalorder %s39, 1
      %p356 = por %p354, %p355
      %p357 = scmp.ne.s32.totalorder %s348, %s349
      %p358 = scmp.eq.s32.totalorder %s39, 0
      %p359 = por %p357, %p358
      %p360 = scmp.ne.s32.totalorder %s348, %s349
      %p361 = scmp.eq.s32.totalorder %s40, 1
      %p362 = por %p360, %p361
      %p364 = scmp.ne.s32.totalorder %s349, %s363
      %p365 = scmp.eq.s32.totalorder %s40, 0
      %p366 = por %p364, %p365
      %s368 = sadd.s32 %s367, 1
      %p371 = scmp.eq.s32.totalorder %s34, 1
      %p372 = scmp.ne.s32.totalorder %s367, %s369
      %p373 = scmp.eq.s32.totalorder %s34, 0
      %p374 = por %p372, %p373
      %p375 = scmp.ne.s32.totalorder %s367, %s369
      %p376 = scmp.eq.s32.totalorder %s39, 1
      %p377 = por %p375, %p376
      %p378 = scmp.ne.s32.totalorder %s369, %s370
      %p379 = scmp.eq.s32.totalorder %s39, 0
      %p380 = por %p378, %p379
      %p381 = scmp.ne.s32.totalorder %s369, %s370
      %p382 = scmp.eq.s32.totalorder %s40, 1
      %p383 = por %p381, %p382
      %p385 = scmp.ne.s32.totalorder %s370, %s384
      %p386 = scmp.eq.s32.totalorder %s40, 0
      %p387 = por %p385, %p386
      %s389 = sadd.s32 %s388, 1
      %p392 = scmp.eq.s32.totalorder %s34, 1
      %p393 = scmp.ne.s32.totalorder %s388, %s390
      %p394 = scmp.eq.s32.totalorder %s34, 0
      %p395 = por %p393, %p394
      %p396 = scmp.ne.s32.totalorder %s388, %s390
      %p397 = scmp.eq.s32.totalorder %s39, 1
      %p398 = por %p396, %p397
      %p399 = scmp.ne.s32.totalorder %s390, %s391
      %p400 = scmp.eq.s32.totalorder %s39, 0
      %p401 = por %p399, %p400
      %p402 = scmp.ne.s32.totalorder %s390, %s391
      %p403 = scmp.eq.s32.totalorder %s40, 1
      %p404 = por %p402, %p403
      %p406 = scmp.ne.s32.totalorder %s391, %s405
      %p407 = scmp.eq.s32.totalorder %s40, 0
      %p408 = por %p406, %p407
      %s410 = sadd.s32 %s409, 1
      %p413 = scmp.eq.s32.totalorder %s34, 1
      %p414 = scmp.ne.s32.totalorder %s409, %s411
      %p415 = scmp.eq.s32.totalorder %s34, 0
      %p416 = por %p414, %p415
      %p417 = scmp.ne.s32.totalorder %s409, %s411
      %p418 = scmp.eq.s32.totalorder %s39, 1
      %p419 = por %p417, %p418
      %p420 = scmp.ne.s32.totalorder %s411, %s412
      %p421 = scmp.eq.s32.totalorder %s39, 0
      %p422 = por %p420, %p421
      %p423 = scmp.ne.s32.totalorder %s411, %s412
      %p424 = scmp.eq.s32.totalorder %s40, 1
      %p425 = por %p423, %p424
      %p427 = scmp.ne.s32.totalorder %s412, %s426
      %p428 = scmp.eq.s32.totalorder %s40, 0
      %p429 = por %p427, %p428
      %s431 = sadd.s32 %s430, 1
      %p434 = scmp.eq.s32.totalorder %s34, 1
      %p435 = scmp.ne.s32.totalorder %s430, %s432
      %p436 = scmp.eq.s32.totalorder %s34, 0
      %p437 = por %p435, %p436
      %p438 = scmp.ne.s32.totalorder %s430, %s432
      %p439 = scmp.eq.s32.totalorder %s39, 1
      %p440 = por %p438, %p439
      %p441 = scmp.ne.s32.totalorder %s432, %s433
      %p442 = scmp.eq.s32.totalorder %s39, 0
      %p443 = por %p441, %p442
      %p444 = scmp.ne.s32.totalorder %s432, %s433
      %p445 = scmp.eq.s32.totalorder %s40, 1
      %p446 = por %p444, %p445
      %p448 = scmp.ne.s32.totalorder %s433, %s447
      %p449 = scmp.eq.s32.totalorder %s40, 0
      %p450 = por %p448, %p449
      %s452 = sadd.s32 %s451, 1
      %p455 = scmp.eq.s32.totalorder %s34, 1
      %p456 = scmp.ne.s32.totalorder %s451, %s453
      %p457 = scmp.eq.s32.totalorder %s34, 0
      %p458 = por %p456, %p457
      %p459 = scmp.ne.s32.totalorder %s451, %s453
      %p460 = scmp.eq.s32.totalorder %s39, 1
      %p461 = por %p459, %p460
      %p462 = scmp.ne.s32.totalorder %s453, %s454
      %p463 = scmp.eq.s32.totalorder %s39, 0
      %p464 = por %p462, %p463
      %p465 = scmp.ne.s32.totalorder %s453, %s454
      %p466 = scmp.eq.s32.totalorder %s40, 1
      %p467 = por %p465, %p466
      %p469 = scmp.ne.s32.totalorder %s454, %s468
      %p470 = scmp.eq.s32.totalorder %s40, 0
      %p471 = por %p469, %p470
      %s472 = ssub.s32 %s34, %s41
      %p473 = scmp.eq.s32.totalorder %s472, 0
      %s475 = sadd.s32 %s474, 1
      %s476 = scalar_select %p473, %s474, %s475
      %p479 = pneg %p473
      %p480 = scmp.eq.s32.totalorder %s34, 1
      %p481 = por %p479, %p480
      %p482 = scmp.ne.s32.totalorder %s474, %s477
      %p483 = scmp.eq.s32.totalorder %s34, 0
      %p484 = por %p482, %p483
      %p485 = scmp.ne.s32.totalorder %s474, %s477
      %p486 = scmp.eq.s32.totalorder %s39, 1
      %p487 = por %p485, %p486
      %p488 = scmp.ne.s32.totalorder %s477, %s478
      %p489 = scmp.eq.s32.totalorder %s39, 0
      %p490 = por %p488, %p489
      %p491 = scmp.ne.s32.totalorder %s477, %s478
      %p492 = scmp.eq.s32.totalorder %s40, 1
      %p493 = por %p491, %p492
      %p495 = scmp.ne.s32.totalorder %s478, %s494
      %p496 = scmp.eq.s32.totalorder %s40, 0
      %p497 = por %p495, %p496
      %p498 = scmp.le.s32.totalorder 1, %s34
      %p499 = scmp.lt.s32.totalorder %s34, 3
      %p500 = pnand %p498, %p499
      %p501 = pneg %p500
      // Predicated region
      $region9: #{tpu_custom_call.1} parent=5 // pred_check
        _
      $region10: #{tpu_custom_call.1} parent=5 // pred_check_branch
        %503 = sbr.rel (%p500) target = $region12
      $region11: #{tpu_custom_call.1} parent=5 // pred_region
        %s504 = ssub.s32 %s34, 1
        // Predicated region
        $region13: #{tpu_custom_call.1} parent=11 // pred_check
          %p505 = pneg %p107
        $region14: #{tpu_custom_call.1} parent=11 // pred_check_branch
          %507 = sbr.rel (%p505) target = $region16
        $region15: #{tpu_custom_call.1} parent=11 // pred_region
          %509 = vsyncadd [#allocation4], 0
          %s510 = sshll.u32 %s2, 4
          %s511 = int_to_ptr.hbm [resolvable:$true] %s510
          %s512 = sshll.u32 [#allocation3], 4
          %s513 = int_to_ptr.vmem [resolvable:$true] %s512
          %518 = dma.hbm_to_vmem [thread:$0]  %s511, 128, %s513, [#allocation4], 64, 64, 4
        $region16: #{tpu_custom_call.1} parent=11 // pred_fallthru
          _
        // Predicated region
        $region17: #{tpu_custom_call.1} parent=11 // pred_check
          %p519 = pneg %p128
        $region18: #{tpu_custom_call.1} parent=11 // pred_check_branch
          %521 = sbr.rel (%p519) target = $region20
        $region19: #{tpu_custom_call.1} parent=11 // pred_region
          %523 = vsyncadd [#allocation7], 0
          %s525 = sshll.u32 %s3, 4
          %s526 = int_to_ptr.hbm [resolvable:$true] %s525
          %s527 = sshll.u32 [#allocation6], 4
          %s528 = int_to_ptr.vmem [resolvable:$true] %s527
          %530 = dma.hbm_to_vmem [thread:$0]  %s526, 16, %s528, [#allocation7]
        $region20: #{tpu_custom_call.1} parent=11 // pred_fallthru
          _
        // Predicated region
        $region21: #{tpu_custom_call.1} parent=11 // pred_check
          %p531 = pneg %p149
        $region22: #{tpu_custom_call.1} parent=11 // pred_check_branch
          %533 = sbr.rel (%p531) target = $region24
        $region23: #{tpu_custom_call.1} parent=11 // pred_region
          %535 = vsyncadd [#allocation7], 0
          %s536 = sshll.u32 %s4, 4
          %s537 = int_to_ptr.hbm [resolvable:$true] %s536
          %s538 = sshll.u32 [#allocation8], 4
          %s539 = int_to_ptr.vmem [resolvable:$true] %s538
          %544 = dma.hbm_to_vmem [thread:$0]  %s537, 512, %s539, [#allocation7], 64, 64, 4
        $region24: #{tpu_custom_call.1} parent=11 // pred_fallthru
          _
        // Predicated region
        $region25: #{tpu_custom_call.1} parent=11 // pred_check
          %p545 = pneg %p170
        $region26: #{tpu_custom_call.1} parent=11 // pred_check_branch
          %547 = sbr.rel (%p545) target = $region28
        $region27: #{tpu_custom_call.1} parent=11 // pred_region
          _
        $region28: #{tpu_custom_call.1} parent=11 // pred_fallthru
          _
        // Predicated region
        $region29: #{tpu_custom_call.1} parent=11 // pred_check
          %p548 = pneg %p191
        $region30: #{tpu_custom_call.1} parent=11 // pred_check_branch
          %550 = sbr.rel (%p548) target = $region32
        $region31: #{tpu_custom_call.1} parent=11 // pred_region
          %552 = vsyncadd [#allocation10], 0
          %s553 = sshll.u32 %s6, 4
          %s554 = int_to_ptr.hbm [resolvable:$true] %s553
          %s555 = sshll.u32 [#allocation9], 4
          %s556 = int_to_ptr.vmem [resolvable:$true] %s555
          %561 = dma.hbm_to_vmem [thread:$0]  %s554, 512, %s556, [#allocation10], 64, 64, 4
        $region32: #{tpu_custom_call.1} parent=11 // pred_fallthru
          _
        // Predicated region
        $region33: #{tpu_custom_call.1} parent=11 // pred_check
          %p562 = pneg %p212
        $region34: #{tpu_custom_call.1} parent=11 // pred_check_branch
          %564 = sbr.rel (%p562) target = $region36
        $region35: #{tpu_custom_call.1} parent=11 // pred_region
          _
        $region36: #{tpu_custom_call.1} parent=11 // pred_fallthru
          _
        // Predicated region
        $region37: #{tpu_custom_call.1} parent=11 // pred_check
          %p565 = pneg %p233
        $region38: #{tpu_custom_call.1} parent=11 // pred_check_branch
          %567 = sbr.rel (%p565) target = $region40
        $region39: #{tpu_custom_call.1} parent=11 // pred_region
          %569 = vsyncadd [#allocation10], 0
          %s570 = sshll.u32 %s8, 4
          %s571 = int_to_ptr.hbm [resolvable:$true] %s570
          %s572 = sshll.u32 [#allocation11], 4
          %s573 = int_to_ptr.vmem [resolvable:$true] %s572
          %578 = dma.hbm_to_vmem [thread:$0]  %s571, 512, %s573, [#allocation10], 64, 64, 4
        $region40: #{tpu_custom_call.1} parent=11 // pred_fallthru
          _
        // Predicated region
        $region41: #{tpu_custom_call.1} parent=11 // pred_check
          %p579 = pneg %p254
        $region42: #{tpu_custom_call.1} parent=11 // pred_check_branch
          %581 = sbr.rel (%p579) target = $region44
        $region43: #{tpu_custom_call.1} parent=11 // pred_region
          _
        $region44: #{tpu_custom_call.1} parent=11 // pred_fallthru
          _
        // Predicated region
        $region45: #{tpu_custom_call.1} parent=11 // pred_check
          %p582 = pneg %p275
        $region46: #{tpu_custom_call.1} parent=11 // pred_check_branch
          %584 = sbr.rel (%p582) target = $region48
        $region47: #{tpu_custom_call.1} parent=11 // pred_region
          _
        $region48: #{tpu_custom_call.1} parent=11 // pred_fallthru
          _
        // Predicated region
        $region49: #{tpu_custom_call.1} parent=11 // pred_check
          %p585 = pneg %p296
        $region50: #{tpu_custom_call.1} parent=11 // pred_check_branch
          %587 = sbr.rel (%p585) target = $region52
        $region51: #{tpu_custom_call.1} parent=11 // pred_region
          _
        $region52: #{tpu_custom_call.1} parent=11 // pred_fallthru
          _
        // Predicated region
        $region53: #{tpu_custom_call.1} parent=11 // pred_check
          %p588 = pneg %p317
        $region54: #{tpu_custom_call.1} parent=11 // pred_check_branch
          %590 = sbr.rel (%p588) target = $region56
        $region55: #{tpu_custom_call.1} parent=11 // pred_region
          _
        $region56: #{tpu_custom_call.1} parent=11 // pred_fallthru
          _
        // Predicated region
        $region57: #{tpu_custom_call.1} parent=11 // pred_check
          %p591 = pneg %p338
        $region58: #{tpu_custom_call.1} parent=11 // pred_check_branch
          %593 = sbr.rel (%p591) target = $region60
        $region59: #{tpu_custom_call.1} parent=11 // pred_region
          _
        $region60: #{tpu_custom_call.1} parent=11 // pred_fallthru
          _
        // Predicated region
        $region61: #{tpu_custom_call.1} parent=11 // pred_check
          %p594 = pneg %p359
        $region62: #{tpu_custom_call.1} parent=11 // pred_check_branch
          %596 = sbr.rel (%p594) target = $region64
        $region63: #{tpu_custom_call.1} parent=11 // pred_region
          _
        $region64: #{tpu_custom_call.1} parent=11 // pred_fallthru
          _
        // Predicated region
        $region65: #{tpu_custom_call.1} parent=11 // pred_check
          %p597 = pneg %p380
        $region66: #{tpu_custom_call.1} parent=11 // pred_check_branch
          %599 = sbr.rel (%p597) target = $region68
        $region67: #{tpu_custom_call.1} parent=11 // pred_region
          _
        $region68: #{tpu_custom_call.1} parent=11 // pred_fallthru
          _
        // Predicated region
        $region69: #{tpu_custom_call.1} parent=11 // pred_check
          %p600 = pneg %p401
        $region70: #{tpu_custom_call.1} parent=11 // pred_check_branch
          %602 = sbr.rel (%p600) target = $region72
        $region71: #{tpu_custom_call.1} parent=11 // pred_region
          _
        $region72: #{tpu_custom_call.1} parent=11 // pred_fallthru
          _
        // Predicated region
        $region73: #{tpu_custom_call.1} parent=11 // pred_check
          %p603 = pneg %p422
        $region74: #{tpu_custom_call.1} parent=11 // pred_check_branch
          %605 = sbr.rel (%p603) target = $region76
        $region75: #{tpu_custom_call.1} parent=11 // pred_region
          _
        $region76: #{tpu_custom_call.1} parent=11 // pred_fallthru
          _
        // Predicated region
        $region77: #{tpu_custom_call.1} parent=11 // pred_check
          %p606 = pneg %p443
        $region78: #{tpu_custom_call.1} parent=11 // pred_check_branch
          %608 = sbr.rel (%p606) target = $region80
        $region79: #{tpu_custom_call.1} parent=11 // pred_region
          _
        $region80: #{tpu_custom_call.1} parent=11 // pred_fallthru
          _
        // Predicated region
        $region81: #{tpu_custom_call.1} parent=11 // pred_check
          %p609 = pneg %p464
        $region82: #{tpu_custom_call.1} parent=11 // pred_check_branch
          %611 = sbr.rel (%p609) target = $region84
        $region83: #{tpu_custom_call.1} parent=11 // pred_region
          _
        $region84: #{tpu_custom_call.1} parent=11 // pred_fallthru
          _
      $region12: #{tpu_custom_call.1} parent=5 // pred_fallthru
        _
      %p612 = scmp.lt.s32.totalorder %s34, 2
      // Predicated region
      $region85: #{tpu_custom_call.1} parent=5 // pred_check
        %p613 = pneg %p612
      $region86: #{tpu_custom_call.1} parent=5 // pred_check_branch
        %615 = sbr.rel (%p613) target = $region88
      $region87: #{tpu_custom_call.1} parent=5 // pred_region
        // Predicated region
        $region89: #{tpu_custom_call.1} parent=87 // pred_check
          %p616 = pneg %p54
        $region90: #{tpu_custom_call.1} parent=87 // pred_check_branch
          %618 = sbr.rel (%p616) target = $region92
        $region91: #{tpu_custom_call.1} parent=87 // pred_region
          %s619 = smul.u32 2, %s34
          %p620 = scmp.lt.s32.totalorder %s619, 3
          %s621 = scalar_select %p620, %s619, 3
          %s622 = smul.addr %s621, 8
          %s623 = scalar_lea.vmem %s0, %s622
          %s624 = smul.u32 2, %s34
        $region92: #{tpu_custom_call.1} parent=87 // pred_fallthru
          _
        // Predicated region
        $region93: #{tpu_custom_call.1} parent=87 // pred_check
          %p625 = pneg %p80
        $region94: #{tpu_custom_call.1} parent=87 // pred_check_branch
          %627 = sbr.rel (%p625) target = $region96
        $region95: #{tpu_custom_call.1} parent=87 // pred_region
          %s628 = smul.u32 2, %s34
          %p629 = scmp.lt.s32.totalorder %s628, 3
          %s630 = scalar_select %p629, %s628, 3
          %s631 = smul.addr %s630, 8
          %s632 = scalar_lea.vmem %s1, %s631
          %s633 = smul.u32 2, %s34
        $region96: #{tpu_custom_call.1} parent=87 // pred_fallthru
          _
      $region88: #{tpu_custom_call.1} parent=5 // pred_fallthru
        _
      %p634 = scmp.le.s32.totalorder 1, %s34
      %p635 = scmp.lt.s32.totalorder %s34, 3
      %p636 = pnand %p634, %p635
      %p637 = pneg %p636
      // Predicated region
      $region97: #{tpu_custom_call.1} parent=5 // pred_check
        _
      $region98: #{tpu_custom_call.1} parent=5 // pred_check_branch
        %639 = sbr.rel (%p636) target = $region100
      $region99: #{tpu_custom_call.1} parent=5 // pred_region
        %s640 = ssub.s32 %s34, 1
        // Predicated region
        $region101: #{tpu_custom_call.1} parent=99 // pred_check
          %p641 = pneg %p107
        $region102: #{tpu_custom_call.1} parent=99 // pred_check_branch
          %643 = sbr.rel (%p641) target = $region104
        $region103: #{tpu_custom_call.1} parent=99 // pred_region
          %645 = dma.done [#allocation4], 128
        $region104: #{tpu_custom_call.1} parent=99 // pred_fallthru
          _
        // Predicated region
        $region105: #{tpu_custom_call.1} parent=99 // pred_check
          %p646 = pneg %p128
        $region106: #{tpu_custom_call.1} parent=99 // pred_check_branch
          %648 = sbr.rel (%p646) target = $region108
        $region107: #{tpu_custom_call.1} parent=99 // pred_region
          %650 = dma.done [#allocation7], 16
        $region108: #{tpu_custom_call.1} parent=99 // pred_fallthru
          _
        // Predicated region
        $region109: #{tpu_custom_call.1} parent=99 // pred_check
          %p651 = pneg %p149
        $region110: #{tpu_custom_call.1} parent=99 // pred_check_branch
          %653 = sbr.rel (%p651) target = $region112
        $region111: #{tpu_custom_call.1} parent=99 // pred_region
          %655 = dma.done [#allocation7], 512
        $region112: #{tpu_custom_call.1} parent=99 // pred_fallthru
          _
        // Predicated region
        $region113: #{tpu_custom_call.1} parent=99 // pred_check
          %p656 = pneg %p191
        $region114: #{tpu_custom_call.1} parent=99 // pred_check_branch
          %658 = sbr.rel (%p656) target = $region116
        $region115: #{tpu_custom_call.1} parent=99 // pred_region
          %660 = dma.done [#allocation10], 512
        $region116: #{tpu_custom_call.1} parent=99 // pred_fallthru
          _
        // Predicated region
        $region117: #{tpu_custom_call.1} parent=99 // pred_check
          %p661 = pneg %p233
        $region118: #{tpu_custom_call.1} parent=99 // pred_check_branch
          %663 = sbr.rel (%p661) target = $region120
        $region119: #{tpu_custom_call.1} parent=99 // pred_region
          %665 = dma.done [#allocation10], 512
        $region120: #{tpu_custom_call.1} parent=99 // pred_fallthru
          _
        %s666 = smul.u32 2, %s39
        %p667 = scmp.lt.s32.totalorder %s666, 3
        %s668 = scalar_select %p667, %s666, 3
        %s669 = smul.addr %s668, 8
        %s670 = scalar_lea.vmem %s0, %s669
        %p671 = pneg %p60
        %p672 = pneg %p57
        %s673 = smul.u32 2, %s39
        %p674 = scmp.lt.s32.totalorder %s673, 3
        %s675 = scalar_select %p674, %s673, 3
        %s676 = smul.addr %s675, 8
        %s677 = scalar_lea.vmem %s1, %s676
        %p678 = pneg %p86
        %p679 = pneg %p83
        %p680 = pneg %p107
        %p681 = pneg %p104
        %p682 = pneg %p128
        %p683 = pneg %p125
        %p684 = pneg %p149
        %p685 = pneg %p146
        %p686 = pneg %p170
        %p687 = pneg %p167
        %p688 = pneg %p191
        %p689 = pneg %p188
        %p690 = pneg %p212
        %p691 = pneg %p209
        %p692 = pneg %p233
        %p693 = pneg %p230
        %p694 = pneg %p254
        %p695 = pneg %p251
        %p696 = pneg %p275
        %p697 = pneg %p272
        %p698 = pneg %p296
        %p699 = pneg %p293
        %p700 = pneg %p317
        %p701 = pneg %p314
        %p702 = pneg %p338
        %p703 = pneg %p335
        %p704 = pneg %p359
        %p705 = pneg %p356
        %p706 = pneg %p380
        %p707 = pneg %p377
        %p708 = pneg %p401
        %p709 = pneg %p398
        %p710 = pneg %p422
        %p711 = pneg %p419
        %p712 = pneg %p443
        %p713 = pneg %p440
        %p714 = pneg %p464
        %p715 = pneg %p461
        %p716 = pneg %p490
        %p717 = pneg %p487
        %s718 = sand.u32 %s477, 1
        %s719 = scalar_lea.sflag [#allocation5], %s718
        %s720 = sand.u32 %s477, 1
        %s721 = scalar_lea.vmem [#allocation12], %s720
        %s722 = smul.u32 2, %s39
        %p723 = scmp.lt.s32.totalorder %s722, 3
        %s724 = scalar_select %p723, %s722, 3
        %s725 = smul.addr %s724, 8
        %s726 = scalar_lea.vmem %s0, %s725
        %s727 = smul.u32 2, %s39
        %s728 = smul.u32 2, %s39
        %p729 = scmp.lt.s32.totalorder %s728, 3
        %s730 = scalar_select %p729, %s728, 3
        %s731 = smul.addr %s730, 8
        %s732 = scalar_lea.vmem %s1, %s731
        %s733 = smul.u32 2, %s39
        %v735 = vld [vmem:[%s726] sm:$0xff]
        %v736 = vld [vmem:[%s726 + $0x8] sm:$0xff]
        %v737 = vpack.c.bf16 %v736, %v735
        %v738 = vld [vmem:[#allocation3] sm:$0xf]
        %v739 = vld [vmem:[#allocation3 + $0x4] sm:$0xf]
        %v740 = vld [vmem:[#allocation6] sm:$0x1]
        %v742 = vperm.slane %v740, 0
        %v746 = vunpack.c.l.b16 %v738
        %v747 = vunpack.c.l.b16 %v739
        %v748 = vpack.c.b16 %v747, %v746
        %vm750 = vcmask 130048
        %v752 = vsel %vm750, %v737, 0
        %754 = vmatpush.bf16.msra.mxu0 0
        %755 = vmatpush.bf16.msra.mxu0 0
        %756 = vmatpush.bf16.msra.mxu0 0
        %757 = vmatpush.bf16.msra.mxu0 0
        %758 = vmatpush.bf16.msra.mxu0 0
        %759 = vmatpush.bf16.msra.mxu0 0
        %760 = vmatpush.bf16.msra.mxu0 0
        %761 = vmatpush.bf16.msra.mxu0 %v748
        %762 = vmatmul.bf16.gmra.mxu0 %v752
        %v763 = vpop.f32.mrf.mxu0
        %v764 = vadd.f32 %v742, %v763
        %v765 = vpop.f32.mrf.mxu0
        %v766 = vadd.f32 %v742, %v765
        %767 = vdwg.mxu0
        %v768 = vld [vmem:[%s732] sm:$0xff]
        %v769 = vld [vmem:[%s732 + $0x8] sm:$0xff]
        %v770 = vadd.f32 %v764, %v768
        %v771 = vadd.f32 %v766, %v769
        loop: start=0, step=1, limit=2
        $region121: #{tpu_custom_call.1} parent=99 // loop_pre_header
          _
        $region122: #{tpu_custom_call.1} parent=99 // loop_header
          %s773 = sphi 0, %s777
          %p774 = scmp.ge.s32.totalorder %s773, 2
          %v778 = vphi %v770, %v2060
          %v779 = vphi %v771, %v2061
        $region123: #{tpu_custom_call.1} parent=99 // loop_header_branch
          %776 = sbr.rel (%p774) target = $region127
        $region124: #{tpu_custom_call.1} parent=99 // loop_body
          %v780 = vpack.c.bf16 %v779, %v778
          %s781 = smul.u32 %s773, 4
          %s782 = smul.addr %s781, 4
          %s783 = scalar_lea.vmem [#allocation8], %s782
          %v784 = vld [vmem:[%s783] sm:$0xf]
          %v785 = vld [vmem:[%s783 + $0x4] sm:$0xf]
          %v786 = vld [vmem:[%s783 + $0x8] sm:$0xf]
          %v787 = vld [vmem:[%s783 + $0xc] sm:$0xf]
          %s788 = scalar_lea.vmem %s5, %s773
          %v789 = vld [vmem:[%s788] sm:$0x1]
          %v791 = vperm.slane %v789, 0
          %v797 = vunpack.c.l.b16 %v784
          %v798 = vunpack.c.l.b16 %v785
          %v799 = vunpack.c.l.b16 %v786
          %v800 = vunpack.c.l.b16 %v787
          %v801 = vpack.c.b16 %v798, %v797
          %v802 = vpack.c.b16 %v800, %v799
          %vm805 = vcmask 261120
          %v807 = vsel %vm805, %v780, 0
          %809 = vmatpush.bf16.msra.mxu0 0
          %810 = vmatpush.bf16.msra.mxu0 0
          %811 = vmatpush.bf16.msra.mxu0 0
          %812 = vmatpush.bf16.msra.mxu0 0
          %813 = vmatpush.bf16.msra.mxu0 0
          %814 = vmatpush.bf16.msra.mxu0 0
          %815 = vmatpush.bf16.msra.mxu0 %v802
          %816 = vmatpush.bf16.msra.mxu0 %v801
          %817 = vmatmul.bf16.gmra.mxu0 %v807
          %v818 = vpop.f32.mrf.mxu0
          %v819 = vadd.f32 %v791, %v818
          %v820 = vpop.f32.mrf.mxu0
          %v821 = vadd.f32 %v791, %v820
          %822 = vdwg.mxu0
          %v823 = vpack.c.bf16 %v819, %v819
          %v824 = vpack.c.bf16 %v821, %v821
          %s825 = smul.addr %s781, 4
          %s826 = scalar_lea.vmem [#allocation9], %s825
          %v827 = vld [vmem:[%s826] sm:$0xf]
          %v828 = vld [vmem:[%s826 + $0x4] sm:$0xf]
          %v829 = vld [vmem:[%s826 + $0x8] sm:$0xf]
          %v830 = vld [vmem:[%s826 + $0xc] sm:$0xf]
          %v832 = vunpack.c.l.b16 %v823
          %v833 = vpack.c.b16 %v832, %v832
          %834 = vrot.lane.b32.xlu0 %v833, 96
          %v835 = vpop.permute.xlu0 %834
          %vm836 = vcmask 31744
          %v838 = vsel %vm836, %v823, 0
          %v841 = vsel %vm836, %v835, 0
          %843 = vmatpush.bf16.xpose.msra.mxu0 0
          %844 = vmatpush.bf16.xpose.msra.mxu0 0
          %845 = vmatpush.bf16.xpose.msra.mxu0 0
          %846 = vmatpush.bf16.xpose.msra.mxu0 0
          %847 = vmatpush.bf16.xpose.msra.mxu0 0
          %848 = vmatpush.bf16.xpose.msra.mxu0 0
          %849 = vmatpush.bf16.xpose.msra.mxu0 0
          %850 = vmatpush.bf16.xpose.msra.mxu0 %v841
          %851 = vmatmul.bf16.gmra.mxu0 %v838
          %v852 = vpop.f32.mrf.mxu0
          %v853 = vadd.f32 0.0, %v852
          %v854 = vpop.f32.mrf.mxu0
          %855 = vdwg.mxu0
          %v857 = vunpack.c.l.b16 %v824
          %v858 = vpack.c.b16 %v857, %v857
          %859 = vrot.lane.b32.xlu0 %v858, 96
          %v860 = vpop.permute.xlu0 %859
          %v862 = vsel %vm836, %v824, 0
          %v865 = vsel %vm836, %v860, 0
          %867 = vmatpush.bf16.xpose.msra.mxu0 0
          %868 = vmatpush.bf16.xpose.msra.mxu0 0
          %869 = vmatpush.bf16.xpose.msra.mxu0 0
          %870 = vmatpush.bf16.xpose.msra.mxu0 0
          %871 = vmatpush.bf16.xpose.msra.mxu0 0
          %872 = vmatpush.bf16.xpose.msra.mxu0 0
          %873 = vmatpush.bf16.xpose.msra.mxu0 0
          %874 = vmatpush.bf16.xpose.msra.mxu0 %v865
          %875 = vmatmul.bf16.gmra.mxu0 %v862
          %v876 = vpop.f32.mrf.mxu0
          %v877 = vadd.f32 0.0, %v876
          %v878 = vpop.f32.mrf.mxu0
          %879 = vdwg.mxu0
          %v880 = vmul.f32 %v853, 0.5
          %v881 = vmul.f32 %v877, 0.5
          %vm882 = vcmask 64512
          %v883 = vsel %vm882, %v880, -inf
          %884 = vmax.xlane.f32.xlu0 %v883
          %v885 = vpop.xlane.xlu0 %884
          %v886 = vsel %vm882, %v881, -inf
          %887 = vmax.xlane.f32.xlu0 %v886
          %v888 = vpop.xlane.xlu0 %887
          %v889 = vsub.f32 %v880, %v885
          %v890 = vsub.f32 %v881, %v888
          %v891 = vmul.f32 %v889, 1.442695
          %v892 = vpow.pop %v891
          %v893 = vmul.f32 %v890, 1.442695
          %v894 = vpow.pop %v893
          %v895 = vsel %vm882, %v892, 0.0
          %896 = vadd.xlane.f32.xlu0 %v895
          %v897 = vpop.xlane.xlu0 %896
          %v898 = vsel %vm882, %v894, 0.0
          %899 = vadd.xlane.f32.xlu0 %v898
          %v900 = vpop.xlane.xlu0 %899
          %v901 = vrcp.pop %v897
          %v902 = vrcp.pop %v900
          %v903 = vmul.f32 %v892, %v901
          %v904 = vmul.f32 %v894, %v902
          %v905 = vpack.c.bf16 %v903, %v903
          %v906 = vpack.c.bf16 %v904, %v904
          %907 = vrot.lane.b32.xlu0 %v833, 64
          %v908 = vpop.permute.xlu0 %907
          %v910 = vsel %vm882, %v905, 0
          %vm912 = vcmask 1043456
          %v914 = vsel %vm912, %v908, 0
          %916 = vmatpush.bf16.msra.mxu0 0
          %917 = vmatpush.bf16.msra.mxu0 0
          %918 = vmatpush.bf16.msra.mxu0 0
          %919 = vmatpush.bf16.msra.mxu0 0
          %920 = vmatpush.bf16.msra.mxu0 0
          %921 = vmatpush.bf16.msra.mxu0 0
          %922 = vmatpush.bf16.msra.mxu0 0
          %923 = vmatpush.bf16.msra.mxu0 %v914
          %924 = vmatmul.bf16.gmra.mxu0 %v910
          %v925 = vpop.f32.mrf.mxu0
          %v926 = vadd.f32 0.0, %v925
          %v927 = vpop.f32.mrf.mxu0
          %928 = vdwg.mxu0
          %929 = vrot.lane.b32.xlu0 %v858, 64
          %v930 = vpop.permute.xlu0 %929
          %v932 = vsel %vm882, %v906, 0
          %v935 = vsel %vm912, %v930, 0
          %937 = vmatpush.bf16.msra.mxu0 0
          %938 = vmatpush.bf16.msra.mxu0 0
          %939 = vmatpush.bf16.msra.mxu0 0
          %940 = vmatpush.bf16.msra.mxu0 0
          %941 = vmatpush.bf16.msra.mxu0 0
          %942 = vmatpush.bf16.msra.mxu0 0
          %943 = vmatpush.bf16.msra.mxu0 0
          %944 = vmatpush.bf16.msra.mxu0 %v935
          %945 = vmatmul.bf16.gmra.mxu0 %v932
          %v946 = vpop.f32.mrf.mxu0
          %v947 = vadd.f32 0.0, %v946
          %v948 = vpop.f32.mrf.mxu0
          %949 = vdwg.mxu0
          %v950 = vpack.c.bf16 %v947, %v926
          %951 = vrot.lane.b32.xlu0 %v833, 124
          %v952 = vpop.permute.xlu0 %951
          %953 = vrot.lane.b32.xlu0 %v833, 92
          %v954 = vpop.permute.xlu0 %953
          %v956 = vsel %vm836, %v952, 0
          %v959 = vsel %vm836, %v954, 0
          %961 = vmatpush.bf16.xpose.msra.mxu0 0
          %962 = vmatpush.bf16.xpose.msra.mxu0 0
          %963 = vmatpush.bf16.xpose.msra.mxu0 0
          %964 = vmatpush.bf16.xpose.msra.mxu0 0
          %965 = vmatpush.bf16.xpose.msra.mxu0 0
          %966 = vmatpush.bf16.xpose.msra.mxu0 0
          %967 = vmatpush.bf16.xpose.msra.mxu0 0
          %968 = vmatpush.bf16.xpose.msra.mxu0 %v959
          %969 = vmatmul.bf16.gmra.mxu0 %v956
          %v970 = vpop.f32.mrf.mxu0
          %v971 = vadd.f32 0.0, %v970
          %v972 = vpop.f32.mrf.mxu0
          %973 = vdwg.mxu0
          %974 = vrot.lane.b32.xlu0 %v858, 124
          %v975 = vpop.permute.xlu0 %974
          %976 = vrot.lane.b32.xlu0 %v858, 92
          %v977 = vpop.permute.xlu0 %976
          %v979 = vsel %vm836, %v975, 0
          %v982 = vsel %vm836, %v977, 0
          %984 = vmatpush.bf16.xpose.msra.mxu0 0
          %985 = vmatpush.bf16.xpose.msra.mxu0 0
          %986 = vmatpush.bf16.xpose.msra.mxu0 0
          %987 = vmatpush.bf16.xpose.msra.mxu0 0
          %988 = vmatpush.bf16.xpose.msra.mxu0 0
          %989 = vmatpush.bf16.xpose.msra.mxu0 0
          %990 = vmatpush.bf16.xpose.msra.mxu0 0
          %991 = vmatpush.bf16.xpose.msra.mxu0 %v982
          %992 = vmatmul.bf16.gmra.mxu0 %v979
          %v993 = vpop.f32.mrf.mxu0
          %v994 = vadd.f32 0.0, %v993
          %v995 = vpop.f32.mrf.mxu0
          %996 = vdwg.mxu0
          %v997 = vmul.f32 %v971, 0.5
          %v998 = vmul.f32 %v994, 0.5
          %v999 = vsel %vm882, %v997, -inf
          %1000 = vmax.xlane.f32.xlu0 %v999
          %v1001 = vpop.xlane.xlu0 %1000
          %v1002 = vsel %vm882, %v998, -inf
          %1003 = vmax.xlane.f32.xlu0 %v1002
          %v1004 = vpop.xlane.xlu0 %1003
          %v1005 = vsub.f32 %v997, %v1001
          %v1006 = vsub.f32 %v998, %v1004
          %v1007 = vmul.f32 %v1005, 1.442695
          %v1008 = vpow.pop %v1007
          %v1009 = vmul.f32 %v1006, 1.442695
          %v1010 = vpow.pop %v1009
          %v1011 = vsel %vm882, %v1008, 0.0
          %1012 = vadd.xlane.f32.xlu0 %v1011
          %v1013 = vpop.xlane.xlu0 %1012
          %v1014 = vsel %vm882, %v1010, 0.0
          %1015 = vadd.xlane.f32.xlu0 %v1014
          %v1016 = vpop.xlane.xlu0 %1015
          %v1017 = vrcp.pop %v1013
          %v1018 = vrcp.pop %v1016
          %v1019 = vmul.f32 %v1008, %v1017
          %v1020 = vmul.f32 %v1010, %v1018
          %v1021 = vpack.c.bf16 %v1019, %v1019
          %v1022 = vpack.c.bf16 %v1020, %v1020
          %1023 = vrot.lane.b32.xlu0 %v833, 60
          %v1024 = vpop.permute.xlu0 %1023
          %v1026 = vsel %vm882, %v1021, 0
          %v1029 = vsel %vm912, %v1024, 0
          %1031 = vmatpush.bf16.msra.mxu0 0
          %1032 = vmatpush.bf16.msra.mxu0 0
          %1033 = vmatpush.bf16.msra.mxu0 0
          %1034 = vmatpush.bf16.msra.mxu0 0
          %1035 = vmatpush.bf16.msra.mxu0 0
          %1036 = vmatpush.bf16.msra.mxu0 0
          %1037 = vmatpush.bf16.msra.mxu0 0
          %1038 = vmatpush.bf16.msra.mxu0 %v1029
          %1039 = vmatmul.bf16.gmra.mxu0 %v1026
          %v1040 = vpop.f32.mrf.mxu0
          %v1041 = vadd.f32 0.0, %v1040
          %v1042 = vpop.f32.mrf.mxu0
          %1043 = vdwg.mxu0
          %1044 = vrot.lane.b32.xlu0 %v858, 60
          %v1045 = vpop.permute.xlu0 %1044
          %v1047 = vsel %vm882, %v1022, 0
          %v1050 = vsel %vm912, %v1045, 0
          %1052 = vmatpush.bf16.msra.mxu0 0
          %1053 = vmatpush.bf16.msra.mxu0 0
          %1054 = vmatpush.bf16.msra.mxu0 0
          %1055 = vmatpush.bf16.msra.mxu0 0
          %1056 = vmatpush.bf16.msra.mxu0 0
          %1057 = vmatpush.bf16.msra.mxu0 0
          %1058 = vmatpush.bf16.msra.mxu0 0
          %1059 = vmatpush.bf16.msra.mxu0 %v1050
          %1060 = vmatmul.bf16.gmra.mxu0 %v1047
          %v1061 = vpop.f32.mrf.mxu0
          %v1062 = vadd.f32 0.0, %v1061
          %v1063 = vpop.f32.mrf.mxu0
          %1064 = vdwg.mxu0
          %v1065 = vpack.c.bf16 %v1062, %v1041
          %v1067 = vunpack.c.l.b16 %v827
          %v1068 = vpack.c.b16 %v1067, %v1067
          %v1069 = vrot.slane %v1068, 2
          %v1071 = vsel %vm836, %v1065, 0
          %vm1073 = vcmask 1041408
          %v1075 = vsel %vm1073, %v1069, 0
          %1077 = vmatpush.bf16.msra.mxu0 0
          %1078 = vmatpush.bf16.msra.mxu0 0
          %1079 = vmatpush.bf16.msra.mxu0 0
          %1080 = vmatpush.bf16.msra.mxu0 0
          %1081 = vmatpush.bf16.msra.mxu0 0
          %1082 = vmatpush.bf16.msra.mxu0 0
          %1083 = vmatpush.bf16.msra.mxu0 0
          %1084 = vmatpush.bf16.msra.mxu0 %v1075
          %1085 = vmatmul.bf16.gmra.mxu0 %v1071
          %v1086 = vpop.f32.mrf.mxu0
          %v1087 = vadd.f32 0.0, %v1086
          %v1088 = vpop.f32.mrf.mxu0
          %v1089 = vadd.f32 0.0, %v1088
          %1090 = vdwg.mxu0
          %v1092 = vsel %vm836, %v950, 0
          %v1095 = vsel %vm1073, %v827, 0
          %1097 = vmatpush.bf16.msra.mxu0 0
          %1098 = vmatpush.bf16.msra.mxu0 0
          %1099 = vmatpush.bf16.msra.mxu0 0
          %1100 = vmatpush.bf16.msra.mxu0 0
          %1101 = vmatpush.bf16.msra.mxu0 0
          %1102 = vmatpush.bf16.msra.mxu0 0
          %1103 = vmatpush.bf16.msra.mxu0 0
          %1104 = vmatpush.bf16.msra.mxu0 %v1095
          %1105 = vmatmul.bf16.gmra.mxu0 %v1092
          %v1106 = vpop.f32.mrf.mxu0
          %v1107 = vadd.f32 %v1087, %v1106
          %v1108 = vpop.f32.mrf.mxu0
          %v1109 = vadd.f32 %v1089, %v1108
          %1110 = vdwg.mxu0
          %1111 = vrot.lane.b32.xlu0 %v833, 120
          %v1112 = vpop.permute.xlu0 %1111
          %1113 = vrot.lane.b32.xlu0 %v833, 88
          %v1114 = vpop.permute.xlu0 %1113
          %v1116 = vsel %vm836, %v1112, 0
          %v1119 = vsel %vm836, %v1114, 0
          %1121 = vmatpush.bf16.xpose.msra.mxu0 0
          %1122 = vmatpush.bf16.xpose.msra.mxu0 0
          %1123 = vmatpush.bf16.xpose.msra.mxu0 0
          %1124 = vmatpush.bf16.xpose.msra.mxu0 0
          %1125 = vmatpush.bf16.xpose.msra.mxu0 0
          %1126 = vmatpush.bf16.xpose.msra.mxu0 0
          %1127 = vmatpush.bf16.xpose.msra.mxu0 0
          %1128 = vmatpush.bf16.xpose.msra.mxu0 %v1119
          %1129 = vmatmul.bf16.gmra.mxu0 %v1116
          %v1130 = vpop.f32.mrf.mxu0
          %v1131 = vadd.f32 0.0, %v1130
          %v1132 = vpop.f32.mrf.mxu0
          %1133 = vdwg.mxu0
          %1134 = vrot.lane.b32.xlu0 %v858, 120
          %v1135 = vpop.permute.xlu0 %1134
          %1136 = vrot.lane.b32.xlu0 %v858, 88
          %v1137 = vpop.permute.xlu0 %1136
          %v1139 = vsel %vm836, %v1135, 0
          %v1142 = vsel %vm836, %v1137, 0
          %1144 = vmatpush.bf16.xpose.msra.mxu0 0
          %1145 = vmatpush.bf16.xpose.msra.mxu0 0
          %1146 = vmatpush.bf16.xpose.msra.mxu0 0
          %1147 = vmatpush.bf16.xpose.msra.mxu0 0
          %1148 = vmatpush.bf16.xpose.msra.mxu0 0
          %1149 = vmatpush.bf16.xpose.msra.mxu0 0
          %1150 = vmatpush.bf16.xpose.msra.mxu0 0
          %1151 = vmatpush.bf16.xpose.msra.mxu0 %v1142
          %1152 = vmatmul.bf16.gmra.mxu0 %v1139
          %v1153 = vpop.f32.mrf.mxu0
          %v1154 = vadd.f32 0.0, %v1153
          %v1155 = vpop.f32.mrf.mxu0
          %1156 = vdwg.mxu0
          %v1157 = vmul.f32 %v1131, 0.5
          %v1158 = vmul.f32 %v1154, 0.5
          %v1159 = vsel %vm882, %v1157, -inf
          %1160 = vmax.xlane.f32.xlu0 %v1159
          %v1161 = vpop.xlane.xlu0 %1160
          %v1162 = vsel %vm882, %v1158, -inf
          %1163 = vmax.xlane.f32.xlu0 %v1162
          %v1164 = vpop.xlane.xlu0 %1163
          %v1165 = vsub.f32 %v1157, %v1161
          %v1166 = vsub.f32 %v1158, %v1164
          %v1167 = vmul.f32 %v1165, 1.442695
          %v1168 = vpow.pop %v1167
          %v1169 = vmul.f32 %v1166, 1.442695
          %v1170 = vpow.pop %v1169
          %v1171 = vsel %vm882, %v1168, 0.0
          %1172 = vadd.xlane.f32.xlu0 %v1171
          %v1173 = vpop.xlane.xlu0 %1172
          %v1174 = vsel %vm882, %v1170, 0.0
          %1175 = vadd.xlane.f32.xlu0 %v1174
          %v1176 = vpop.xlane.xlu0 %1175
          %v1177 = vrcp.pop %v1173
          %v1178 = vrcp.pop %v1176
          %v1179 = vmul.f32 %v1168, %v1177
          %v1180 = vmul.f32 %v1170, %v1178
          %v1181 = vpack.c.bf16 %v1179, %v1179
          %v1182 = vpack.c.bf16 %v1180, %v1180
          %1183 = vrot.lane.b32.xlu0 %v833, 56
          %v1184 = vpop.permute.xlu0 %1183
          %v1186 = vsel %vm882, %v1181, 0
          %v1189 = vsel %vm912, %v1184, 0
          %1191 = vmatpush.bf16.msra.mxu0 0
          %1192 = vmatpush.bf16.msra.mxu0 0
          %1193 = vmatpush.bf16.msra.mxu0 0
          %1194 = vmatpush.bf16.msra.mxu0 0
          %1195 = vmatpush.bf16.msra.mxu0 0
          %1196 = vmatpush.bf16.msra.mxu0 0
          %1197 = vmatpush.bf16.msra.mxu0 0
          %1198 = vmatpush.bf16.msra.mxu0 %v1189
          %1199 = vmatmul.bf16.gmra.mxu0 %v1186
          %v1200 = vpop.f32.mrf.mxu0
          %v1201 = vadd.f32 0.0, %v1200
          %v1202 = vpop.f32.mrf.mxu0
          %1203 = vdwg.mxu0
          %1204 = vrot.lane.b32.xlu0 %v858, 56
          %v1205 = vpop.permute.xlu0 %1204
          %v1207 = vsel %vm882, %v1182, 0
          %v1210 = vsel %vm912, %v1205, 0
          %1212 = vmatpush.bf16.msra.mxu0 0
          %1213 = vmatpush.bf16.msra.mxu0 0
          %1214 = vmatpush.bf16.msra.mxu0 0
          %1215 = vmatpush.bf16.msra.mxu0 0
          %1216 = vmatpush.bf16.msra.mxu0 0
          %1217 = vmatpush.bf16.msra.mxu0 0
          %1218 = vmatpush.bf16.msra.mxu0 0
          %1219 = vmatpush.bf16.msra.mxu0 %v1210
          %1220 = vmatmul.bf16.gmra.mxu0 %v1207
          %v1221 = vpop.f32.mrf.mxu0
          %v1222 = vadd.f32 0.0, %v1221
          %v1223 = vpop.f32.mrf.mxu0
          %1224 = vdwg.mxu0
          %v1225 = vpack.c.bf16 %v1222, %v1201
          %v1227 = vsel %vm836, %v1225, 0
          %v1230 = vsel %vm1073, %v828, 0
          %1232 = vmatpush.bf16.msra.mxu0 0
          %1233 = vmatpush.bf16.msra.mxu0 0
          %1234 = vmatpush.bf16.msra.mxu0 0
          %1235 = vmatpush.bf16.msra.mxu0 0
          %1236 = vmatpush.bf16.msra.mxu0 0
          %1237 = vmatpush.bf16.msra.mxu0 0
          %1238 = vmatpush.bf16.msra.mxu0 0
          %1239 = vmatpush.bf16.msra.mxu0 %v1230
          %1240 = vmatmul.bf16.gmra.mxu0 %v1227
          %v1241 = vpop.f32.mrf.mxu0
          %v1242 = vadd.f32 0.0, %v1241
          %v1243 = vpop.f32.mrf.mxu0
          %v1244 = vadd.f32 0.0, %v1243
          %1245 = vdwg.mxu0
          %v1246 = vadd.f32 %v1107, %v1242
          %v1247 = vadd.f32 %v1109, %v1244
          %1248 = vrot.lane.b32.xlu0 %v833, 116
          %v1249 = vpop.permute.xlu0 %1248
          %1250 = vrot.lane.b32.xlu0 %v833, 84
          %v1251 = vpop.permute.xlu0 %1250
          %v1253 = vsel %vm836, %v1249, 0
          %v1256 = vsel %vm836, %v1251, 0
          %1258 = vmatpush.bf16.xpose.msra.mxu0 0
          %1259 = vmatpush.bf16.xpose.msra.mxu0 0
          %1260 = vmatpush.bf16.xpose.msra.mxu0 0
          %1261 = vmatpush.bf16.xpose.msra.mxu0 0
          %1262 = vmatpush.bf16.xpose.msra.mxu0 0
          %1263 = vmatpush.bf16.xpose.msra.mxu0 0
          %1264 = vmatpush.bf16.xpose.msra.mxu0 0
          %1265 = vmatpush.bf16.xpose.msra.mxu0 %v1256
          %1266 = vmatmul.bf16.gmra.mxu0 %v1253
          %v1267 = vpop.f32.mrf.mxu0
          %v1268 = vadd.f32 0.0, %v1267
          %v1269 = vpop.f32.mrf.mxu0
          %1270 = vdwg.mxu0
          %1271 = vrot.lane.b32.xlu0 %v858, 116
          %v1272 = vpop.permute.xlu0 %1271
          %1273 = vrot.lane.b32.xlu0 %v858, 84
          %v1274 = vpop.permute.xlu0 %1273
          %v1276 = vsel %vm836, %v1272, 0
          %v1279 = vsel %vm836, %v1274, 0
          %1281 = vmatpush.bf16.xpose.msra.mxu0 0
          %1282 = vmatpush.bf16.xpose.msra.mxu0 0
          %1283 = vmatpush.bf16.xpose.msra.mxu0 0
          %1284 = vmatpush.bf16.xpose.msra.mxu0 0
          %1285 = vmatpush.bf16.xpose.msra.mxu0 0
          %1286 = vmatpush.bf16.xpose.msra.mxu0 0
          %1287 = vmatpush.bf16.xpose.msra.mxu0 0
          %1288 = vmatpush.bf16.xpose.msra.mxu0 %v1279
          %1289 = vmatmul.bf16.gmra.mxu0 %v1276
          %v1290 = vpop.f32.mrf.mxu0
          %v1291 = vadd.f32 0.0, %v1290
          %v1292 = vpop.f32.mrf.mxu0
          %1293 = vdwg.mxu0
          %v1294 = vmul.f32 %v1268, 0.5
          %v1295 = vmul.f32 %v1291, 0.5
          %v1296 = vsel %vm882, %v1294, -inf
          %1297 = vmax.xlane.f32.xlu0 %v1296
          %v1298 = vpop.xlane.xlu0 %1297
          %v1299 = vsel %vm882, %v1295, -inf
          %1300 = vmax.xlane.f32.xlu0 %v1299
          %v1301 = vpop.xlane.xlu0 %1300
          %v1302 = vsub.f32 %v1294, %v1298
          %v1303 = vsub.f32 %v1295, %v1301
          %v1304 = vmul.f32 %v1302, 1.442695
          %v1305 = vpow.pop %v1304
          %v1306 = vmul.f32 %v1303, 1.442695
          %v1307 = vpow.pop %v1306
          %v1308 = vsel %vm882, %v1305, 0.0
          %1309 = vadd.xlane.f32.xlu0 %v1308
          %v1310 = vpop.xlane.xlu0 %1309
          %v1311 = vsel %vm882, %v1307, 0.0
          %1312 = vadd.xlane.f32.xlu0 %v1311
          %v1313 = vpop.xlane.xlu0 %1312
          %v1314 = vrcp.pop %v1310
          %v1315 = vrcp.pop %v1313
          %v1316 = vmul.f32 %v1305, %v1314
          %v1317 = vmul.f32 %v1307, %v1315
          %v1318 = vpack.c.bf16 %v1316, %v1316
          %v1319 = vpack.c.bf16 %v1317, %v1317
          %1320 = vrot.lane.b32.xlu0 %v833, 52
          %v1321 = vpop.permute.xlu0 %1320
          %v1323 = vsel %vm882, %v1318, 0
          %v1326 = vsel %vm912, %v1321, 0
          %1328 = vmatpush.bf16.msra.mxu0 0
          %1329 = vmatpush.bf16.msra.mxu0 0
          %1330 = vmatpush.bf16.msra.mxu0 0
          %1331 = vmatpush.bf16.msra.mxu0 0
          %1332 = vmatpush.bf16.msra.mxu0 0
          %1333 = vmatpush.bf16.msra.mxu0 0
          %1334 = vmatpush.bf16.msra.mxu0 0
          %1335 = vmatpush.bf16.msra.mxu0 %v1326
          %1336 = vmatmul.bf16.gmra.mxu0 %v1323
          %v1337 = vpop.f32.mrf.mxu0
          %v1338 = vadd.f32 0.0, %v1337
          %v1339 = vpop.f32.mrf.mxu0
          %1340 = vdwg.mxu0
          %1341 = vrot.lane.b32.xlu0 %v858, 52
          %v1342 = vpop.permute.xlu0 %1341
          %v1344 = vsel %vm882, %v1319, 0
          %v1347 = vsel %vm912, %v1342, 0
          %1349 = vmatpush.bf16.msra.mxu0 0
          %1350 = vmatpush.bf16.msra.mxu0 0
          %1351 = vmatpush.bf16.msra.mxu0 0
          %1352 = vmatpush.bf16.msra.mxu0 0
          %1353 = vmatpush.bf16.msra.mxu0 0
          %1354 = vmatpush.bf16.msra.mxu0 0
          %1355 = vmatpush.bf16.msra.mxu0 0
          %1356 = vmatpush.bf16.msra.mxu0 %v1347
          %1357 = vmatmul.bf16.gmra.mxu0 %v1344
          %v1358 = vpop.f32.mrf.mxu0
          %v1359 = vadd.f32 0.0, %v1358
          %v1360 = vpop.f32.mrf.mxu0
          %1361 = vdwg.mxu0
          %v1362 = vpack.c.bf16 %v1359, %v1338
          %v1364 = vunpack.c.l.b16 %v828
          %v1365 = vpack.c.b16 %v1364, %v1364
          %v1366 = vrot.slane %v1365, 2
          %v1368 = vsel %vm836, %v1362, 0
          %v1371 = vsel %vm1073, %v1366, 0
          %1373 = vmatpush.bf16.msra.mxu0 0
          %1374 = vmatpush.bf16.msra.mxu0 0
          %1375 = vmatpush.bf16.msra.mxu0 0
          %1376 = vmatpush.bf16.msra.mxu0 0
          %1377 = vmatpush.bf16.msra.mxu0 0
          %1378 = vmatpush.bf16.msra.mxu0 0
          %1379 = vmatpush.bf16.msra.mxu0 0
          %1380 = vmatpush.bf16.msra.mxu0 %v1371
          %1381 = vmatmul.bf16.gmra.mxu0 %v1368
          %v1382 = vpop.f32.mrf.mxu0
          %v1383 = vadd.f32 0.0, %v1382
          %v1384 = vpop.f32.mrf.mxu0
          %v1385 = vadd.f32 0.0, %v1384
          %1386 = vdwg.mxu0
          %v1387 = vadd.f32 %v1246, %v1383
          %v1388 = vadd.f32 %v1247, %v1385
          %1389 = vrot.lane.b32.xlu0 %v833, 112
          %v1390 = vpop.permute.xlu0 %1389
          %1391 = vrot.lane.b32.xlu0 %v833, 80
          %v1392 = vpop.permute.xlu0 %1391
          %v1394 = vsel %vm836, %v1390, 0
          %v1397 = vsel %vm836, %v1392, 0
          %1399 = vmatpush.bf16.xpose.msra.mxu0 0
          %1400 = vmatpush.bf16.xpose.msra.mxu0 0
          %1401 = vmatpush.bf16.xpose.msra.mxu0 0
          %1402 = vmatpush.bf16.xpose.msra.mxu0 0
          %1403 = vmatpush.bf16.xpose.msra.mxu0 0
          %1404 = vmatpush.bf16.xpose.msra.mxu0 0
          %1405 = vmatpush.bf16.xpose.msra.mxu0 0
          %1406 = vmatpush.bf16.xpose.msra.mxu0 %v1397
          %1407 = vmatmul.bf16.gmra.mxu0 %v1394
          %v1408 = vpop.f32.mrf.mxu0
          %v1409 = vadd.f32 0.0, %v1408
          %v1410 = vpop.f32.mrf.mxu0
          %1411 = vdwg.mxu0
          %1412 = vrot.lane.b32.xlu0 %v858, 112
          %v1413 = vpop.permute.xlu0 %1412
          %1414 = vrot.lane.b32.xlu0 %v858, 80
          %v1415 = vpop.permute.xlu0 %1414
          %v1417 = vsel %vm836, %v1413, 0
          %v1420 = vsel %vm836, %v1415, 0
          %1422 = vmatpush.bf16.xpose.msra.mxu0 0
          %1423 = vmatpush.bf16.xpose.msra.mxu0 0
          %1424 = vmatpush.bf16.xpose.msra.mxu0 0
          %1425 = vmatpush.bf16.xpose.msra.mxu0 0
          %1426 = vmatpush.bf16.xpose.msra.mxu0 0
          %1427 = vmatpush.bf16.xpose.msra.mxu0 0
          %1428 = vmatpush.bf16.xpose.msra.mxu0 0
          %1429 = vmatpush.bf16.xpose.msra.mxu0 %v1420
          %1430 = vmatmul.bf16.gmra.mxu0 %v1417
          %v1431 = vpop.f32.mrf.mxu0
          %v1432 = vadd.f32 0.0, %v1431
          %v1433 = vpop.f32.mrf.mxu0
          %1434 = vdwg.mxu0
          %v1435 = vmul.f32 %v1409, 0.5
          %v1436 = vmul.f32 %v1432, 0.5
          %v1437 = vsel %vm882, %v1435, -inf
          %1438 = vmax.xlane.f32.xlu0 %v1437
          %v1439 = vpop.xlane.xlu0 %1438
          %v1440 = vsel %vm882, %v1436, -inf
          %1441 = vmax.xlane.f32.xlu0 %v1440
          %v1442 = vpop.xlane.xlu0 %1441
          %v1443 = vsub.f32 %v1435, %v1439
          %v1444 = vsub.f32 %v1436, %v1442
          %v1445 = vmul.f32 %v1443, 1.442695
          %v1446 = vpow.pop %v1445
          %v1447 = vmul.f32 %v1444, 1.442695
          %v1448 = vpow.pop %v1447
          %v1449 = vsel %vm882, %v1446, 0.0
          %1450 = vadd.xlane.f32.xlu0 %v1449
          %v1451 = vpop.xlane.xlu0 %1450
          %v1452 = vsel %vm882, %v1448, 0.0
          %1453 = vadd.xlane.f32.xlu0 %v1452
          %v1454 = vpop.xlane.xlu0 %1453
          %v1455 = vrcp.pop %v1451
          %v1456 = vrcp.pop %v1454
          %v1457 = vmul.f32 %v1446, %v1455
          %v1458 = vmul.f32 %v1448, %v1456
          %v1459 = vpack.c.bf16 %v1457, %v1457
          %v1460 = vpack.c.bf16 %v1458, %v1458
          %1461 = vrot.lane.b32.xlu0 %v833, 48
          %v1462 = vpop.permute.xlu0 %1461
          %v1464 = vsel %vm882, %v1459, 0
          %v1467 = vsel %vm912, %v1462, 0
          %1469 = vmatpush.bf16.msra.mxu0 0
          %1470 = vmatpush.bf16.msra.mxu0 0
          %1471 = vmatpush.bf16.msra.mxu0 0
          %1472 = vmatpush.bf16.msra.mxu0 0
          %1473 = vmatpush.bf16.msra.mxu0 0
          %1474 = vmatpush.bf16.msra.mxu0 0
          %1475 = vmatpush.bf16.msra.mxu0 0
          %1476 = vmatpush.bf16.msra.mxu0 %v1467
          %1477 = vmatmul.bf16.gmra.mxu0 %v1464
          %v1478 = vpop.f32.mrf.mxu0
          %v1479 = vadd.f32 0.0, %v1478
          %v1480 = vpop.f32.mrf.mxu0
          %1481 = vdwg.mxu0
          %1482 = vrot.lane.b32.xlu0 %v858, 48
          %v1483 = vpop.permute.xlu0 %1482
          %v1485 = vsel %vm882, %v1460, 0
          %v1488 = vsel %vm912, %v1483, 0
          %1490 = vmatpush.bf16.msra.mxu0 0
          %1491 = vmatpush.bf16.msra.mxu0 0
          %1492 = vmatpush.bf16.msra.mxu0 0
          %1493 = vmatpush.bf16.msra.mxu0 0
          %1494 = vmatpush.bf16.msra.mxu0 0
          %1495 = vmatpush.bf16.msra.mxu0 0
          %1496 = vmatpush.bf16.msra.mxu0 0
          %1497 = vmatpush.bf16.msra.mxu0 %v1488
          %1498 = vmatmul.bf16.gmra.mxu0 %v1485
          %v1499 = vpop.f32.mrf.mxu0
          %v1500 = vadd.f32 0.0, %v1499
          %v1501 = vpop.f32.mrf.mxu0
          %1502 = vdwg.mxu0
          %v1503 = vpack.c.bf16 %v1500, %v1479
          %v1505 = vsel %vm836, %v1503, 0
          %v1508 = vsel %vm1073, %v829, 0
          %1510 = vmatpush.bf16.msra.mxu0 0
          %1511 = vmatpush.bf16.msra.mxu0 0
          %1512 = vmatpush.bf16.msra.mxu0 0
          %1513 = vmatpush.bf16.msra.mxu0 0
          %1514 = vmatpush.bf16.msra.mxu0 0
          %1515 = vmatpush.bf16.msra.mxu0 0
          %1516 = vmatpush.bf16.msra.mxu0 0
          %1517 = vmatpush.bf16.msra.mxu0 %v1508
          %1518 = vmatmul.bf16.gmra.mxu0 %v1505
          %v1519 = vpop.f32.mrf.mxu0
          %v1520 = vadd.f32 0.0, %v1519
          %v1521 = vpop.f32.mrf.mxu0
          %v1522 = vadd.f32 0.0, %v1521
          %1523 = vdwg.mxu0
          %v1524 = vadd.f32 %v1387, %v1520
          %v1525 = vadd.f32 %v1388, %v1522
          %1526 = vrot.lane.b32.xlu0 %v833, 108
          %v1527 = vpop.permute.xlu0 %1526
          %1528 = vrot.lane.b32.xlu0 %v833, 76
          %v1529 = vpop.permute.xlu0 %1528
          %v1531 = vsel %vm836, %v1527, 0
          %v1534 = vsel %vm836, %v1529, 0
          %1536 = vmatpush.bf16.xpose.msra.mxu0 0
          %1537 = vmatpush.bf16.xpose.msra.mxu0 0
          %1538 = vmatpush.bf16.xpose.msra.mxu0 0
          %1539 = vmatpush.bf16.xpose.msra.mxu0 0
          %1540 = vmatpush.bf16.xpose.msra.mxu0 0
          %1541 = vmatpush.bf16.xpose.msra.mxu0 0
          %1542 = vmatpush.bf16.xpose.msra.mxu0 0
          %1543 = vmatpush.bf16.xpose.msra.mxu0 %v1534
          %1544 = vmatmul.bf16.gmra.mxu0 %v1531
          %v1545 = vpop.f32.mrf.mxu0
          %v1546 = vadd.f32 0.0, %v1545
          %v1547 = vpop.f32.mrf.mxu0
          %1548 = vdwg.mxu0
          %1549 = vrot.lane.b32.xlu0 %v858, 108
          %v1550 = vpop.permute.xlu0 %1549
          %1551 = vrot.lane.b32.xlu0 %v858, 76
          %v1552 = vpop.permute.xlu0 %1551
          %v1554 = vsel %vm836, %v1550, 0
          %v1557 = vsel %vm836, %v1552, 0
          %1559 = vmatpush.bf16.xpose.msra.mxu0 0
          %1560 = vmatpush.bf16.xpose.msra.mxu0 0
          %1561 = vmatpush.bf16.xpose.msra.mxu0 0
          %1562 = vmatpush.bf16.xpose.msra.mxu0 0
          %1563 = vmatpush.bf16.xpose.msra.mxu0 0
          %1564 = vmatpush.bf16.xpose.msra.mxu0 0
          %1565 = vmatpush.bf16.xpose.msra.mxu0 0
          %1566 = vmatpush.bf16.xpose.msra.mxu0 %v1557
          %1567 = vmatmul.bf16.gmra.mxu0 %v1554
          %v1568 = vpop.f32.mrf.mxu0
          %v1569 = vadd.f32 0.0, %v1568
          %v1570 = vpop.f32.mrf.mxu0
          %1571 = vdwg.mxu0
          %v1572 = vmul.f32 %v1546, 0.5
          %v1573 = vmul.f32 %v1569, 0.5
          %v1574 = vsel %vm882, %v1572, -inf
          %1575 = vmax.xlane.f32.xlu0 %v1574
          %v1576 = vpop.xlane.xlu0 %1575
          %v1577 = vsel %vm882, %v1573, -inf
          %1578 = vmax.xlane.f32.xlu0 %v1577
          %v1579 = vpop.xlane.xlu0 %1578
          %v1580 = vsub.f32 %v1572, %v1576
          %v1581 = vsub.f32 %v1573, %v1579
          %v1582 = vmul.f32 %v1580, 1.442695
          %v1583 = vpow.pop %v1582
          %v1584 = vmul.f32 %v1581, 1.442695
          %v1585 = vpow.pop %v1584
          %v1586 = vsel %vm882, %v1583, 0.0
          %1587 = vadd.xlane.f32.xlu0 %v1586
          %v1588 = vpop.xlane.xlu0 %1587
          %v1589 = vsel %vm882, %v1585, 0.0
          %1590 = vadd.xlane.f32.xlu0 %v1589
          %v1591 = vpop.xlane.xlu0 %1590
          %v1592 = vrcp.pop %v1588
          %v1593 = vrcp.pop %v1591
          %v1594 = vmul.f32 %v1583, %v1592
          %v1595 = vmul.f32 %v1585, %v1593
          %v1596 = vpack.c.bf16 %v1594, %v1594
          %v1597 = vpack.c.bf16 %v1595, %v1595
          %1598 = vrot.lane.b32.xlu0 %v833, 44
          %v1599 = vpop.permute.xlu0 %1598
          %v1601 = vsel %vm882, %v1596, 0
          %v1604 = vsel %vm912, %v1599, 0
          %1606 = vmatpush.bf16.msra.mxu0 0
          %1607 = vmatpush.bf16.msra.mxu0 0
          %1608 = vmatpush.bf16.msra.mxu0 0
          %1609 = vmatpush.bf16.msra.mxu0 0
          %1610 = vmatpush.bf16.msra.mxu0 0
          %1611 = vmatpush.bf16.msra.mxu0 0
          %1612 = vmatpush.bf16.msra.mxu0 0
          %1613 = vmatpush.bf16.msra.mxu0 %v1604
          %1614 = vmatmul.bf16.gmra.mxu0 %v1601
          %v1615 = vpop.f32.mrf.mxu0
          %v1616 = vadd.f32 0.0, %v1615
          %v1617 = vpop.f32.mrf.mxu0
          %1618 = vdwg.mxu0
          %1619 = vrot.lane.b32.xlu0 %v858, 44
          %v1620 = vpop.permute.xlu0 %1619
          %v1622 = vsel %vm882, %v1597, 0
          %v1625 = vsel %vm912, %v1620, 0
          %1627 = vmatpush.bf16.msra.mxu0 0
          %1628 = vmatpush.bf16.msra.mxu0 0
          %1629 = vmatpush.bf16.msra.mxu0 0
          %1630 = vmatpush.bf16.msra.mxu0 0
          %1631 = vmatpush.bf16.msra.mxu0 0
          %1632 = vmatpush.bf16.msra.mxu0 0
          %1633 = vmatpush.bf16.msra.mxu0 0
          %1634 = vmatpush.bf16.msra.mxu0 %v1625
          %1635 = vmatmul.bf16.gmra.mxu0 %v1622
          %v1636 = vpop.f32.mrf.mxu0
          %v1637 = vadd.f32 0.0, %v1636
          %v1638 = vpop.f32.mrf.mxu0
          %1639 = vdwg.mxu0
          %v1640 = vpack.c.bf16 %v1637, %v1616
          %v1642 = vunpack.c.l.b16 %v829
          %v1643 = vpack.c.b16 %v1642, %v1642
          %v1644 = vrot.slane %v1643, 2
          %v1646 = vsel %vm836, %v1640, 0
          %v1649 = vsel %vm1073, %v1644, 0
          %1651 = vmatpush.bf16.msra.mxu0 0
          %1652 = vmatpush.bf16.msra.mxu0 0
          %1653 = vmatpush.bf16.msra.mxu0 0
          %1654 = vmatpush.bf16.msra.mxu0 0
          %1655 = vmatpush.bf16.msra.mxu0 0
          %1656 = vmatpush.bf16.msra.mxu0 0
          %1657 = vmatpush.bf16.msra.mxu0 0
          %1658 = vmatpush.bf16.msra.mxu0 %v1649
          %1659 = vmatmul.bf16.gmra.mxu0 %v1646
          %v1660 = vpop.f32.mrf.mxu0
          %v1661 = vadd.f32 0.0, %v1660
          %v1662 = vpop.f32.mrf.mxu0
          %v1663 = vadd.f32 0.0, %v1662
          %1664 = vdwg.mxu0
          %v1665 = vadd.f32 %v1524, %v1661
          %v1666 = vadd.f32 %v1525, %v1663
          %1667 = vrot.lane.b32.xlu0 %v833, 104
          %v1668 = vpop.permute.xlu0 %1667
          %1669 = vrot.lane.b32.xlu0 %v833, 72
          %v1670 = vpop.permute.xlu0 %1669
          %v1672 = vsel %vm836, %v1668, 0
          %v1675 = vsel %vm836, %v1670, 0
          %1677 = vmatpush.bf16.xpose.msra.mxu0 0
          %1678 = vmatpush.bf16.xpose.msra.mxu0 0
          %1679 = vmatpush.bf16.xpose.msra.mxu0 0
          %1680 = vmatpush.bf16.xpose.msra.mxu0 0
          %1681 = vmatpush.bf16.xpose.msra.mxu0 0
          %1682 = vmatpush.bf16.xpose.msra.mxu0 0
          %1683 = vmatpush.bf16.xpose.msra.mxu0 0
          %1684 = vmatpush.bf16.xpose.msra.mxu0 %v1675
          %1685 = vmatmul.bf16.gmra.mxu0 %v1672
          %v1686 = vpop.f32.mrf.mxu0
          %v1687 = vadd.f32 0.0, %v1686
          %v1688 = vpop.f32.mrf.mxu0
          %1689 = vdwg.mxu0
          %1690 = vrot.lane.b32.xlu0 %v858, 104
          %v1691 = vpop.permute.xlu0 %1690
          %1692 = vrot.lane.b32.xlu0 %v858, 72
          %v1693 = vpop.permute.xlu0 %1692
          %v1695 = vsel %vm836, %v1691, 0
          %v1698 = vsel %vm836, %v1693, 0
          %1700 = vmatpush.bf16.xpose.msra.mxu0 0
          %1701 = vmatpush.bf16.xpose.msra.mxu0 0
          %1702 = vmatpush.bf16.xpose.msra.mxu0 0
          %1703 = vmatpush.bf16.xpose.msra.mxu0 0
          %1704 = vmatpush.bf16.xpose.msra.mxu0 0
          %1705 = vmatpush.bf16.xpose.msra.mxu0 0
          %1706 = vmatpush.bf16.xpose.msra.mxu0 0
          %1707 = vmatpush.bf16.xpose.msra.mxu0 %v1698
          %1708 = vmatmul.bf16.gmra.mxu0 %v1695
          %v1709 = vpop.f32.mrf.mxu0
          %v1710 = vadd.f32 0.0, %v1709
          %v1711 = vpop.f32.mrf.mxu0
          %1712 = vdwg.mxu0
          %v1713 = vmul.f32 %v1687, 0.5
          %v1714 = vmul.f32 %v1710, 0.5
          %v1715 = vsel %vm882, %v1713, -inf
          %1716 = vmax.xlane.f32.xlu0 %v1715
          %v1717 = vpop.xlane.xlu0 %1716
          %v1718 = vsel %vm882, %v1714, -inf
          %1719 = vmax.xlane.f32.xlu0 %v1718
          %v1720 = vpop.xlane.xlu0 %1719
          %v1721 = vsub.f32 %v1713, %v1717
          %v1722 = vsub.f32 %v1714, %v1720
          %v1723 = vmul.f32 %v1721, 1.442695
          %v1724 = vpow.pop %v1723
          %v1725 = vmul.f32 %v1722, 1.442695
          %v1726 = vpow.pop %v1725
          %v1727 = vsel %vm882, %v1724, 0.0
          %1728 = vadd.xlane.f32.xlu0 %v1727
          %v1729 = vpop.xlane.xlu0 %1728
          %v1730 = vsel %vm882, %v1726, 0.0
          %1731 = vadd.xlane.f32.xlu0 %v1730
          %v1732 = vpop.xlane.xlu0 %1731
          %v1733 = vrcp.pop %v1729
          %v1734 = vrcp.pop %v1732
          %v1735 = vmul.f32 %v1724, %v1733
          %v1736 = vmul.f32 %v1726, %v1734
          %v1737 = vpack.c.bf16 %v1735, %v1735
          %v1738 = vpack.c.bf16 %v1736, %v1736
          %1739 = vrot.lane.b32.xlu0 %v833, 40
          %v1740 = vpop.permute.xlu0 %1739
          %v1742 = vsel %vm882, %v1737, 0
          %v1745 = vsel %vm912, %v1740, 0
          %1747 = vmatpush.bf16.msra.mxu0 0
          %1748 = vmatpush.bf16.msra.mxu0 0
          %1749 = vmatpush.bf16.msra.mxu0 0
          %1750 = vmatpush.bf16.msra.mxu0 0
          %1751 = vmatpush.bf16.msra.mxu0 0
          %1752 = vmatpush.bf16.msra.mxu0 0
          %1753 = vmatpush.bf16.msra.mxu0 0
          %1754 = vmatpush.bf16.msra.mxu0 %v1745
          %1755 = vmatmul.bf16.gmra.mxu0 %v1742
          %v1756 = vpop.f32.mrf.mxu0
          %v1757 = vadd.f32 0.0, %v1756
          %v1758 = vpop.f32.mrf.mxu0
          %1759 = vdwg.mxu0
          %1760 = vrot.lane.b32.xlu0 %v858, 40
          %v1761 = vpop.permute.xlu0 %1760
          %v1763 = vsel %vm882, %v1738, 0
          %v1766 = vsel %vm912, %v1761, 0
          %1768 = vmatpush.bf16.msra.mxu0 0
          %1769 = vmatpush.bf16.msra.mxu0 0
          %1770 = vmatpush.bf16.msra.mxu0 0
          %1771 = vmatpush.bf16.msra.mxu0 0
          %1772 = vmatpush.bf16.msra.mxu0 0
          %1773 = vmatpush.bf16.msra.mxu0 0
          %1774 = vmatpush.bf16.msra.mxu0 0
          %1775 = vmatpush.bf16.msra.mxu0 %v1766
          %1776 = vmatmul.bf16.gmra.mxu0 %v1763
          %v1777 = vpop.f32.mrf.mxu0
          %v1778 = vadd.f32 0.0, %v1777
          %v1779 = vpop.f32.mrf.mxu0
          %1780 = vdwg.mxu0
          %v1781 = vpack.c.bf16 %v1778, %v1757
          %v1783 = vsel %vm836, %v1781, 0
          %v1786 = vsel %vm1073, %v830, 0
          %1788 = vmatpush.bf16.msra.mxu0 0
          %1789 = vmatpush.bf16.msra.mxu0 0
          %1790 = vmatpush.bf16.msra.mxu0 0
          %1791 = vmatpush.bf16.msra.mxu0 0
          %1792 = vmatpush.bf16.msra.mxu0 0
          %1793 = vmatpush.bf16.msra.mxu0 0
          %1794 = vmatpush.bf16.msra.mxu0 0
          %1795 = vmatpush.bf16.msra.mxu0 %v1786
          %1796 = vmatmul.bf16.gmra.mxu0 %v1783
          %v1797 = vpop.f32.mrf.mxu0
          %v1798 = vadd.f32 0.0, %v1797
          %v1799 = vpop.f32.mrf.mxu0
          %v1800 = vadd.f32 0.0, %v1799
          %1801 = vdwg.mxu0
          %v1802 = vadd.f32 %v1665, %v1798
          %v1803 = vadd.f32 %v1666, %v1800
          %1804 = vrot.lane.b32.xlu0 %v833, 100
          %v1805 = vpop.permute.xlu0 %1804
          %1806 = vrot.lane.b32.xlu0 %v833, 68
          %v1807 = vpop.permute.xlu0 %1806
          %v1809 = vsel %vm836, %v1805, 0
          %v1812 = vsel %vm836, %v1807, 0
          %1814 = vmatpush.bf16.xpose.msra.mxu0 0
          %1815 = vmatpush.bf16.xpose.msra.mxu0 0
          %1816 = vmatpush.bf16.xpose.msra.mxu0 0
          %1817 = vmatpush.bf16.xpose.msra.mxu0 0
          %1818 = vmatpush.bf16.xpose.msra.mxu0 0
          %1819 = vmatpush.bf16.xpose.msra.mxu0 0
          %1820 = vmatpush.bf16.xpose.msra.mxu0 0
          %1821 = vmatpush.bf16.xpose.msra.mxu0 %v1812
          %1822 = vmatmul.bf16.gmra.mxu0 %v1809
          %v1823 = vpop.f32.mrf.mxu0
          %v1824 = vadd.f32 0.0, %v1823
          %v1825 = vpop.f32.mrf.mxu0
          %1826 = vdwg.mxu0
          %1827 = vrot.lane.b32.xlu0 %v858, 100
          %v1828 = vpop.permute.xlu0 %1827
          %1829 = vrot.lane.b32.xlu0 %v858, 68
          %v1830 = vpop.permute.xlu0 %1829
          %v1832 = vsel %vm836, %v1828, 0
          %v1835 = vsel %vm836, %v1830, 0
          %1837 = vmatpush.bf16.xpose.msra.mxu0 0
          %1838 = vmatpush.bf16.xpose.msra.mxu0 0
          %1839 = vmatpush.bf16.xpose.msra.mxu0 0
          %1840 = vmatpush.bf16.xpose.msra.mxu0 0
          %1841 = vmatpush.bf16.xpose.msra.mxu0 0
          %1842 = vmatpush.bf16.xpose.msra.mxu0 0
          %1843 = vmatpush.bf16.xpose.msra.mxu0 0
          %1844 = vmatpush.bf16.xpose.msra.mxu0 %v1835
          %1845 = vmatmul.bf16.gmra.mxu0 %v1832
          %v1846 = vpop.f32.mrf.mxu0
          %v1847 = vadd.f32 0.0, %v1846
          %v1848 = vpop.f32.mrf.mxu0
          %1849 = vdwg.mxu0
          %v1850 = vmul.f32 %v1824, 0.5
          %v1851 = vmul.f32 %v1847, 0.5
          %v1852 = vsel %vm882, %v1850, -inf
          %1853 = vmax.xlane.f32.xlu0 %v1852
          %v1854 = vpop.xlane.xlu0 %1853
          %v1855 = vsel %vm882, %v1851, -inf
          %1856 = vmax.xlane.f32.xlu0 %v1855
          %v1857 = vpop.xlane.xlu0 %1856
          %v1858 = vsub.f32 %v1850, %v1854
          %v1859 = vsub.f32 %v1851, %v1857
          %v1860 = vmul.f32 %v1858, 1.442695
          %v1861 = vpow.pop %v1860
          %v1862 = vmul.f32 %v1859, 1.442695
          %v1863 = vpow.pop %v1862
          %v1864 = vsel %vm882, %v1861, 0.0
          %1865 = vadd.xlane.f32.xlu0 %v1864
          %v1866 = vpop.xlane.xlu0 %1865
          %v1867 = vsel %vm882, %v1863, 0.0
          %1868 = vadd.xlane.f32.xlu0 %v1867
          %v1869 = vpop.xlane.xlu0 %1868
          %v1870 = vrcp.pop %v1866
          %v1871 = vrcp.pop %v1869
          %v1872 = vmul.f32 %v1861, %v1870
          %v1873 = vmul.f32 %v1863, %v1871
          %v1874 = vpack.c.bf16 %v1872, %v1872
          %v1875 = vpack.c.bf16 %v1873, %v1873
          %1876 = vrot.lane.b32.xlu0 %v833, 36
          %v1877 = vpop.permute.xlu0 %1876
          %v1879 = vsel %vm882, %v1874, 0
          %v1882 = vsel %vm912, %v1877, 0
          %1884 = vmatpush.bf16.msra.mxu0 0
          %1885 = vmatpush.bf16.msra.mxu0 0
          %1886 = vmatpush.bf16.msra.mxu0 0
          %1887 = vmatpush.bf16.msra.mxu0 0
          %1888 = vmatpush.bf16.msra.mxu0 0
          %1889 = vmatpush.bf16.msra.mxu0 0
          %1890 = vmatpush.bf16.msra.mxu0 0
          %1891 = vmatpush.bf16.msra.mxu0 %v1882
          %1892 = vmatmul.bf16.gmra.mxu0 %v1879
          %v1893 = vpop.f32.mrf.mxu0
          %v1894 = vadd.f32 0.0, %v1893
          %v1895 = vpop.f32.mrf.mxu0
          %1896 = vdwg.mxu0
          %1897 = vrot.lane.b32.xlu0 %v858, 36
          %v1898 = vpop.permute.xlu0 %1897
          %v1900 = vsel %vm882, %v1875, 0
          %v1903 = vsel %vm912, %v1898, 0
          %1905 = vmatpush.bf16.msra.mxu0 0
          %1906 = vmatpush.bf16.msra.mxu0 0
          %1907 = vmatpush.bf16.msra.mxu0 0
          %1908 = vmatpush.bf16.msra.mxu0 0
          %1909 = vmatpush.bf16.msra.mxu0 0
          %1910 = vmatpush.bf16.msra.mxu0 0
          %1911 = vmatpush.bf16.msra.mxu0 0
          %1912 = vmatpush.bf16.msra.mxu0 %v1903
          %1913 = vmatmul.bf16.gmra.mxu0 %v1900
          %v1914 = vpop.f32.mrf.mxu0
          %v1915 = vadd.f32 0.0, %v1914
          %v1916 = vpop.f32.mrf.mxu0
          %1917 = vdwg.mxu0
          %v1918 = vpack.c.bf16 %v1915, %v1894
          %v1920 = vunpack.c.l.b16 %v830
          %v1921 = vpack.c.b16 %v1920, %v1920
          %v1922 = vrot.slane %v1921, 2
          %v1924 = vsel %vm836, %v1918, 0
          %v1927 = vsel %vm1073, %v1922, 0
          %1929 = vmatpush.bf16.msra.mxu0 0
          %1930 = vmatpush.bf16.msra.mxu0 0
          %1931 = vmatpush.bf16.msra.mxu0 0
          %1932 = vmatpush.bf16.msra.mxu0 0
          %1933 = vmatpush.bf16.msra.mxu0 0
          %1934 = vmatpush.bf16.msra.mxu0 0
          %1935 = vmatpush.bf16.msra.mxu0 0
          %1936 = vmatpush.bf16.msra.mxu0 %v1927
          %1937 = vmatmul.bf16.gmra.mxu0 %v1924
          %v1938 = vpop.f32.mrf.mxu0
          %v1939 = vadd.f32 0.0, %v1938
          %v1940 = vpop.f32.mrf.mxu0
          %v1941 = vadd.f32 0.0, %v1940
          %1942 = vdwg.mxu0
          %v1943 = vadd.f32 %v1802, %v1939
          %v1944 = vadd.f32 %v1803, %v1941
          %s1945 = scalar_lea.vmem %s7, %s773
          %v1946 = vld [vmem:[%s1945] sm:$0x1]
          %v1948 = vperm.slane %v1946, 0
          %v1950 = vadd.f32 %v1943, %v1948
          %v1951 = vadd.f32 %v1944, %v1948
          %v1952 = vadd.f32 %v1950, %v778
          %v1953 = vadd.f32 %v1951, %v779
          %v1954 = vpack.c.bf16 %v1953, %v1952
          %s1955 = smul.addr %s781, 4
          %s1956 = scalar_lea.vmem [#allocation11], %s1955
          %v1957 = vld [vmem:[%s1956] sm:$0xf]
          %v1958 = vld [vmem:[%s1956 + $0x4] sm:$0xf]
          %v1959 = vld [vmem:[%s1956 + $0x8] sm:$0xf]
          %v1960 = vld [vmem:[%s1956 + $0xc] sm:$0xf]
          %s1961 = scalar_lea.vmem %s9, %s773
          %v1962 = vld [vmem:[%s1961] sm:$0x1]
          %v1964 = vperm.slane %v1962, 0
          %v1970 = vunpack.c.l.b16 %v1957
          %v1971 = vunpack.c.l.b16 %v1958
          %v1972 = vunpack.c.l.b16 %v1959
          %v1973 = vunpack.c.l.b16 %v1960
          %v1974 = vpack.c.b16 %v1971, %v1970
          %v1975 = vpack.c.b16 %v1973, %v1972
          %v1979 = vsel %vm805, %v1954, 0
          %1981 = vmatpush.bf16.msra.mxu0 0
          %1982 = vmatpush.bf16.msra.mxu0 0
          %1983 = vmatpush.bf16.msra.mxu0 0
          %1984 = vmatpush.bf16.msra.mxu0 0
          %1985 = vmatpush.bf16.msra.mxu0 0
          %1986 = vmatpush.bf16.msra.mxu0 0
          %1987 = vmatpush.bf16.msra.mxu0 %v1975
          %1988 = vmatpush.bf16.msra.mxu0 %v1974
          %1989 = vmatmul.bf16.gmra.mxu0 %v1979
          %v1990 = vpop.f32.mrf.mxu0
          %v1991 = vadd.f32 %v1964, %v1990
          %v1992 = vpop.f32.mrf.mxu0
          %v1993 = vadd.f32 %v1964, %v1992
          %1994 = vdwg.mxu0
          %v1995 = vadd.f32 %v1991, %v1952
          %v1996 = vadd.f32 %v1993, %v1953
          %s1997 = scalar_lea.vmem %s10, %s773
          %v1998 = vld [vmem:[%s1997] sm:$0x1]
          %s1999 = scalar_lea.vmem %s11, %s773
          %v2000 = vld [vmem:[%s1999] sm:$0x1]
          %v2001 = vsel %vm805, %v1995, 0.0
          %2002 = vadd.xlane.f32.xlu0 %v2001
          %v2003 = vpop.xlane.xlu0 %2002
          %v2004 = vsel %vm805, %v1996, 0.0
          %2005 = vadd.xlane.f32.xlu0 %v2004
          %v2006 = vpop.xlane.xlu0 %2005
          %v2007 = vrcp.pop 32.0
          %v2008 = vmul.f32 32.0, %v2007
          %v2009 = vsub.f32 1.0, %v2008
          %v2010 = vmul.f32 %v2007, %v2009
          %v2011 = vadd.f32 %v2007, %v2010
          %vm2012 = vweird.f32 %v2007
          %v2013 = vsel %vm2012, %v2007, %v2011
          %v2014 = vmul.f32 %v2003, %v2013
          %v2015 = vmul.f32 %v2006, %v2013
          %v2016 = vsub.f32 %v1995, %v2014
          %v2017 = vsub.f32 %v1996, %v2015
          %v2018 = vmul.f32 %v2016, %v2016
          %v2019 = vmul.f32 %v2017, %v2017
          %v2020 = vsel %vm805, %v2018, 0.0
          %2021 = vadd.xlane.f32.xlu0 %v2020
          %v2022 = vpop.xlane.xlu0 %2021
          %v2023 = vsel %vm805, %v2019, 0.0
          %2024 = vadd.xlane.f32.xlu0 %v2023
          %v2025 = vpop.xlane.xlu0 %2024
          %v2026 = vmul.f32 %v2022, %v2013
          %v2027 = vmul.f32 %v2025, %v2013
          %v2028 = vadd.f32 %v2026, 1e-05
          %v2029 = vadd.f32 %v2027, 1e-05
          %v2030 = vrsqrt.pop %v2028
          %v2031 = vmul.f32 %v2030, %v2028
          %v2032 = vmul.f32 %v2031, %v2030
          %v2033 = vmul.f32 0.5, %v2032
          %v2034 = vsub.f32 1.5, %v2033
          %v2035 = vmul.f32 %v2030, %v2034
          %vm2036 = vweird.f32 %v2028
          %vm2037 = vweird.f32 %v2030
          %vm2038 = vmor %vm2036, %vm2037
          %v2039 = vsel %vm2038, %v2030, %v2035
          %v2040 = vrsqrt.pop %v2029
          %v2041 = vmul.f32 %v2040, %v2029
          %v2042 = vmul.f32 %v2041, %v2040
          %v2043 = vmul.f32 0.5, %v2042
          %v2044 = vsub.f32 1.5, %v2043
          %v2045 = vmul.f32 %v2040, %v2044
          %vm2046 = vweird.f32 %v2029
          %vm2047 = vweird.f32 %v2040
          %vm2048 = vmor %vm2046, %vm2047
          %v2049 = vsel %vm2048, %v2040, %v2045
          %v2050 = vmul.f32 %v2016, %v2039
          %v2051 = vmul.f32 %v2017, %v2049
          %v2053 = vperm.slane %v1998, 0
          %v2055 = vmul.f32 %v2050, %v2053
          %v2056 = vmul.f32 %v2051, %v2053
          %v2058 = vperm.slane %v2000, 0
          %v2060 = vadd.f32 %v2055, %v2058
          %v2061 = vadd.f32 %v2056, %v2058
        $region125: #{tpu_custom_call.1} parent=99 // loop_footer
          %s777 = sadd.s32 1, %s773
        $region126: #{tpu_custom_call.1} parent=99 // loop_footer_branch
          %772 = sbr.rel target = $region122
        $region127: #{tpu_custom_call.1} parent=99 // loop_exit
          _
        %v2062 = vld [vmem:[%s12] sm:$0x1]
        %v2063 = vld [vmem:[%s13] sm:$0x1]
        %vm2064 = vcmask 261120
        %v2065 = vsel %vm2064, %v778, 0.0
        %2066 = vadd.xlane.f32.xlu0 %v2065
        %v2067 = vpop.xlane.xlu0 %2066
        %v2068 = vsel %vm2064, %v779, 0.0
        %2069 = vadd.xlane.f32.xlu0 %v2068
        %v2070 = vpop.xlane.xlu0 %2069
        %v2071 = vrcp.pop 32.0
        %v2072 = vmul.f32 32.0, %v2071
        %v2073 = vsub.f32 1.0, %v2072
        %v2074 = vmul.f32 %v2071, %v2073
        %v2075 = vadd.f32 %v2071, %v2074
        %vm2076 = vweird.f32 %v2071
        %v2077 = vsel %vm2076, %v2071, %v2075
        %v2078 = vmul.f32 %v2067, %v2077
        %v2079 = vmul.f32 %v2070, %v2077
        %v2080 = vsub.f32 %v778, %v2078
        %v2081 = vsub.f32 %v779, %v2079
        %v2082 = vmul.f32 %v2080, %v2080
        %v2083 = vmul.f32 %v2081, %v2081
        %v2084 = vsel %vm2064, %v2082, 0.0
        %2085 = vadd.xlane.f32.xlu0 %v2084
        %v2086 = vpop.xlane.xlu0 %2085
        %v2087 = vsel %vm2064, %v2083, 0.0
        %2088 = vadd.xlane.f32.xlu0 %v2087
        %v2089 = vpop.xlane.xlu0 %2088
        %v2090 = vmul.f32 %v2086, %v2077
        %v2091 = vmul.f32 %v2089, %v2077
        %v2092 = vadd.f32 %v2090, 1e-05
        %v2093 = vadd.f32 %v2091, 1e-05
        %v2094 = vrsqrt.pop %v2092
        %v2095 = vmul.f32 %v2094, %v2092
        %v2096 = vmul.f32 %v2095, %v2094
        %v2097 = vmul.f32 0.5, %v2096
        %v2098 = vsub.f32 1.5, %v2097
        %v2099 = vmul.f32 %v2094, %v2098
        %vm2100 = vweird.f32 %v2092
        %vm2101 = vweird.f32 %v2094
        %vm2102 = vmor %vm2100, %vm2101
        %v2103 = vsel %vm2102, %v2094, %v2099
        %v2104 = vrsqrt.pop %v2093
        %v2105 = vmul.f32 %v2104, %v2093
        %v2106 = vmul.f32 %v2105, %v2104
        %v2107 = vmul.f32 0.5, %v2106
        %v2108 = vsub.f32 1.5, %v2107
        %v2109 = vmul.f32 %v2104, %v2108
        %vm2110 = vweird.f32 %v2093
        %vm2111 = vweird.f32 %v2104
        %vm2112 = vmor %vm2110, %vm2111
        %v2113 = vsel %vm2112, %v2104, %v2109
        %v2114 = vmul.f32 %v2080, %v2103
        %v2115 = vmul.f32 %v2081, %v2113
        %v2117 = vperm.slane %v2062, 0
        %v2119 = vmul.f32 %v2114, %v2117
        %v2120 = vmul.f32 %v2115, %v2117
        %v2122 = vperm.slane %v2063, 0
        %v2124 = vadd.f32 %v2119, %v2122
        %v2125 = vadd.f32 %v2120, %v2122
        %v2126 = vpack.c.bf16 %v2125, %v2124
        %v2127 = vld [vmem:[%s14] sm:$0xf]
        %v2128 = vld [vmem:[%s14 + $0x4] sm:$0xf]
        %v2129 = vld [vmem:[%s14 + $0x8] sm:$0xf]
        %v2130 = vld [vmem:[%s14 + $0xc] sm:$0xf]
        %v2131 = vld [vmem:[%s15] sm:$0x1]
        %v2133 = vperm.slane %v2131, 0
        %v2139 = vunpack.c.l.b16 %v2127
        %v2140 = vunpack.c.l.b16 %v2128
        %v2141 = vunpack.c.l.b16 %v2129
        %v2142 = vunpack.c.l.b16 %v2130
        %v2143 = vpack.c.b16 %v2140, %v2139
        %v2144 = vpack.c.b16 %v2142, %v2141
        %v2148 = vsel %vm2064, %v2126, 0
        %2150 = vmatpush.bf16.msra.mxu0 0
        %2151 = vmatpush.bf16.msra.mxu0 0
        %2152 = vmatpush.bf16.msra.mxu0 0
        %2153 = vmatpush.bf16.msra.mxu0 0
        %2154 = vmatpush.bf16.msra.mxu0 0
        %2155 = vmatpush.bf16.msra.mxu0 0
        %2156 = vmatpush.bf16.msra.mxu0 %v2144
        %2157 = vmatpush.bf16.msra.mxu0 %v2143
        %2158 = vmatmul.bf16.gmra.mxu0 %v2148
        %v2159 = vpop.f32.mrf.mxu0
        %v2160 = vadd.f32 %v2133, %v2159
        %v2161 = vpop.f32.mrf.mxu0
        %v2162 = vadd.f32 %v2133, %v2161
        %2163 = vdwg.mxu0
        %v2164 = vmax.f32 %v2160, 0.0
        %v2165 = vmax.f32 %v2162, 0.0
        %v2166 = vld [vmem:[%s16] sm:$0x1]
        %v2167 = vld [vmem:[%s17] sm:$0x1]
        %v2168 = vsel %vm2064, %v2164, 0.0
        %2169 = vadd.xlane.f32.xlu0 %v2168
        %v2170 = vpop.xlane.xlu0 %2169
        %v2171 = vsel %vm2064, %v2165, 0.0
        %2172 = vadd.xlane.f32.xlu0 %v2171
        %v2173 = vpop.xlane.xlu0 %2172
        %v2174 = vmul.f32 %v2170, %v2077
        %v2175 = vmul.f32 %v2173, %v2077
        %v2176 = vsub.f32 %v2164, %v2174
        %v2177 = vsub.f32 %v2165, %v2175
        %v2178 = vmul.f32 %v2176, %v2176
        %v2179 = vmul.f32 %v2177, %v2177
        %v2180 = vsel %vm2064, %v2178, 0.0
        %2181 = vadd.xlane.f32.xlu0 %v2180
        %v2182 = vpop.xlane.xlu0 %2181
        %v2183 = vsel %vm2064, %v2179, 0.0
        %2184 = vadd.xlane.f32.xlu0 %v2183
        %v2185 = vpop.xlane.xlu0 %2184
        %v2186 = vmul.f32 %v2182, %v2077
        %v2187 = vmul.f32 %v2185, %v2077
        %v2188 = vadd.f32 %v2186, 1e-05
        %v2189 = vadd.f32 %v2187, 1e-05
        %v2190 = vrsqrt.pop %v2188
        %v2191 = vmul.f32 %v2190, %v2188
        %v2192 = vmul.f32 %v2191, %v2190
        %v2193 = vmul.f32 0.5, %v2192
        %v2194 = vsub.f32 1.5, %v2193
        %v2195 = vmul.f32 %v2190, %v2194
        %vm2196 = vweird.f32 %v2188
        %vm2197 = vweird.f32 %v2190
        %vm2198 = vmor %vm2196, %vm2197
        %v2199 = vsel %vm2198, %v2190, %v2195
        %v2200 = vrsqrt.pop %v2189
        %v2201 = vmul.f32 %v2200, %v2189
        %v2202 = vmul.f32 %v2201, %v2200
        %v2203 = vmul.f32 0.5, %v2202
        %v2204 = vsub.f32 1.5, %v2203
        %v2205 = vmul.f32 %v2200, %v2204
        %vm2206 = vweird.f32 %v2189
        %vm2207 = vweird.f32 %v2200
        %vm2208 = vmor %vm2206, %vm2207
        %v2209 = vsel %vm2208, %v2200, %v2205
        %v2210 = vmul.f32 %v2176, %v2199
        %v2211 = vmul.f32 %v2177, %v2209
        %v2213 = vperm.slane %v2166, 0
        %v2215 = vmul.f32 %v2210, %v2213
        %v2216 = vmul.f32 %v2211, %v2213
        %v2218 = vperm.slane %v2167, 0
        %v2220 = vadd.f32 %v2215, %v2218
        %v2221 = vadd.f32 %v2216, %v2218
        %v2222 = vld [vmem:[%s18] sm:$0x1]
        %v2223 = vpack.c.bf16 %v2221, %v2220
        %v2224 = vld [vmem:[#allocation2] sm:$0x1]
        %2226 = vset.pattern.permute.xlu0 0
        %2227 = vperm.xlu0 %2226, %v2224
        %v2228 = vpop.permute.xlu0 %2227
        %v2230 = vperm.slane %v2228, 0
        %v2232 = vsel %vm2064, %v2222, 0
        %v2235 = vsel %vm2064, %v2223, 0
        %2237 = vmatpush.bf16.xpose.msra.mxu0 0
        %2238 = vmatpush.bf16.xpose.msra.mxu0 0
        %2239 = vmatpush.bf16.xpose.msra.mxu0 0
        %2240 = vmatpush.bf16.xpose.msra.mxu0 0
        %2241 = vmatpush.bf16.xpose.msra.mxu0 0
        %2242 = vmatpush.bf16.xpose.msra.mxu0 0
        %2243 = vmatpush.bf16.xpose.msra.mxu0 0
        %2244 = vmatpush.bf16.xpose.msra.mxu0 %v2235
        %2245 = vmatmul.bf16.gmra.mxu0 %v2232
        %v2246 = vpop.f32.mrf.mxu0
        %v2247 = vadd.f32 %v2230, %v2246
        %v2248 = vpop.f32.mrf.mxu0
        %2249 = vdwg.mxu0
        %v2250 = vsub.f32 0.0, %v2247
        %v2251 = vmul.f32 %v2250, 1.442695
        %v2252 = vpow.pop %v2251
        %v2253 = vadd.f32 %v2252, 1.0
        %v2254 = vrcp.pop %v2253
        %v2255 = vmul.f32 %v2253, %v2254
        %v2256 = vsub.f32 1.0, %v2255
        %v2257 = vmul.f32 %v2254, %v2256
        %v2258 = vadd.f32 %v2254, %v2257
        %vm2259 = vweird.f32 %v2253
        %vm2260 = vweird.f32 %v2254
        %vm2261 = vmor %vm2259, %vm2260
        %v2262 = vsel %vm2261, %v2254, %v2258
        %v2263 = vand.u32 2147483647, %v2253
        %vm2264 = vcmp.eq.f32.partialorder %v2263, 8.507059e+37
        %v2265 = vand.u32 %v2253, 2147483648
        %v2266 = vor.u32 1.1754944e-38, %v2265
        %v2267 = vsel %vm2264, %v2266, %v2262
        %v2268 = vmul.f32 1.0, %v2267
        %vm2269 = vcmask 122880
        %2270 = vst.msk [vmem:[%s721] sm:$0x1] %vm2269, %v2268
        %s2271 = sand.u32 %s477, 1
        %s2272 = scalar_lea.sflag [#allocation5], %s2271
        %s2273 = sand.u32 %s477, 1
        %s2274 = scalar_lea.vmem [#allocation12], %s2273
        // Predicated region
        $region128: #{tpu_custom_call.1} parent=99 // pred_check
          %p2275 = pneg %p487
        $region129: #{tpu_custom_call.1} parent=99 // pred_check_branch
          %2277 = sbr.rel (%p2275) target = $region131
        $region130: #{tpu_custom_call.1} parent=99 // pred_region
          %2279 = vsyncadd %s2272, 0
          %s2280 = scalar_lea.hbm %s20, %s39
          %s2282 = sshll.u32 %s2274, 4
          %s2283 = int_to_ptr.vmem [resolvable:$true] %s2282
          %s2284 = sshll.u32 %s2280, 4
          %s2285 = int_to_ptr.hbm [resolvable:$true] %s2284
          %2287 = dma.vmem_to_hbm [thread:$0]  %s2283, 16, %s2285, %s2272
        $region131: #{tpu_custom_call.1} parent=99 // pred_fallthru
          _
      $region100: #{tpu_custom_call.1} parent=5 // pred_fallthru
        _
      %p2288 = scmp.le.s32.totalorder 2, %s34
      // Predicated region
      $region132: #{tpu_custom_call.1} parent=5 // pred_check
        %p2289 = pneg %p2288
      $region133: #{tpu_custom_call.1} parent=5 // pred_check_branch
        %2291 = sbr.rel (%p2289) target = $region135
      $region134: #{tpu_custom_call.1} parent=5 // pred_region
        %s2292 = ssub.s32 %s34, 2
        // Predicated region
        $region136: #{tpu_custom_call.1} parent=134 // pred_check
          %p2293 = pneg %p493
        $region137: #{tpu_custom_call.1} parent=134 // pred_check_branch
          %2295 = sbr.rel (%p2293) target = $region139
        $region138: #{tpu_custom_call.1} parent=134 // pred_region
          %s2296 = sand.u32 %s478, 1
          %s2297 = scalar_lea.sflag [#allocation5], %s2296
          %s2298 = sand.u32 %s478, 1
          %s2299 = scalar_lea.vmem [#allocation12], %s2298
          %2301 = dma.done %s2297, 16
        $region139: #{tpu_custom_call.1} parent=134 // pred_fallthru
          _
      $region135: #{tpu_custom_call.1} parent=5 // pred_fallthru
        _
    $region6: #{tpu_custom_call.1} parent=1 // loop_footer
      %s38 = sadd.s32 1, %s34
    $region7: #{tpu_custom_call.1} parent=1 // loop_footer_branch
      %33 = sbr.rel target = $region3
    $region8: #{tpu_custom_call.1} parent=1 // loop_exit
      _
    %2302 = vsyncpa [#allocation4], 1
    %s2303 = scalar_lea.sflag [#allocation4], 1
    %2304 = vsyncpa %s2303, 1
    %2305 = vsyncpa [#allocation7], 1
    %2306 = vsyncpa [#allocation10], 1
    %2307 = vsyncpa [#allocation5], 1
    %s2308 = scalar_lea.sflag [#allocation5], 1
    %2309 = vsyncpa %s2308, 1

</llo_original>
